<compile_context>
chip_gen: v7x
topology: tpu7x:2x2x1
jax: 0.10.0
libtpu: 0.0.40
codegen_flags: <defaults>
</compile_context>

<pallas_src>
import functools

import jax
import jax.numpy as jnp
from jax.experimental import pallas as pl
from jax.experimental.pallas import tpu as pltpu


# ----------------------------------------------------------------------------
# Fused Pallas kernel
# ----------------------------------------------------------------------------
def _make_fused_kernel(n_mlp, n_wn, k, pre, out):
    """Kernel body: refs = (grouped, coords, w0,b0,...  [n_mlp + n_wn + 1 layers], out)."""

    def kernel(grouped_ref, coords_ref, *refs):
        out_ref = refs[-1]
        wb = refs[:-1]
        mlp_wb = wb[: 2 * n_mlp]
        wn_wb = wb[2 * n_mlp: 2 * (n_mlp + n_wn)]
        fin_w, fin_b = wb[-2], wb[-1]

        tn = grouped_ref.shape[0]
        cin = grouped_ref.shape[2]
        rows = tn * k

        def chain(x, layers, n):
            # (matmul on MXU in bf16, f32 accumulate) + bias + relu, all in VMEM/vregs.
            for l in range(n):
                w = layers[2 * l][...]
                b = layers[2 * l + 1][...]
                y = jnp.dot(x.astype(w.dtype), w, preferred_element_type=jnp.float32)
                x = jnp.maximum(y + b, 0.0)
            return x

        # (a) mlp_convs: 1x1 Conv2d + BN2d + ReLU over every (point, neighbor) row.
        g = chain(grouped_ref[...].reshape(rows, cin), mlp_wb, n_mlp)      # (rows, pre)

        # (b) WeightNet2: Linear + BN1d + ReLU chain on local coordinates.
        w_all = chain(coords_ref[...].reshape(rows, 3), wn_wb, n_wn)       # (rows, pre*out)

        # (c) per-point contraction (never materialized in HBM):
        #     new_points[t, o] = sum_{k, p} w_all[t*K+k, p*out + o] * g[t*K+k, p]
        acc = jnp.zeros((rows, out), jnp.float32)
        for p in range(pre):
            wp = w_all[:, p * out:(p + 1) * out]          # (rows, out)  static lane slice
            gp = g[:, p:p + 1]                            # (rows, 1)    broadcast over lanes
            acc = acc + wp * gp                           # VPU fma
        acc = jnp.sum(acc.reshape(tn, k, out), axis=1)    # reduce over neighbors -> (tn, out)

        # (d) final Linear + BN1d + ReLU
        y = jnp.dot(acc.astype(fin_w.dtype), fin_w[...],
                    preferred_element_type=jnp.float32)
        out_ref[...] = jnp.maximum(y + fin_b[...], 0.0).astype(out_ref.dtype)

    return kernel


def _round_up(x, m):
    return ((x + m - 1) // m) * m


def fused_surface_conv(params, grouped, coords, *, pre, out, tn=None):
    """grouped: [M, K, Cin] f32, coords: [M, K, 3] f32  ->  [M, out] f32."""
    m, k, cin = grouped.shape
    layers = params["mlp_convs"] + params["weightnet"] + [params["final"]]

    widths = [cin, 3] + [layer["W"].shape[1] for layer in layers]
    if tn is None:
        # Rough VMEM model: ~4 live f32 slabs of (tn*k, max_width) per tile; keep <~12 MiB.
        budget = 12 * 1024 * 1024
        tn = budget // max(1, 4 * 4 * k * max(widths))
        tn = max(8, min(128, (tn // 8) * 8))
    tn = min(tn, _round_up(m, 8))

    mp = _round_up(m, tn)
    if mp != m:  # pad the point axis once; padded rows are sliced off at the end
        grouped = jnp.pad(grouped, ((0, mp - m), (0, 0), (0, 0)))
        coords = jnp.pad(coords, ((0, mp - m), (0, 0), (0, 0)))

    weight_args, weight_specs = [], []
    for layer in layers:
        w, b = layer["W"], layer["b"]
        weight_args += [w, b]
        weight_specs += [pl.BlockSpec(w.shape, lambda i: (0, 0)),
                         pl.BlockSpec(b.shape, lambda i: (0, 0))]

    kernel = _make_fused_kernel(len(params["mlp_convs"]), len(params["weightnet"]),
                                k, pre, out)
    res = pl.pallas_call(
        kernel,
        out_shape=jax.ShapeDtypeStruct((mp, out), jnp.float32),
        grid=(mp // tn,),
        in_specs=[pl.BlockSpec((tn, k, cin), lambda i: (i, 0, 0)),
                  pl.BlockSpec((tn, k, 3), lambda i: (i, 0, 0)),
                  *weight_specs],
        out_specs=pl.BlockSpec((tn, out), lambda i: (i, 0)),
        compiler_params=pltpu.CompilerParams(
            dimension_semantics=("parallel",),
            vmem_limit_bytes=48 * 1024 * 1024),
    )(grouped, coords, *weight_args)
    return res[:m] if mp != m else res


# ----------------------------------------------------------------------------
# Parameter init (deterministic, BN folded into the preceding linear; weights bf16)
# ----------------------------------------------------------------------------
def _fold_bn(w, b, gamma, beta, mean, var, eps=1e-5):
    scale = gamma / jnp.sqrt(var + eps)
    w_eff = (w * scale[None, :]).astype(jnp.bfloat16)
    b_eff = ((b - mean) * scale + beta)[None, :].astype(jnp.float32)
    return w_eff, b_eff


def _make_layer(key, cin, cout):
    ks = jax.random.split(key, 6)
    w = 0.1 * jax.random.normal(ks[0], (cin, cout), jnp.float32)
    b = 0.1 * jax.random.normal(ks[1], (cout,), jnp.float32)
    gamma = 1.0 + 0.1 * jax.random.normal(ks[2], (cout,), jnp.float32)
    beta = 0.1 * jax.random.normal(ks[3], (cout,), jnp.float32)
    mean = 0.05 * jax.random.normal(ks[4], (cout,), jnp.float32)
    var = 1.0 + 0.1 * jnp.abs(jax.random.normal(ks[5], (cout,), jnp.float32))
    w_eff, b_eff = _fold_bn(w, b, gamma, beta, mean, var)
    return {"W": w_eff, "b": b_eff}


def init_params(key, in_channel, mlp, hidden_unit=(8, 8, 16)):
    pre, out = mlp[-2], mlp[-1]
    keys = iter(jax.random.split(key, 16))
    mlp_convs = []
    last = in_channel
    for oc in mlp[:-1]:
        mlp_convs.append(_make_layer(next(keys), last, oc))
        last = oc
    wn_dims = [3] + [h * pre for h in hidden_unit] + [out * pre]
    weightnet = [_make_layer(next(keys), wn_dims[i], wn_dims[i + 1])
                 for i in range(len(wn_dims) - 1)]
    final = _make_layer(next(keys), out, out)
    return {"mlp_convs": mlp_convs, "weightnet": weightnet, "final": final}


# ----------------------------------------------------------------------------
# Forward pass (gathers stay in XLA; everything else runs in the fused Pallas kernel)
# ----------------------------------------------------------------------------
def index_points(points, idx):
    # points: [B, N, C], idx: [B, ...] int -> [B, ..., C]
    b = points.shape[0]
    bidx = jnp.arange(b).reshape((b,) + (1,) * (idx.ndim - 1))
    return points[bidx, idx]


def surface_conv2_forward(params, xyz, points, local_coordinates, neighbor_lists,
                          data_idx, *, npoint, mlp):
    if points is not None:
        pts = jnp.concatenate([points, xyz], axis=2)
    else:
        pts = xyz
    bsz, _, cin = pts.shape
    pre, out = mlp[-2], mlp[-1]

    new_xyz = index_points(xyz, data_idx)                       # [B, npoint, 3]
    grouped = index_points(pts, neighbor_lists)                 # [B, npoint, K, Cin]
    k = grouped.shape[2]

    grouped = grouped.reshape(bsz * npoint, k, cin)             # rows in (b, n) order
    coords = local_coordinates.reshape(bsz * npoint, k, 3)      # matches PyTorch reshape

    new_points = fused_surface_conv(params, grouped, coords, pre=pre, out=out)
    return new_xyz, new_points.reshape(bsz, npoint, out)


# ----------------------------------------------------------------------------
if __name__ == "__main__":
    B, N, NPOINT, K = 2, 32, 8, 8
    POINT_FEAT = 5
    IN_CHANNEL = POINT_FEAT + 3           # points concat xyz
    MLP = [16, 16, 32]

    key = jax.random.PRNGKey(0)
    keys = jax.random.split(key, 8)
    xyz = jax.random.normal(keys[0], (B, N, 3), jnp.float32)
    points = jax.random.normal(keys[1], (B, N, POINT_FEAT), jnp.float32)
    data_idx = jax.random.randint(keys[2], (B, NPOINT), 0, N)
    neighbor_lists = jax.random.randint(keys[3], (B, NPOINT, K), 0, N)
    local_coordinates = jax.random.normal(keys[4], (B, NPOINT, K, 3), jnp.float32)

    params = init_params(keys[5], IN_CHANNEL, MLP)

    fwd = functools.partial(surface_conv2_forward, npoint=NPOINT, mlp=MLP)
    new_xyz, new_points = fwd(params, xyz, points, local_coordinates,
                              neighbor_lists, data_idx)
    jax.block_until_ready((new_xyz, new_points))
    assert new_xyz.shape == (B, NPOINT, 3)
    assert new_points.shape == (B, NPOINT, MLP[-1])
    print("KERNEL_OK")
</pallas_src>

<mosaic_0001>
module attributes {stable_mosaic.version = 11 : i64} {
  func.func @kernel(%arg0: i32, %arg1: memref<16x8x8xf32, #tpu.memory_space<vmem>>, %arg2: memref<16x8x3xf32, #tpu.memory_space<vmem>>, %arg3: memref<8x16xbf16, #tpu.memory_space<vmem>>, %arg4: memref<1x16xf32, #tpu.memory_space<vmem>>, %arg5: memref<16x16xbf16, #tpu.memory_space<vmem>>, %arg6: memref<1x16xf32, #tpu.memory_space<vmem>>, %arg7: memref<3x128xbf16, #tpu.memory_space<vmem>>, %arg8: memref<1x128xf32, #tpu.memory_space<vmem>>, %arg9: memref<128x128xbf16, #tpu.memory_space<vmem>>, %arg10: memref<1x128xf32, #tpu.memory_space<vmem>>, %arg11: memref<128x256xbf16, #tpu.memory_space<vmem>>, %arg12: memref<1x256xf32, #tpu.memory_space<vmem>>, %arg13: memref<256x512xbf16, #tpu.memory_space<vmem>>, %arg14: memref<1x512xf32, #tpu.memory_space<vmem>>, %arg15: memref<32x32xbf16, #tpu.memory_space<vmem>>, %arg16: memref<1x32xf32, #tpu.memory_space<vmem>>, %arg17: memref<16x32xf32, #tpu.memory_space<vmem>>) attributes {dimension_semantics = [#tpu.dimension_semantics<parallel>], iteration_bounds = array<i64: 1>, scalar_prefetch = 0 : i64, scratch_operands = 0 : i64, tpu.core_type = #tpu.core_type<tc>, window_params = [{transform_indices = @transform_0, window_bounds = array<i64: 16, 8, 8>}, {transform_indices = @transform_1, window_bounds = array<i64: 16, 8, 3>}, {pipeline_mode = #tpu.pipeline_mode<synchronous>, transform_indices = @transform_2, window_bounds = array<i64: 8, 16>}, {pipeline_mode = #tpu.pipeline_mode<synchronous>, transform_indices = @transform_3, window_bounds = array<i64: 1, 16>}, {pipeline_mode = #tpu.pipeline_mode<synchronous>, transform_indices = @transform_4, window_bounds = array<i64: 16, 16>}, {pipeline_mode = #tpu.pipeline_mode<synchronous>, transform_indices = @transform_5, window_bounds = array<i64: 1, 16>}, {pipeline_mode = #tpu.pipeline_mode<synchronous>, transform_indices = @transform_6, window_bounds = array<i64: 3, 128>}, {pipeline_mode = #tpu.pipeline_mode<synchronous>, transform_indices = @transform_7, window_bounds = array<i64: 1, 128>}, {pipeline_mode = #tpu.pipeline_mode<synchronous>, transform_indices = @transform_8, window_bounds = array<i64: 128, 128>}, {pipeline_mode = #tpu.pipeline_mode<synchronous>, transform_indices = @transform_9, window_bounds = array<i64: 1, 128>}, {pipeline_mode = #tpu.pipeline_mode<synchronous>, transform_indices = @transform_10, window_bounds = array<i64: 128, 256>}, {pipeline_mode = #tpu.pipeline_mode<synchronous>, transform_indices = @transform_11, window_bounds = array<i64: 1, 256>}, {pipeline_mode = #tpu.pipeline_mode<synchronous>, transform_indices = @transform_12, window_bounds = array<i64: 256, 512>}, {pipeline_mode = #tpu.pipeline_mode<synchronous>, transform_indices = @transform_13, window_bounds = array<i64: 1, 512>}, {pipeline_mode = #tpu.pipeline_mode<synchronous>, transform_indices = @transform_14, window_bounds = array<i64: 32, 32>}, {pipeline_mode = #tpu.pipeline_mode<synchronous>, transform_indices = @transform_15, window_bounds = array<i64: 1, 32>}, {transform_indices = @transform_16, window_bounds = array<i64: 16, 32>}]} {
    %c0 = arith.constant 0 : index
    %c0_0 = arith.constant 0 : index
    %c0_1 = arith.constant 0 : index
    %0 = vector.load %arg1[%c0, %c0_0, %c0_1] : memref<16x8x8xf32, #tpu.memory_space<vmem>>, vector<16x8x8xf32>
    %1 = vector.shape_cast %0 : vector<16x8x8xf32> to vector<128x8xf32>
    %c0_2 = arith.constant 0 : index
    %c0_3 = arith.constant 0 : index
    %2 = vector.load %arg3[%c0_2, %c0_3] : memref<8x16xbf16, #tpu.memory_space<vmem>>, vector<8x16xbf16>
    %c0_4 = arith.constant 0 : index
    %c0_5 = arith.constant 0 : index
    %3 = vector.load %arg4[%c0_4, %c0_5] : memref<1x16xf32, #tpu.memory_space<vmem>>, vector<1x16xf32>
    %4 = arith.truncf %1 : vector<128x8xf32> to vector<128x8xbf16>
    %cst = arith.constant dense<0.000000e+00> : vector<128x16xf32>
    %5 = tpu.matmul %4, %2, %cst {dimension_numbers = #tpu.dot_dimension_numbers<[1], [0], [0], [1], [0, 0, 1, 1], [], []>} : vector<128x8xbf16>, vector<8x16xbf16>, vector<128x16xf32> -> vector<128x16xf32>
    %6 = vector.broadcast %3 : vector<1x16xf32> to vector<128x16xf32>
    %7 = arith.addf %5, %6 : vector<128x16xf32>
    %cst_6 = arith.constant 0.000000e+00 : f32
    %8 = vector.broadcast %cst_6 : f32 to vector<128x16xf32>
    %9 = arith.maximumf %7, %8 : vector<128x16xf32>
    %c0_7 = arith.constant 0 : index
    %c0_8 = arith.constant 0 : index
    %10 = vector.load %arg5[%c0_7, %c0_8] : memref<16x16xbf16, #tpu.memory_space<vmem>>, vector<16x16xbf16>
    %c0_9 = arith.constant 0 : index
    %c0_10 = arith.constant 0 : index
    %11 = vector.load %arg6[%c0_9, %c0_10] : memref<1x16xf32, #tpu.memory_space<vmem>>, vector<1x16xf32>
    %12 = arith.truncf %9 : vector<128x16xf32> to vector<128x16xbf16>
    %cst_11 = arith.constant dense<0.000000e+00> : vector<128x16xf32>
    %13 = tpu.matmul %12, %10, %cst_11 {dimension_numbers = #tpu.dot_dimension_numbers<[1], [0], [0], [1], [0, 0, 1, 1], [], []>} : vector<128x16xbf16>, vector<16x16xbf16>, vector<128x16xf32> -> vector<128x16xf32>
    %14 = vector.broadcast %11 : vector<1x16xf32> to vector<128x16xf32>
    %15 = arith.addf %13, %14 : vector<128x16xf32>
    %cst_12 = arith.constant 0.000000e+00 : f32
    %16 = vector.broadcast %cst_12 : f32 to vector<128x16xf32>
    %17 = arith.maximumf %15, %16 : vector<128x16xf32>
    %c0_13 = arith.constant 0 : index
    %c0_14 = arith.constant 0 : index
    %c0_15 = arith.constant 0 : index
    %18 = vector.load %arg2[%c0_13, %c0_14, %c0_15] : memref<16x8x3xf32, #tpu.memory_space<vmem>>, vector<16x8x3xf32>
    %19 = vector.shape_cast %18 : vector<16x8x3xf32> to vector<128x3xf32>
    %c0_16 = arith.constant 0 : index
    %c0_17 = arith.constant 0 : index
    %20 = vector.load %arg7[%c0_16, %c0_17] : memref<3x128xbf16, #tpu.memory_space<vmem>>, vector<3x128xbf16>
    %c0_18 = arith.constant 0 : index
    %c0_19 = arith.constant 0 : index
    %21 = vector.load %arg8[%c0_18, %c0_19] : memref<1x128xf32, #tpu.memory_space<vmem>>, vector<1x128xf32>
    %22 = arith.truncf %19 : vector<128x3xf32> to vector<128x3xbf16>
    %cst_20 = arith.constant dense<0.000000e+00> : vector<128x128xf32>
    %23 = tpu.matmul %22, %20, %cst_20 {dimension_numbers = #tpu.dot_dimension_numbers<[1], [0], [0], [1], [0, 0, 1, 1], [], []>} : vector<128x3xbf16>, vector<3x128xbf16>, vector<128x128xf32> -> vector<128x128xf32>
    %24 = vector.broadcast %21 : vector<1x128xf32> to vector<128x128xf32>
    %25 = arith.addf %23, %24 : vector<128x128xf32>
    %cst_21 = arith.constant 0.000000e+00 : f32
    %26 = vector.broadcast %cst_21 : f32 to vector<128x128xf32>
    %27 = arith.maximumf %25, %26 : vector<128x128xf32>
    %c0_22 = arith.constant 0 : index
    %c0_23 = arith.constant 0 : index
    %28 = vector.load %arg9[%c0_22, %c0_23] : memref<128x128xbf16, #tpu.memory_space<vmem>>, vector<128x128xbf16>
    %c0_24 = arith.constant 0 : index
    %c0_25 = arith.constant 0 : index
    %29 = vector.load %arg10[%c0_24, %c0_25] : memref<1x128xf32, #tpu.memory_space<vmem>>, vector<1x128xf32>
    %30 = arith.truncf %27 : vector<128x128xf32> to vector<128x128xbf16>
    %cst_26 = arith.constant dense<0.000000e+00> : vector<128x128xf32>
    %31 = tpu.matmul %30, %28, %cst_26 {dimension_numbers = #tpu.dot_dimension_numbers<[1], [0], [0], [1], [0, 0, 1, 1], [], []>} : vector<128x128xbf16>, vector<128x128xbf16>, vector<128x128xf32> -> vector<128x128xf32>
    %32 = vector.broadcast %29 : vector<1x128xf32> to vector<128x128xf32>
    %33 = arith.addf %31, %32 : vector<128x128xf32>
    %cst_27 = arith.constant 0.000000e+00 : f32
    %34 = vector.broadcast %cst_27 : f32 to vector<128x128xf32>
    %35 = arith.maximumf %33, %34 : vector<128x128xf32>
    %c0_28 = arith.constant 0 : index
    %c0_29 = arith.constant 0 : index
    %36 = vector.load %arg11[%c0_28, %c0_29] : memref<128x256xbf16, #tpu.memory_space<vmem>>, vector<128x256xbf16>
    %c0_30 = arith.constant 0 : index
    %c0_31 = arith.constant 0 : index
    %37 = vector.load %arg12[%c0_30, %c0_31] : memref<1x256xf32, #tpu.memory_space<vmem>>, vector<1x256xf32>
    %38 = arith.truncf %35 : vector<128x128xf32> to vector<128x128xbf16>
    %cst_32 = arith.constant dense<0.000000e+00> : vector<128x256xf32>
    %39 = tpu.matmul %38, %36, %cst_32 {dimension_numbers = #tpu.dot_dimension_numbers<[1], [0], [0], [1], [0, 0, 1, 1], [], []>} : vector<128x128xbf16>, vector<128x256xbf16>, vector<128x256xf32> -> vector<128x256xf32>
    %40 = vector.broadcast %37 : vector<1x256xf32> to vector<128x256xf32>
    %41 = arith.addf %39, %40 : vector<128x256xf32>
    %cst_33 = arith.constant 0.000000e+00 : f32
    %42 = vector.broadcast %cst_33 : f32 to vector<128x256xf32>
    %43 = arith.maximumf %41, %42 : vector<128x256xf32>
    %c0_34 = arith.constant 0 : index
    %c0_35 = arith.constant 0 : index
    %44 = vector.load %arg13[%c0_34, %c0_35] : memref<256x512xbf16, #tpu.memory_space<vmem>>, vector<256x512xbf16>
    %c0_36 = arith.constant 0 : index
    %c0_37 = arith.constant 0 : index
    %45 = vector.load %arg14[%c0_36, %c0_37] : memref<1x512xf32, #tpu.memory_space<vmem>>, vector<1x512xf32>
    %46 = arith.truncf %43 : vector<128x256xf32> to vector<128x256xbf16>
    %cst_38 = arith.constant dense<0.000000e+00> : vector<128x512xf32>
    %47 = tpu.matmul %46, %44, %cst_38 {dimension_numbers = #tpu.dot_dimension_numbers<[1], [0], [0], [1], [0, 0, 1, 1], [], []>} : vector<128x256xbf16>, vector<256x512xbf16>, vector<128x512xf32> -> vector<128x512xf32>
    %48 = vector.broadcast %45 : vector<1x512xf32> to vector<128x512xf32>
    %49 = arith.addf %47, %48 : vector<128x512xf32>
    %cst_39 = arith.constant 0.000000e+00 : f32
    %50 = vector.broadcast %cst_39 : f32 to vector<128x512xf32>
    %51 = arith.maximumf %49, %50 : vector<128x512xf32>
    %cst_40 = arith.constant 0.000000e+00 : f32
    %52 = vector.broadcast %cst_40 : f32 to vector<128x32xf32>
    %53 = vector.extract_strided_slice %51 {offsets = [0, 0], sizes = [128, 32], strides = [1, 1]} : vector<128x512xf32> to vector<128x32xf32>
    %54 = vector.extract_strided_slice %17 {offsets = [0, 0], sizes = [128, 1], strides = [1, 1]} : vector<128x16xf32> to vector<128x1xf32>
    %55 = vector.broadcast %54 : vector<128x1xf32> to vector<128x32xf32>
    %56 = arith.mulf %53, %55 : vector<128x32xf32>
    %57 = arith.addf %52, %56 : vector<128x32xf32>
    %58 = vector.extract_strided_slice %51 {offsets = [0, 32], sizes = [128, 32], strides = [1, 1]} : vector<128x512xf32> to vector<128x32xf32>
    %59 = vector.extract_strided_slice %17 {offsets = [0, 1], sizes = [128, 1], strides = [1, 1]} : vector<128x16xf32> to vector<128x1xf32>
    %60 = vector.broadcast %59 : vector<128x1xf32> to vector<128x32xf32>
    %61 = arith.mulf %58, %60 : vector<128x32xf32>
    %62 = arith.addf %57, %61 : vector<128x32xf32>
    %63 = vector.extract_strided_slice %51 {offsets = [0, 64], sizes = [128, 32], strides = [1, 1]} : vector<128x512xf32> to vector<128x32xf32>
    %64 = vector.extract_strided_slice %17 {offsets = [0, 2], sizes = [128, 1], strides = [1, 1]} : vector<128x16xf32> to vector<128x1xf32>
    %65 = vector.broadcast %64 : vector<128x1xf32> to vector<128x32xf32>
    %66 = arith.mulf %63, %65 : vector<128x32xf32>
    %67 = arith.addf %62, %66 : vector<128x32xf32>
    %68 = vector.extract_strided_slice %51 {offsets = [0, 96], sizes = [128, 32], strides = [1, 1]} : vector<128x512xf32> to vector<128x32xf32>
    %69 = vector.extract_strided_slice %17 {offsets = [0, 3], sizes = [128, 1], strides = [1, 1]} : vector<128x16xf32> to vector<128x1xf32>
    %70 = vector.broadcast %69 : vector<128x1xf32> to vector<128x32xf32>
    %71 = arith.mulf %68, %70 : vector<128x32xf32>
    %72 = arith.addf %67, %71 : vector<128x32xf32>
    %73 = vector.extract_strided_slice %51 {offsets = [0, 128], sizes = [128, 32], strides = [1, 1]} : vector<128x512xf32> to vector<128x32xf32>
    %74 = vector.extract_strided_slice %17 {offsets = [0, 4], sizes = [128, 1], strides = [1, 1]} : vector<128x16xf32> to vector<128x1xf32>
    %75 = vector.broadcast %74 : vector<128x1xf32> to vector<128x32xf32>
    %76 = arith.mulf %73, %75 : vector<128x32xf32>
    %77 = arith.addf %72, %76 : vector<128x32xf32>
    %78 = vector.extract_strided_slice %51 {offsets = [0, 160], sizes = [128, 32], strides = [1, 1]} : vector<128x512xf32> to vector<128x32xf32>
    %79 = vector.extract_strided_slice %17 {offsets = [0, 5], sizes = [128, 1], strides = [1, 1]} : vector<128x16xf32> to vector<128x1xf32>
    %80 = vector.broadcast %79 : vector<128x1xf32> to vector<128x32xf32>
    %81 = arith.mulf %78, %80 : vector<128x32xf32>
    %82 = arith.addf %77, %81 : vector<128x32xf32>
    %83 = vector.extract_strided_slice %51 {offsets = [0, 192], sizes = [128, 32], strides = [1, 1]} : vector<128x512xf32> to vector<128x32xf32>
    %84 = vector.extract_strided_slice %17 {offsets = [0, 6], sizes = [128, 1], strides = [1, 1]} : vector<128x16xf32> to vector<128x1xf32>
    %85 = vector.broadcast %84 : vector<128x1xf32> to vector<128x32xf32>
    %86 = arith.mulf %83, %85 : vector<128x32xf32>
    %87 = arith.addf %82, %86 : vector<128x32xf32>
    %88 = vector.extract_strided_slice %51 {offsets = [0, 224], sizes = [128, 32], strides = [1, 1]} : vector<128x512xf32> to vector<128x32xf32>
    %89 = vector.extract_strided_slice %17 {offsets = [0, 7], sizes = [128, 1], strides = [1, 1]} : vector<128x16xf32> to vector<128x1xf32>
    %90 = vector.broadcast %89 : vector<128x1xf32> to vector<128x32xf32>
    %91 = arith.mulf %88, %90 : vector<128x32xf32>
    %92 = arith.addf %87, %91 : vector<128x32xf32>
    %93 = vector.extract_strided_slice %51 {offsets = [0, 256], sizes = [128, 32], strides = [1, 1]} : vector<128x512xf32> to vector<128x32xf32>
    %94 = vector.extract_strided_slice %17 {offsets = [0, 8], sizes = [128, 1], strides = [1, 1]} : vector<128x16xf32> to vector<128x1xf32>
    %95 = vector.broadcast %94 : vector<128x1xf32> to vector<128x32xf32>
    %96 = arith.mulf %93, %95 : vector<128x32xf32>
    %97 = arith.addf %92, %96 : vector<128x32xf32>
    %98 = vector.extract_strided_slice %51 {offsets = [0, 288], sizes = [128, 32], strides = [1, 1]} : vector<128x512xf32> to vector<128x32xf32>
    %99 = vector.extract_strided_slice %17 {offsets = [0, 9], sizes = [128, 1], strides = [1, 1]} : vector<128x16xf32> to vector<128x1xf32>
    %100 = vector.broadcast %99 : vector<128x1xf32> to vector<128x32xf32>
    %101 = arith.mulf %98, %100 : vector<128x32xf32>
    %102 = arith.addf %97, %101 : vector<128x32xf32>
    %103 = vector.extract_strided_slice %51 {offsets = [0, 320], sizes = [128, 32], strides = [1, 1]} : vector<128x512xf32> to vector<128x32xf32>
    %104 = vector.extract_strided_slice %17 {offsets = [0, 10], sizes = [128, 1], strides = [1, 1]} : vector<128x16xf32> to vector<128x1xf32>
    %105 = vector.broadcast %104 : vector<128x1xf32> to vector<128x32xf32>
    %106 = arith.mulf %103, %105 : vector<128x32xf32>
    %107 = arith.addf %102, %106 : vector<128x32xf32>
    %108 = vector.extract_strided_slice %51 {offsets = [0, 352], sizes = [128, 32], strides = [1, 1]} : vector<128x512xf32> to vector<128x32xf32>
    %109 = vector.extract_strided_slice %17 {offsets = [0, 11], sizes = [128, 1], strides = [1, 1]} : vector<128x16xf32> to vector<128x1xf32>
    %110 = vector.broadcast %109 : vector<128x1xf32> to vector<128x32xf32>
    %111 = arith.mulf %108, %110 : vector<128x32xf32>
    %112 = arith.addf %107, %111 : vector<128x32xf32>
    %113 = vector.extract_strided_slice %51 {offsets = [0, 384], sizes = [128, 32], strides = [1, 1]} : vector<128x512xf32> to vector<128x32xf32>
    %114 = vector.extract_strided_slice %17 {offsets = [0, 12], sizes = [128, 1], strides = [1, 1]} : vector<128x16xf32> to vector<128x1xf32>
    %115 = vector.broadcast %114 : vector<128x1xf32> to vector<128x32xf32>
    %116 = arith.mulf %113, %115 : vector<128x32xf32>
    %117 = arith.addf %112, %116 : vector<128x32xf32>
    %118 = vector.extract_strided_slice %51 {offsets = [0, 416], sizes = [128, 32], strides = [1, 1]} : vector<128x512xf32> to vector<128x32xf32>
    %119 = vector.extract_strided_slice %17 {offsets = [0, 13], sizes = [128, 1], strides = [1, 1]} : vector<128x16xf32> to vector<128x1xf32>
    %120 = vector.broadcast %119 : vector<128x1xf32> to vector<128x32xf32>
    %121 = arith.mulf %118, %120 : vector<128x32xf32>
    %122 = arith.addf %117, %121 : vector<128x32xf32>
    %123 = vector.extract_strided_slice %51 {offsets = [0, 448], sizes = [128, 32], strides = [1, 1]} : vector<128x512xf32> to vector<128x32xf32>
    %124 = vector.extract_strided_slice %17 {offsets = [0, 14], sizes = [128, 1], strides = [1, 1]} : vector<128x16xf32> to vector<128x1xf32>
    %125 = vector.broadcast %124 : vector<128x1xf32> to vector<128x32xf32>
    %126 = arith.mulf %123, %125 : vector<128x32xf32>
    %127 = arith.addf %122, %126 : vector<128x32xf32>
    %128 = vector.extract_strided_slice %51 {offsets = [0, 480], sizes = [128, 32], strides = [1, 1]} : vector<128x512xf32> to vector<128x32xf32>
    %129 = vector.extract_strided_slice %17 {offsets = [0, 15], sizes = [128, 1], strides = [1, 1]} : vector<128x16xf32> to vector<128x1xf32>
    %130 = vector.broadcast %129 : vector<128x1xf32> to vector<128x32xf32>
    %131 = arith.mulf %128, %130 : vector<128x32xf32>
    %132 = arith.addf %127, %131 : vector<128x32xf32>
    %133 = vector.shape_cast %132 : vector<128x32xf32> to vector<16x8x32xf32>
    %cst_41 = arith.constant dense<0.000000e+00> : vector<16x32xf32>
    %134 = vector.multi_reduction <add>, %133, %cst_41 [1] : vector<16x8x32xf32> to vector<16x32xf32>
    %135 = arith.truncf %134 : vector<16x32xf32> to vector<16x32xbf16>
    %c0_42 = arith.constant 0 : index
    %c0_43 = arith.constant 0 : index
    %136 = vector.load %arg15[%c0_42, %c0_43] : memref<32x32xbf16, #tpu.memory_space<vmem>>, vector<32x32xbf16>
    %cst_44 = arith.constant dense<0.000000e+00> : vector<16x32xf32>
    %137 = tpu.matmul %135, %136, %cst_44 {dimension_numbers = #tpu.dot_dimension_numbers<[1], [0], [0], [1], [0, 0, 1, 1], [], []>} : vector<16x32xbf16>, vector<32x32xbf16>, vector<16x32xf32> -> vector<16x32xf32>
    %c0_45 = arith.constant 0 : index
    %c0_46 = arith.constant 0 : index
    %138 = vector.load %arg16[%c0_45, %c0_46] : memref<1x32xf32, #tpu.memory_space<vmem>>, vector<1x32xf32>
    %139 = vector.broadcast %138 : vector<1x32xf32> to vector<16x32xf32>
    %140 = arith.addf %137, %139 : vector<16x32xf32>
    %cst_47 = arith.constant 0.000000e+00 : f32
    %141 = vector.broadcast %cst_47 : f32 to vector<16x32xf32>
    %142 = arith.maximumf %140, %141 : vector<16x32xf32>
    %c0_48 = arith.constant 0 : index
    %c0_49 = arith.constant 0 : index
    %143 = vector.load %arg17[%c0_48, %c0_49] : memref<16x32xf32, #tpu.memory_space<vmem>>, vector<16x32xf32>
    tpu.vector_store %arg17[%c0_48, %c0_49], %142 {strides = array<i32>} : memref<16x32xf32, #tpu.memory_space<vmem>>, vector<16x32xf32>,
    return
  }
  func.func @transform_0(%arg0: i32) -> (i32, i32, i32) {
    %c0_i32 = arith.constant 0 : i32
    %c0_i32_0 = arith.constant 0 : i32
    %c0_i32_1 = arith.constant 0 : i32
    return %arg0, %c0_i32, %c0_i32_0 : i32, i32, i32
  }
  func.func @transform_1(%arg0: i32) -> (i32, i32, i32) {
    %c0_i32 = arith.constant 0 : i32
    %c0_i32_0 = arith.constant 0 : i32
    %c0_i32_1 = arith.constant 0 : i32
    return %arg0, %c0_i32, %c0_i32_0 : i32, i32, i32
  }
  func.func @transform_2(%arg0: i32) -> (i32, i32) {
    %c0_i32 = arith.constant 0 : i32
    %c0_i32_0 = arith.constant 0 : i32
    %c0_i32_1 = arith.constant 0 : i32
    return %c0_i32, %c0_i32_0 : i32, i32
  }
  func.func @transform_3(%arg0: i32) -> (i32, i32) {
    %c0_i32 = arith.constant 0 : i32
    %c0_i32_0 = arith.constant 0 : i32
    %c0_i32_1 = arith.constant 0 : i32
    return %c0_i32, %c0_i32_0 : i32, i32
  }
  func.func @transform_4(%arg0: i32) -> (i32, i32) {
    %c0_i32 = arith.constant 0 : i32
    %c0_i32_0 = arith.constant 0 : i32
    %c0_i32_1 = arith.constant 0 : i32
    return %c0_i32, %c0_i32_0 : i32, i32
  }
  func.func @transform_5(%arg0: i32) -> (i32, i32) {
    %c0_i32 = arith.constant 0 : i32
    %c0_i32_0 = arith.constant 0 : i32
    %c0_i32_1 = arith.constant 0 : i32
    return %c0_i32, %c0_i32_0 : i32, i32
  }
  func.func @transform_6(%arg0: i32) -> (i32, i32) {
    %c0_i32 = arith.constant 0 : i32
    %c0_i32_0 = arith.constant 0 : i32
    %c0_i32_1 = arith.constant 0 : i32
    return %c0_i32, %c0_i32_0 : i32, i32
  }
  func.func @transform_7(%arg0: i32) -> (i32, i32) {
    %c0_i32 = arith.constant 0 : i32
    %c0_i32_0 = arith.constant 0 : i32
    %c0_i32_1 = arith.constant 0 : i32
    return %c0_i32, %c0_i32_0 : i32, i32
  }
  func.func @transform_8(%arg0: i32) -> (i32, i32) {
    %c0_i32 = arith.constant 0 : i32
    %c0_i32_0 = arith.constant 0 : i32
    %c0_i32_1 = arith.constant 0 : i32
    return %c0_i32, %c0_i32_0 : i32, i32
  }
  func.func @transform_9(%arg0: i32) -> (i32, i32) {
    %c0_i32 = arith.constant 0 : i32
    %c0_i32_0 = arith.constant 0 : i32
    %c0_i32_1 = arith.constant 0 : i32
    return %c0_i32, %c0_i32_0 : i32, i32
  }
  func.func @transform_10(%arg0: i32) -> (i32, i32) {
    %c0_i32 = arith.constant 0 : i32
    %c0_i32_0 = arith.constant 0 : i32
    %c0_i32_1 = arith.constant 0 : i32
    return %c0_i32, %c0_i32_0 : i32, i32
  }
  func.func @transform_11(%arg0: i32) -> (i32, i32) {
    %c0_i32 = arith.constant 0 : i32
    %c0_i32_0 = arith.constant 0 : i32
    %c0_i32_1 = arith.constant 0 : i32
    return %c0_i32, %c0_i32_0 : i32, i32
  }
  func.func @transform_12(%arg0: i32) -> (i32, i32) {
    %c0_i32 = arith.constant 0 : i32
    %c0_i32_0 = arith.constant 0 : i32
    %c0_i32_1 = arith.constant 0 : i32
    return %c0_i32, %c0_i32_0 : i32, i32
  }
  func.func @transform_13(%arg0: i32) -> (i32, i32) {
    %c0_i32 = arith.constant 0 : i32
    %c0_i32_0 = arith.constant 0 : i32
    %c0_i32_1 = arith.constant 0 : i32
    return %c0_i32, %c0_i32_0 : i32, i32
  }
  func.func @transform_14(%arg0: i32) -> (i32, i32) {
    %c0_i32 = arith.constant 0 : i32
    %c0_i32_0 = arith.constant 0 : i32
    %c0_i32_1 = arith.constant 0 : i32
    return %c0_i32, %c0_i32_0 : i32, i32
  }
  func.func @transform_15(%arg0: i32) -> (i32, i32) {
    %c0_i32 = arith.constant 0 : i32
    %c0_i32_0 = arith.constant 0 : i32
    %c0_i32_1 = arith.constant 0 : i32
    return %c0_i32, %c0_i32_0 : i32, i32
  }
  func.func @transform_16(%arg0: i32) -> (i32, i32) {
    %c0_i32 = arith.constant 0 : i32
    %c0_i32_0 = arith.constant 0 : i32
    return %arg0, %c0_i32 : i32, i32
  }
}

</mosaic_0001>

<llo_original>
// kernel: tpu_custom_call.1
$region0: #{tpu_custom_call.1}
  #allocation0 [shape = 'u32[]', space=smem, size = 0x4, offset = 0x4, fixed_abs, tag = 'smem constant byte address 0x4 - core index']
  #allocation1 [shape = 'u32[144,128]{1,0:T(1,128)}', space=vmem, size = 0x12000, scoped, tag = 'internal scratch']
  %s0 = inlined_call_operand.vmem [shape: f32[16,8,8], index: 0, kind: input, shape index: {}]
  %s1 = inlined_call_operand.vmem [shape: f32[16,8,3], index: 1, kind: input, shape index: {}]
  %s2 = inlined_call_operand.vmem [shape: bf16[8,16], index: 2, kind: input, shape index: {}]
  %s3 = inlined_call_operand.vmem [shape: f32[1,16], index: 3, kind: input, shape index: {}]
  %s4 = inlined_call_operand.vmem [shape: bf16[16,16], index: 4, kind: input, shape index: {}]
  %s5 = inlined_call_operand.vmem [shape: f32[1,16], index: 5, kind: input, shape index: {}]
  %s6 = inlined_call_operand.vmem [shape: bf16[3,128], index: 6, kind: input, shape index: {}]
  %s7 = inlined_call_operand.vmem [shape: f32[1,128], index: 7, kind: input, shape index: {}]
  %s8 = inlined_call_operand.vmem [shape: bf16[128,128], index: 8, kind: input, shape index: {}]
  %s9 = inlined_call_operand.vmem [shape: f32[1,128], index: 9, kind: input, shape index: {}]
  %s10 = inlined_call_operand.vmem [shape: bf16[128,256], index: 10, kind: input, shape index: {}]
  %s11 = inlined_call_operand.vmem [shape: f32[1,256], index: 11, kind: input, shape index: {}]
  %s12 = inlined_call_operand.hbm [shape: bf16[256,512], index: 12, kind: input, shape index: {}]
  %s13 = inlined_call_operand.vmem [shape: f32[1,512], index: 13, kind: input, shape index: {}]
  %s14 = inlined_call_operand.vmem [shape: bf16[32,32], index: 14, kind: input, shape index: {}]
  %s15 = inlined_call_operand.vmem [shape: f32[1,32], index: 15, kind: input, shape index: {}]
  %s16 = inlined_call_operand.hbm [shape: f32[16,32], index: 16, kind: output, shape index: {}]
  %s17 = sld [smem:[#allocation0]]
  $region78: #{tpu_custom_call.1} parent=0
    _
  %s19 = ssub.s32 1, %s17
  %s20 = scalar_select 0, %s19, %s17
  $region1: #{tpu_custom_call.1} parent=0
    #allocation2 [shape = 'u8[262144]{0}', space=vmem, size = 0x40000, scoped, tag = 'input window, operand 12, single buffered']
    #allocation3 [shape = 's32[1]{0}', space=sflag, size = 0x4, scoped, tag = 'scoped memory for tpu_custom_call.1']
    #allocation4 [shape = 's32[1]{0}', space=sflag, size = 0x4, scoped, tag = 'scoped memory for tpu_custom_call.1']
    #allocation5 [shape = 'u8[8192]{0}', space=vmem, size = 0x2000, scoped, tag = 'output window, operand 0, single buffered']
    %21 = vsyncpa [#allocation3], 0
    %22 = vsyncpa [#allocation4], 0
    // Predicated region
    $region2: #{tpu_custom_call.1} parent=1 // pred_check
      _
    $region3: #{tpu_custom_call.1} parent=1 // pred_check_branch
      %24 = sbr.rel (0) target = $region5
    $region4: #{tpu_custom_call.1} parent=1 // pred_region
      _
    $region5: #{tpu_custom_call.1} parent=1 // pred_fallthru
      _
    // Predicated region
    $region6: #{tpu_custom_call.1} parent=1 // pred_check
      _
    $region7: #{tpu_custom_call.1} parent=1 // pred_check_branch
      %26 = sbr.rel (0) target = $region9
    $region8: #{tpu_custom_call.1} parent=1 // pred_region
      _
    $region9: #{tpu_custom_call.1} parent=1 // pred_fallthru
      _
    // Predicated region
    $region10: #{tpu_custom_call.1} parent=1 // pred_check
      _
    $region11: #{tpu_custom_call.1} parent=1 // pred_check_branch
      %28 = sbr.rel (0) target = $region13
    $region12: #{tpu_custom_call.1} parent=1 // pred_region
      _
    $region13: #{tpu_custom_call.1} parent=1 // pred_fallthru
      _
    // Predicated region
    $region14: #{tpu_custom_call.1} parent=1 // pred_check
      _
    $region15: #{tpu_custom_call.1} parent=1 // pred_check_branch
      %30 = sbr.rel (0) target = $region17
    $region16: #{tpu_custom_call.1} parent=1 // pred_region
      _
    $region17: #{tpu_custom_call.1} parent=1 // pred_fallthru
      _
    // Predicated region
    $region18: #{tpu_custom_call.1} parent=1 // pred_check
      _
    $region19: #{tpu_custom_call.1} parent=1 // pred_check_branch
      %32 = sbr.rel (0) target = $region21
    $region20: #{tpu_custom_call.1} parent=1 // pred_region
      _
    $region21: #{tpu_custom_call.1} parent=1 // pred_fallthru
      _
    // Predicated region
    $region22: #{tpu_custom_call.1} parent=1 // pred_check
      _
    $region23: #{tpu_custom_call.1} parent=1 // pred_check_branch
      %34 = sbr.rel (0) target = $region25
    $region24: #{tpu_custom_call.1} parent=1 // pred_region
      _
    $region25: #{tpu_custom_call.1} parent=1 // pred_fallthru
      _
    // Predicated region
    $region26: #{tpu_custom_call.1} parent=1 // pred_check
      _
    $region27: #{tpu_custom_call.1} parent=1 // pred_check_branch
      %36 = sbr.rel (0) target = $region29
    $region28: #{tpu_custom_call.1} parent=1 // pred_region
      _
    $region29: #{tpu_custom_call.1} parent=1 // pred_fallthru
      _
    // Predicated region
    $region30: #{tpu_custom_call.1} parent=1 // pred_check
      _
    $region31: #{tpu_custom_call.1} parent=1 // pred_check_branch
      %38 = sbr.rel (0) target = $region33
    $region32: #{tpu_custom_call.1} parent=1 // pred_region
      _
    $region33: #{tpu_custom_call.1} parent=1 // pred_fallthru
      _
    // Predicated region
    $region34: #{tpu_custom_call.1} parent=1 // pred_check
      _
    $region35: #{tpu_custom_call.1} parent=1 // pred_check_branch
      %40 = sbr.rel (0) target = $region37
    $region36: #{tpu_custom_call.1} parent=1 // pred_region
      _
    $region37: #{tpu_custom_call.1} parent=1 // pred_fallthru
      _
    // Predicated region
    $region38: #{tpu_custom_call.1} parent=1 // pred_check
      _
    $region39: #{tpu_custom_call.1} parent=1 // pred_check_branch
      %42 = sbr.rel (0) target = $region41
    $region40: #{tpu_custom_call.1} parent=1 // pred_region
      _
    $region41: #{tpu_custom_call.1} parent=1 // pred_fallthru
      _
    // Predicated region
    $region42: #{tpu_custom_call.1} parent=1 // pred_check
      _
    $region43: #{tpu_custom_call.1} parent=1 // pred_check_branch
      %44 = sbr.rel (0) target = $region45
    $region44: #{tpu_custom_call.1} parent=1 // pred_region
      _
    $region45: #{tpu_custom_call.1} parent=1 // pred_fallthru
      _
    // Predicated region
    $region46: #{tpu_custom_call.1} parent=1 // pred_check
      _
    $region47: #{tpu_custom_call.1} parent=1 // pred_check_branch
      %46 = sbr.rel (0) target = $region49
    $region48: #{tpu_custom_call.1} parent=1 // pred_region
      _
    $region49: #{tpu_custom_call.1} parent=1 // pred_fallthru
      _
    // Predicated region
    $region50: #{tpu_custom_call.1} parent=1 // pred_check
      _
    $region51: #{tpu_custom_call.1} parent=1 // pred_check_branch
      %48 = sbr.rel (0) target = $region53
    $region52: #{tpu_custom_call.1} parent=1 // pred_region
      %s50 = ssub.s32 8192, 8192
      %51 = vsyncadd [#allocation3], %s50
      %s52 = sshll.u32 [#allocation2], 4
      %s53 = int_to_ptr.vmem [resolvable:$true] %s52
      %58 = dma.hbm_to_vmem [thread:$0]  %s12, 8192, %s53, [#allocation3], 256, 256, 16
    $region53: #{tpu_custom_call.1} parent=1 // pred_fallthru
      _
    // Predicated region
    $region54: #{tpu_custom_call.1} parent=1 // pred_check
      _
    $region55: #{tpu_custom_call.1} parent=1 // pred_check_branch
      %60 = sbr.rel (0) target = $region57
    $region56: #{tpu_custom_call.1} parent=1 // pred_region
      _
    $region57: #{tpu_custom_call.1} parent=1 // pred_fallthru
      _
    // Predicated region
    $region58: #{tpu_custom_call.1} parent=1 // pred_check
      _
    $region59: #{tpu_custom_call.1} parent=1 // pred_check_branch
      %62 = sbr.rel (0) target = $region61
    $region60: #{tpu_custom_call.1} parent=1 // pred_region
      _
    $region61: #{tpu_custom_call.1} parent=1 // pred_fallthru
      _
    // Predicated region
    $region62: #{tpu_custom_call.1} parent=1 // pred_check
      _
    $region63: #{tpu_custom_call.1} parent=1 // pred_check_branch
      %64 = sbr.rel (0) target = $region65
    $region64: #{tpu_custom_call.1} parent=1 // pred_region
      _
    $region65: #{tpu_custom_call.1} parent=1 // pred_fallthru
      _
    // Predicated region
    $region66: #{tpu_custom_call.1} parent=1 // pred_check
      _
    $region67: #{tpu_custom_call.1} parent=1 // pred_check_branch
      %66 = sbr.rel (0) target = $region69
    $region68: #{tpu_custom_call.1} parent=1 // pred_region
      %67 = dma.done [#allocation3], 8192
    $region69: #{tpu_custom_call.1} parent=1 // pred_fallthru
      _
    %v69 = vld [vmem:[%s0] sm:$0xff]
    %v70 = vld [vmem:[%s0 + $0x8] sm:$0xff]
    %v71 = vld [vmem:[%s0 + $0x10] sm:$0xff]
    %v72 = vld [vmem:[%s0 + $0x18] sm:$0xff]
    %v73 = vld [vmem:[%s0 + $0x20] sm:$0xff]
    %v74 = vld [vmem:[%s0 + $0x28] sm:$0xff]
    %v75 = vld [vmem:[%s0 + $0x30] sm:$0xff]
    %v76 = vld [vmem:[%s0 + $0x38] sm:$0xff]
    %v77 = vld [vmem:[%s0 + $0x40] sm:$0xff]
    %v78 = vld [vmem:[%s0 + $0x48] sm:$0xff]
    %v79 = vld [vmem:[%s0 + $0x50] sm:$0xff]
    %v80 = vld [vmem:[%s0 + $0x58] sm:$0xff]
    %v81 = vld [vmem:[%s0 + $0x60] sm:$0xff]
    %v82 = vld [vmem:[%s0 + $0x68] sm:$0xff]
    %v83 = vld [vmem:[%s0 + $0x70] sm:$0xff]
    %v84 = vld [vmem:[%s0 + $0x78] sm:$0xff]
    %v85 = vld [vmem:[%s2] sm:$0xf]
    %v86 = vld [vmem:[%s3] sm:$0x1]
    %v87 = vpack.c.bf16 %v70, %v69
    %v88 = vpack.c.bf16 %v72, %v71
    %v89 = vpack.c.bf16 %v74, %v73
    %v90 = vpack.c.bf16 %v76, %v75
    %v91 = vpack.c.bf16 %v78, %v77
    %v92 = vpack.c.bf16 %v80, %v79
    %v93 = vpack.c.bf16 %v82, %v81
    %v94 = vpack.c.bf16 %v84, %v83
    %v96 = vlaneseq
    %v97 = vshrl.u32 %v96, 7
    %v98 = vsub.s32 0, %v97
    %v99 = vrot.slane %v86, %v98
    %vm101 = vcmask 64512
    %v103 = vsel %vm101, %v87, 0
    %v106 = vsel %vm101, %v88, 0
    %v109 = vsel %vm101, %v89, 0
    %v112 = vsel %vm101, %v90, 0
    %v115 = vsel %vm101, %v91, 0
    %v118 = vsel %vm101, %v92, 0
    %v121 = vsel %vm101, %v93, 0
    %v124 = vsel %vm101, %v94, 0
    %vm126 = vcmask 1043456
    %v128 = vsel %vm126, %v85, 0
    %130 = vmatprep.subr.bf16.mxu0 0
    %131 = vmatpush1.bf16.msra.mxu0 %v128
    %132 = vmatprep.subr.bf16.mxu0 0
    %133 = vmatpush1.bf16.msra.mxu0 0
    %134 = vmatprep.subr.bf16.mxu0 0
    %135 = vmatpush1.bf16.msra.mxu0 0
    %136 = vmatprep.subr.bf16.mxu0 0
    %137 = vmatpush1.bf16.msra.mxu0 0
    %138 = vmatprep.subr.bf16.mxu0 0
    %139 = vmatpush1.bf16.msra.mxu0 0
    %140 = vmatprep.subr.bf16.mxu0 0
    %141 = vmatpush1.bf16.msra.mxu0 0
    %142 = vmatprep.subr.bf16.mxu0 0
    %143 = vmatpush1.bf16.msra.mxu0 0
    %144 = vmatprep.subr.bf16.mxu0 0
    %145 = vmatpush1.bf16.msra.mxu0 0
    %146 = vmatprep.subr.bf16.mxu0 0
    %147 = vmatpush1.bf16.msra.mxu0 0
    %148 = vmatprep.subr.bf16.mxu0 0
    %149 = vmatpush1.bf16.msra.mxu0 0
    %150 = vmatprep.subr.bf16.mxu0 0
    %151 = vmatpush1.bf16.msra.mxu0 0
    %152 = vmatprep.subr.bf16.mxu0 0
    %153 = vmatpush1.bf16.msra.mxu0 0
    %154 = vmatprep.subr.bf16.mxu0 0
    %155 = vmatpush1.bf16.msra.mxu0 0
    %156 = vmatprep.subr.bf16.mxu0 0
    %157 = vmatpush1.bf16.msra.mxu0 0
    %158 = vmatprep.subr.bf16.mxu0 0
    %159 = vmatpush1.bf16.msra.mxu0 0
    %160 = vmatprep.subr.bf16.mxu0 0
    %161 = vmatpush1.bf16.msra.mxu0 0
    %162 = vmatprep.mubr.bf16.mxu0 0
    %163 = vmatmul.mubr.bf16.gmra.mrb[0].mxu0 %v103
    %v164 = vpop.f32.mrb[0].mxu0
    %v165 = vadd.f32 %v99, %v164
    %v166 = vpop.f32.mrb[0].mxu0
    %v167 = vpop.f32.mrb[0].mxu0
    %v168 = vadd.f32 %v99, %v167
    %v169 = vpop.f32.mrb[0].mxu0
    %170 = vmatprep.mubr.bf16.mxu0 0
    %171 = vmatmul.mubr.bf16.gmra.mrb[0].mxu0 %v106
    %v172 = vpop.f32.mrb[0].mxu0
    %v173 = vadd.f32 %v99, %v172
    %v174 = vpop.f32.mrb[0].mxu0
    %v175 = vpop.f32.mrb[0].mxu0
    %v176 = vadd.f32 %v99, %v175
    %v177 = vpop.f32.mrb[0].mxu0
    %178 = vmatprep.mubr.bf16.mxu0 0
    %179 = vmatmul.mubr.bf16.gmra.mrb[0].mxu0 %v109
    %v180 = vpop.f32.mrb[0].mxu0
    %v181 = vadd.f32 %v99, %v180
    %v182 = vpop.f32.mrb[0].mxu0
    %v183 = vpop.f32.mrb[0].mxu0
    %v184 = vadd.f32 %v99, %v183
    %v185 = vpop.f32.mrb[0].mxu0
    %186 = vmatprep.mubr.bf16.mxu0 0
    %187 = vmatmul.mubr.bf16.gmra.mrb[0].mxu0 %v112
    %v188 = vpop.f32.mrb[0].mxu0
    %v189 = vadd.f32 %v99, %v188
    %v190 = vpop.f32.mrb[0].mxu0
    %v191 = vpop.f32.mrb[0].mxu0
    %v192 = vadd.f32 %v99, %v191
    %v193 = vpop.f32.mrb[0].mxu0
    %194 = vmatprep.mubr.bf16.mxu0 0
    %195 = vmatmul.mubr.bf16.gmra.mrb[0].mxu0 %v115
    %v196 = vpop.f32.mrb[0].mxu0
    %v197 = vadd.f32 %v99, %v196
    %v198 = vpop.f32.mrb[0].mxu0
    %v199 = vpop.f32.mrb[0].mxu0
    %v200 = vadd.f32 %v99, %v199
    %v201 = vpop.f32.mrb[0].mxu0
    %202 = vmatprep.mubr.bf16.mxu0 0
    %203 = vmatmul.mubr.bf16.gmra.mrb[0].mxu0 %v118
    %v204 = vpop.f32.mrb[0].mxu0
    %v205 = vadd.f32 %v99, %v204
    %v206 = vpop.f32.mrb[0].mxu0
    %v207 = vpop.f32.mrb[0].mxu0
    %v208 = vadd.f32 %v99, %v207
    %v209 = vpop.f32.mrb[0].mxu0
    %210 = vmatprep.mubr.bf16.mxu0 0
    %211 = vmatmul.mubr.bf16.gmra.mrb[0].mxu0 %v121
    %v212 = vpop.f32.mrb[0].mxu0
    %v213 = vadd.f32 %v99, %v212
    %v214 = vpop.f32.mrb[0].mxu0
    %v215 = vpop.f32.mrb[0].mxu0
    %v216 = vadd.f32 %v99, %v215
    %v217 = vpop.f32.mrb[0].mxu0
    %218 = vmatprep.mubr.bf16.mxu0 0
    %219 = vmatmul.mubr.bf16.gmra.mrb[0].mxu0 %v124
    %v220 = vpop.f32.mrb[0].mxu0
    %v221 = vadd.f32 %v99, %v220
    %v222 = vpop.f32.mrb[0].mxu0
    %v223 = vpop.f32.mrb[0].mxu0
    %v224 = vadd.f32 %v99, %v223
    %v225 = vpop.f32.mrb[0].mxu0
    %226 = vdwg.mxu0
    %v227 = vmax.f32 %v165, 0.0
    %v228 = vmax.f32 %v168, 0.0
    %v229 = vmax.f32 %v173, 0.0
    %v230 = vmax.f32 %v176, 0.0
    %v231 = vmax.f32 %v181, 0.0
    %v232 = vmax.f32 %v184, 0.0
    %v233 = vmax.f32 %v189, 0.0
    %v234 = vmax.f32 %v192, 0.0
    %v235 = vmax.f32 %v197, 0.0
    %v236 = vmax.f32 %v200, 0.0
    %v237 = vmax.f32 %v205, 0.0
    %v238 = vmax.f32 %v208, 0.0
    %v239 = vmax.f32 %v213, 0.0
    %v240 = vmax.f32 %v216, 0.0
    %v241 = vmax.f32 %v221, 0.0
    %v242 = vmax.f32 %v224, 0.0
    %v243 = vld [vmem:[%s4] sm:$0xf]
    %v244 = vld [vmem:[%s4 + $0x4] sm:$0xf]
    %v245 = vld [vmem:[%s5] sm:$0x1]
    %v246 = vpack.c.bf16 %v228, %v227
    %v247 = vpack.c.bf16 %v230, %v229
    %v248 = vpack.c.bf16 %v232, %v231
    %v249 = vpack.c.bf16 %v234, %v233
    %v250 = vpack.c.bf16 %v236, %v235
    %v251 = vpack.c.bf16 %v238, %v237
    %v252 = vpack.c.bf16 %v240, %v239
    %v253 = vpack.c.bf16 %v242, %v241
    %v255 = vlaneseq
    %v256 = vshrl.u32 %v255, 7
    %v257 = vsub.s32 0, %v256
    %v258 = vrot.slane %v245, %v257
    %v262 = vunpack.c.l.b16 %v243
    %v263 = vunpack.c.l.b16 %v244
    %v264 = vpack.c.b16 %v263, %v262
    %vm266 = vcmask 130048
    %v268 = vsel %vm266, %v246, 0
    %v271 = vsel %vm266, %v247, 0
    %v274 = vsel %vm266, %v248, 0
    %v277 = vsel %vm266, %v249, 0
    %v280 = vsel %vm266, %v250, 0
    %v283 = vsel %vm266, %v251, 0
    %v286 = vsel %vm266, %v252, 0
    %v289 = vsel %vm266, %v253, 0
    %291 = vmatprep.subr.bf16.mxu0 0
    %292 = vmatpush1.bf16.msra.mxu0 %v264
    %293 = vmatprep.subr.bf16.mxu0 0
    %294 = vmatpush1.bf16.msra.mxu0 0
    %295 = vmatprep.subr.bf16.mxu0 0
    %296 = vmatpush1.bf16.msra.mxu0 0
    %297 = vmatprep.subr.bf16.mxu0 0
    %298 = vmatpush1.bf16.msra.mxu0 0
    %299 = vmatprep.subr.bf16.mxu0 0
    %300 = vmatpush1.bf16.msra.mxu0 0
    %301 = vmatprep.subr.bf16.mxu0 0
    %302 = vmatpush1.bf16.msra.mxu0 0
    %303 = vmatprep.subr.bf16.mxu0 0
    %304 = vmatpush1.bf16.msra.mxu0 0
    %305 = vmatprep.subr.bf16.mxu0 0
    %306 = vmatpush1.bf16.msra.mxu0 0
    %307 = vmatprep.subr.bf16.mxu0 0
    %308 = vmatpush1.bf16.msra.mxu0 0
    %309 = vmatprep.subr.bf16.mxu0 0
    %310 = vmatpush1.bf16.msra.mxu0 0
    %311 = vmatprep.subr.bf16.mxu0 0
    %312 = vmatpush1.bf16.msra.mxu0 0
    %313 = vmatprep.subr.bf16.mxu0 0
    %314 = vmatpush1.bf16.msra.mxu0 0
    %315 = vmatprep.subr.bf16.mxu0 0
    %316 = vmatpush1.bf16.msra.mxu0 0
    %317 = vmatprep.subr.bf16.mxu0 0
    %318 = vmatpush1.bf16.msra.mxu0 0
    %319 = vmatprep.subr.bf16.mxu0 0
    %320 = vmatpush1.bf16.msra.mxu0 0
    %321 = vmatprep.subr.bf16.mxu0 0
    %322 = vmatpush1.bf16.msra.mxu0 0
    %323 = vmatprep.mubr.bf16.mxu0 0
    %324 = vmatmul.mubr.bf16.gmra.mrb[0].mxu0 %v268
    %v325 = vpop.f32.mrb[0].mxu0
    %v326 = vadd.f32 %v258, %v325
    %v327 = vpop.f32.mrb[0].mxu0
    %v328 = vpop.f32.mrb[0].mxu0
    %v329 = vadd.f32 %v258, %v328
    %v330 = vpop.f32.mrb[0].mxu0
    %331 = vmatprep.mubr.bf16.mxu0 0
    %332 = vmatmul.mubr.bf16.gmra.mrb[0].mxu0 %v271
    %v333 = vpop.f32.mrb[0].mxu0
    %v334 = vadd.f32 %v258, %v333
    %v335 = vpop.f32.mrb[0].mxu0
    %v336 = vpop.f32.mrb[0].mxu0
    %v337 = vadd.f32 %v258, %v336
    %v338 = vpop.f32.mrb[0].mxu0
    %339 = vmatprep.mubr.bf16.mxu0 0
    %340 = vmatmul.mubr.bf16.gmra.mrb[0].mxu0 %v274
    %v341 = vpop.f32.mrb[0].mxu0
    %v342 = vadd.f32 %v258, %v341
    %v343 = vpop.f32.mrb[0].mxu0
    %v344 = vpop.f32.mrb[0].mxu0
    %v345 = vadd.f32 %v258, %v344
    %v346 = vpop.f32.mrb[0].mxu0
    %347 = vmatprep.mubr.bf16.mxu0 0
    %348 = vmatmul.mubr.bf16.gmra.mrb[0].mxu0 %v277
    %v349 = vpop.f32.mrb[0].mxu0
    %v350 = vadd.f32 %v258, %v349
    %v351 = vpop.f32.mrb[0].mxu0
    %v352 = vpop.f32.mrb[0].mxu0
    %v353 = vadd.f32 %v258, %v352
    %v354 = vpop.f32.mrb[0].mxu0
    %355 = vmatprep.mubr.bf16.mxu0 0
    %356 = vmatmul.mubr.bf16.gmra.mrb[0].mxu0 %v280
    %v357 = vpop.f32.mrb[0].mxu0
    %v358 = vadd.f32 %v258, %v357
    %v359 = vpop.f32.mrb[0].mxu0
    %v360 = vpop.f32.mrb[0].mxu0
    %v361 = vadd.f32 %v258, %v360
    %v362 = vpop.f32.mrb[0].mxu0
    %363 = vmatprep.mubr.bf16.mxu0 0
    %364 = vmatmul.mubr.bf16.gmra.mrb[0].mxu0 %v283
    %v365 = vpop.f32.mrb[0].mxu0
    %v366 = vadd.f32 %v258, %v365
    %v367 = vpop.f32.mrb[0].mxu0
    %v368 = vpop.f32.mrb[0].mxu0
    %v369 = vadd.f32 %v258, %v368
    %v370 = vpop.f32.mrb[0].mxu0
    %371 = vmatprep.mubr.bf16.mxu0 0
    %372 = vmatmul.mubr.bf16.gmra.mrb[0].mxu0 %v286
    %v373 = vpop.f32.mrb[0].mxu0
    %v374 = vadd.f32 %v258, %v373
    %v375 = vpop.f32.mrb[0].mxu0
    %v376 = vpop.f32.mrb[0].mxu0
    %v377 = vadd.f32 %v258, %v376
    %v378 = vpop.f32.mrb[0].mxu0
    %379 = vmatprep.mubr.bf16.mxu0 0
    %380 = vmatmul.mubr.bf16.gmra.mrb[0].mxu0 %v289
    %v381 = vpop.f32.mrb[0].mxu0
    %v382 = vadd.f32 %v258, %v381
    %v383 = vpop.f32.mrb[0].mxu0
    %v384 = vpop.f32.mrb[0].mxu0
    %v385 = vadd.f32 %v258, %v384
    %v386 = vpop.f32.mrb[0].mxu0
    %387 = vdwg.mxu0
    %v388 = vmax.f32 %v326, 0.0
    %v389 = vmax.f32 %v329, 0.0
    %v390 = vmax.f32 %v334, 0.0
    %v391 = vmax.f32 %v337, 0.0
    %v392 = vmax.f32 %v342, 0.0
    %v393 = vmax.f32 %v345, 0.0
    %v394 = vmax.f32 %v350, 0.0
    %v395 = vmax.f32 %v353, 0.0
    %v396 = vmax.f32 %v358, 0.0
    %v397 = vmax.f32 %v361, 0.0
    %v398 = vmax.f32 %v366, 0.0
    %v399 = vmax.f32 %v369, 0.0
    %v400 = vmax.f32 %v374, 0.0
    %v401 = vmax.f32 %v377, 0.0
    %v402 = vmax.f32 %v382, 0.0
    %v403 = vmax.f32 %v385, 0.0
    %v404 = vld [vmem:[%s1] sm:$0xff]
    %v405 = vld [vmem:[%s1 + $0x8] sm:$0xff]
    %v406 = vld [vmem:[%s1 + $0x10] sm:$0xff]
    %v407 = vld [vmem:[%s1 + $0x18] sm:$0xff]
    %v408 = vld [vmem:[%s1 + $0x20] sm:$0xff]
    %v409 = vld [vmem:[%s1 + $0x28] sm:$0xff]
    %v410 = vld [vmem:[%s1 + $0x30] sm:$0xff]
    %v411 = vld [vmem:[%s1 + $0x38] sm:$0xff]
    %v412 = vld [vmem:[%s1 + $0x40] sm:$0xff]
    %v413 = vld [vmem:[%s1 + $0x48] sm:$0xff]
    %v414 = vld [vmem:[%s1 + $0x50] sm:$0xff]
    %v415 = vld [vmem:[%s1 + $0x58] sm:$0xff]
    %v416 = vld [vmem:[%s1 + $0x60] sm:$0xff]
    %v417 = vld [vmem:[%s1 + $0x68] sm:$0xff]
    %v418 = vld [vmem:[%s1 + $0x70] sm:$0xff]
    %v419 = vld [vmem:[%s1 + $0x78] sm:$0xff]
    %v420 = vld [vmem:[%s6] sm:$0x3]
    %v421 = vld [vmem:[%s7] sm:$0x1]
    %v422 = vpack.c.bf16 %v405, %v404
    %v423 = vpack.c.bf16 %v407, %v406
    %v424 = vpack.c.bf16 %v409, %v408
    %v425 = vpack.c.bf16 %v411, %v410
    %v426 = vpack.c.bf16 %v413, %v412
    %v427 = vpack.c.bf16 %v415, %v414
    %v428 = vpack.c.bf16 %v417, %v416
    %v429 = vpack.c.bf16 %v419, %v418
    %v431 = vlaneseq
    %v432 = vshrl.u32 %v431, 7
    %v433 = vsub.s32 0, %v432
    %v434 = vrot.slane %v421, %v433
    %vm436 = vcmask 23552
    %v438 = vsel %vm436, %v422, 0
    %v441 = vsel %vm436, %v423, 0
    %v444 = vsel %vm436, %v424, 0
    %v447 = vsel %vm436, %v425, 0
    %v450 = vsel %vm436, %v426, 0
    %v453 = vsel %vm436, %v427, 0
    %v456 = vsel %vm436, %v428, 0
    %v459 = vsel %vm436, %v429, 0
    %vm461 = vcmask 1040384
    %vm462 = vcmask 1041408
    %v463 = vsel %vm461, 4294967295, 65535
    %v464 = vsel %vm462, %v463, 0
    %v466 = vand.u32 %v420, %v464
    %468 = vmatprep.subr.bf16.mxu0 0
    %469 = vmatpush1.bf16.msra.mxu0 %v466
    %470 = vmatprep.subr.bf16.mxu0 0
    %471 = vmatpush1.bf16.msra.mxu0 0
    %472 = vmatprep.subr.bf16.mxu0 0
    %473 = vmatpush1.bf16.msra.mxu0 0
    %474 = vmatprep.subr.bf16.mxu0 0
    %475 = vmatpush1.bf16.msra.mxu0 0
    %476 = vmatprep.subr.bf16.mxu0 0
    %477 = vmatpush1.bf16.msra.mxu0 0
    %478 = vmatprep.subr.bf16.mxu0 0
    %479 = vmatpush1.bf16.msra.mxu0 0
    %480 = vmatprep.subr.bf16.mxu0 0
    %481 = vmatpush1.bf16.msra.mxu0 0
    %482 = vmatprep.subr.bf16.mxu0 0
    %483 = vmatpush1.bf16.msra.mxu0 0
    %484 = vmatprep.subr.bf16.mxu0 0
    %485 = vmatpush1.bf16.msra.mxu0 0
    %486 = vmatprep.subr.bf16.mxu0 0
    %487 = vmatpush1.bf16.msra.mxu0 0
    %488 = vmatprep.subr.bf16.mxu0 0
    %489 = vmatpush1.bf16.msra.mxu0 0
    %490 = vmatprep.subr.bf16.mxu0 0
    %491 = vmatpush1.bf16.msra.mxu0 0
    %492 = vmatprep.subr.bf16.mxu0 0
    %493 = vmatpush1.bf16.msra.mxu0 0
    %494 = vmatprep.subr.bf16.mxu0 0
    %495 = vmatpush1.bf16.msra.mxu0 0
    %496 = vmatprep.subr.bf16.mxu0 0
    %497 = vmatpush1.bf16.msra.mxu0 0
    %498 = vmatprep.subr.bf16.mxu0 0
    %499 = vmatpush1.bf16.msra.mxu0 0
    %500 = vmatprep.mubr.bf16.mxu0 0
    %501 = vmatmul.mubr.bf16.gmra.mrb[0].mxu0 %v438
    %v502 = vpop.f32.mrb[0].mxu0
    %v503 = vadd.f32 %v434, %v502
    %v504 = vpop.f32.mrb[0].mxu0
    %v505 = vpop.f32.mrb[0].mxu0
    %v506 = vadd.f32 %v434, %v505
    %v507 = vpop.f32.mrb[0].mxu0
    %508 = vmatprep.mubr.bf16.mxu0 0
    %509 = vmatmul.mubr.bf16.gmra.mrb[0].mxu0 %v441
    %v510 = vpop.f32.mrb[0].mxu0
    %v511 = vadd.f32 %v434, %v510
    %v512 = vpop.f32.mrb[0].mxu0
    %v513 = vpop.f32.mrb[0].mxu0
    %v514 = vadd.f32 %v434, %v513
    %v515 = vpop.f32.mrb[0].mxu0
    %516 = vmatprep.mubr.bf16.mxu0 0
    %517 = vmatmul.mubr.bf16.gmra.mrb[0].mxu0 %v444
    %v518 = vpop.f32.mrb[0].mxu0
    %v519 = vadd.f32 %v434, %v518
    %v520 = vpop.f32.mrb[0].mxu0
    %v521 = vpop.f32.mrb[0].mxu0
    %v522 = vadd.f32 %v434, %v521
    %v523 = vpop.f32.mrb[0].mxu0
    %524 = vmatprep.mubr.bf16.mxu0 0
    %525 = vmatmul.mubr.bf16.gmra.mrb[0].mxu0 %v447
    %v526 = vpop.f32.mrb[0].mxu0
    %v527 = vadd.f32 %v434, %v526
    %v528 = vpop.f32.mrb[0].mxu0
    %v529 = vpop.f32.mrb[0].mxu0
    %v530 = vadd.f32 %v434, %v529
    %v531 = vpop.f32.mrb[0].mxu0
    %532 = vmatprep.mubr.bf16.mxu0 0
    %533 = vmatmul.mubr.bf16.gmra.mrb[0].mxu0 %v450
    %v534 = vpop.f32.mrb[0].mxu0
    %v535 = vadd.f32 %v434, %v534
    %v536 = vpop.f32.mrb[0].mxu0
    %v537 = vpop.f32.mrb[0].mxu0
    %v538 = vadd.f32 %v434, %v537
    %v539 = vpop.f32.mrb[0].mxu0
    %540 = vmatprep.mubr.bf16.mxu0 0
    %541 = vmatmul.mubr.bf16.gmra.mrb[0].mxu0 %v453
    %v542 = vpop.f32.mrb[0].mxu0
    %v543 = vadd.f32 %v434, %v542
    %v544 = vpop.f32.mrb[0].mxu0
    %v545 = vpop.f32.mrb[0].mxu0
    %v546 = vadd.f32 %v434, %v545
    %v547 = vpop.f32.mrb[0].mxu0
    %548 = vmatprep.mubr.bf16.mxu0 0
    %549 = vmatmul.mubr.bf16.gmra.mrb[0].mxu0 %v456
    %v550 = vpop.f32.mrb[0].mxu0
    %v551 = vadd.f32 %v434, %v550
    %v552 = vpop.f32.mrb[0].mxu0
    %v553 = vpop.f32.mrb[0].mxu0
    %v554 = vadd.f32 %v434, %v553
    %v555 = vpop.f32.mrb[0].mxu0
    %556 = vmatprep.mubr.bf16.mxu0 0
    %557 = vmatmul.mubr.bf16.gmra.mrb[0].mxu0 %v459
    %v558 = vpop.f32.mrb[0].mxu0
    %v559 = vadd.f32 %v434, %v558
    %v560 = vpop.f32.mrb[0].mxu0
    %v561 = vpop.f32.mrb[0].mxu0
    %v562 = vadd.f32 %v434, %v561
    %v563 = vpop.f32.mrb[0].mxu0
    %564 = vdwg.mxu0
    %v565 = vmax.f32 %v503, 0.0
    %v566 = vmax.f32 %v506, 0.0
    %v567 = vmax.f32 %v511, 0.0
    %v568 = vmax.f32 %v514, 0.0
    %v569 = vmax.f32 %v519, 0.0
    %v570 = vmax.f32 %v522, 0.0
    %v571 = vmax.f32 %v527, 0.0
    %v572 = vmax.f32 %v530, 0.0
    %v573 = vmax.f32 %v535, 0.0
    %v574 = vmax.f32 %v538, 0.0
    %v575 = vmax.f32 %v543, 0.0
    %v576 = vmax.f32 %v546, 0.0
    %v577 = vmax.f32 %v551, 0.0
    %v578 = vmax.f32 %v554, 0.0
    %v579 = vmax.f32 %v559, 0.0
    %v580 = vmax.f32 %v562, 0.0
    %v581 = vld [vmem:[%s8] sm:$0xf]
    %v582 = vld [vmem:[%s8 + $0x4] sm:$0xf]
    %v583 = vld [vmem:[%s8 + $0x8] sm:$0xf]
    %v584 = vld [vmem:[%s8 + $0xc] sm:$0xf]
    %v585 = vld [vmem:[%s8 + $0x10] sm:$0xf]
    %v586 = vld [vmem:[%s8 + $0x14] sm:$0xf]
    %v587 = vld [vmem:[%s8 + $0x18] sm:$0xf]
    %v588 = vld [vmem:[%s8 + $0x1c] sm:$0xf]
    %v589 = vld [vmem:[%s8 + $0x20] sm:$0xf]
    %v590 = vld [vmem:[%s8 + $0x24] sm:$0xf]
    %v591 = vld [vmem:[%s8 + $0x28] sm:$0xf]
    %v592 = vld [vmem:[%s8 + $0x2c] sm:$0xf]
    %v593 = vld [vmem:[%s8 + $0x30] sm:$0xf]
    %v594 = vld [vmem:[%s8 + $0x34] sm:$0xf]
    %v595 = vld [vmem:[%s8 + $0x38] sm:$0xf]
    %v596 = vld [vmem:[%s8 + $0x3c] sm:$0xf]
    %v597 = vld [vmem:[%s9] sm:$0x1]
    %v598 = vpack.c.bf16 %v566, %v565
    %v599 = vpack.c.bf16 %v568, %v567
    %v600 = vpack.c.bf16 %v570, %v569
    %v601 = vpack.c.bf16 %v572, %v571
    %v602 = vpack.c.bf16 %v574, %v573
    %v603 = vpack.c.bf16 %v576, %v575
    %v604 = vpack.c.bf16 %v578, %v577
    %v605 = vpack.c.bf16 %v580, %v579
    %v607 = vlaneseq
    %v608 = vshrl.u32 %v607, 7
    %v609 = vsub.s32 0, %v608
    %v610 = vrot.slane %v597, %v609
    %v628 = vunpack.c.l.b16 %v581
    %v629 = vunpack.c.l.b16 %v582
    %v630 = vunpack.c.l.b16 %v583
    %v631 = vunpack.c.l.b16 %v584
    %v632 = vunpack.c.l.b16 %v585
    %v633 = vunpack.c.l.b16 %v586
    %v634 = vunpack.c.l.b16 %v587
    %v635 = vunpack.c.l.b16 %v588
    %v636 = vunpack.c.l.b16 %v589
    %v637 = vunpack.c.l.b16 %v590
    %v638 = vunpack.c.l.b16 %v591
    %v639 = vunpack.c.l.b16 %v592
    %v640 = vunpack.c.l.b16 %v593
    %v641 = vunpack.c.l.b16 %v594
    %v642 = vunpack.c.l.b16 %v595
    %v643 = vunpack.c.l.b16 %v596
    %v644 = vpack.c.b16 %v629, %v628
    %v645 = vpack.c.b16 %v631, %v630
    %v646 = vpack.c.b16 %v633, %v632
    %v647 = vpack.c.b16 %v635, %v634
    %v648 = vpack.c.b16 %v637, %v636
    %v649 = vpack.c.b16 %v639, %v638
    %v650 = vpack.c.b16 %v641, %v640
    %v651 = vpack.c.b16 %v643, %v642
    %660 = vmatprep.subr.bf16.mxu0 0
    %661 = vmatpush1.bf16.msra.mxu0 %v644
    %662 = vmatprep.subr.bf16.mxu0 0
    %663 = vmatpush1.bf16.msra.mxu0 %v645
    %664 = vmatprep.subr.bf16.mxu0 0
    %665 = vmatpush1.bf16.msra.mxu0 %v646
    %666 = vmatprep.subr.bf16.mxu0 0
    %667 = vmatpush1.bf16.msra.mxu0 %v647
    %668 = vmatprep.subr.bf16.mxu0 0
    %669 = vmatpush1.bf16.msra.mxu0 %v648
    %670 = vmatprep.subr.bf16.mxu0 0
    %671 = vmatpush1.bf16.msra.mxu0 %v649
    %672 = vmatprep.subr.bf16.mxu0 0
    %673 = vmatpush1.bf16.msra.mxu0 %v650
    %674 = vmatprep.subr.bf16.mxu0 0
    %675 = vmatpush1.bf16.msra.mxu0 %v651
    %676 = vmatprep.subr.bf16.mxu0 0
    %677 = vmatpush1.bf16.msra.mxu0 0
    %678 = vmatprep.subr.bf16.mxu0 0
    %679 = vmatpush1.bf16.msra.mxu0 0
    %680 = vmatprep.subr.bf16.mxu0 0
    %681 = vmatpush1.bf16.msra.mxu0 0
    %682 = vmatprep.subr.bf16.mxu0 0
    %683 = vmatpush1.bf16.msra.mxu0 0
    %684 = vmatprep.subr.bf16.mxu0 0
    %685 = vmatpush1.bf16.msra.mxu0 0
    %686 = vmatprep.subr.bf16.mxu0 0
    %687 = vmatpush1.bf16.msra.mxu0 0
    %688 = vmatprep.subr.bf16.mxu0 0
    %689 = vmatpush1.bf16.msra.mxu0 0
    %690 = vmatprep.subr.bf16.mxu0 0
    %691 = vmatpush1.bf16.msra.mxu0 0
    %692 = vmatprep.mubr.bf16.mxu0 0
    %693 = vmatmul.mubr.bf16.gmra.mrb[0].mxu0 %v598
    %v694 = vpop.f32.mrb[0].mxu0
    %v695 = vadd.f32 %v610, %v694
    %v696 = vpop.f32.mrb[0].mxu0
    %v697 = vpop.f32.mrb[0].mxu0
    %v698 = vadd.f32 %v610, %v697
    %v699 = vpop.f32.mrb[0].mxu0
    %700 = vmatprep.mubr.bf16.mxu0 0
    %701 = vmatmul.mubr.bf16.gmra.mrb[0].mxu0 %v599
    %v702 = vpop.f32.mrb[0].mxu0
    %v703 = vadd.f32 %v610, %v702
    %v704 = vpop.f32.mrb[0].mxu0
    %v705 = vpop.f32.mrb[0].mxu0
    %v706 = vadd.f32 %v610, %v705
    %v707 = vpop.f32.mrb[0].mxu0
    %708 = vmatprep.mubr.bf16.mxu0 0
    %709 = vmatmul.mubr.bf16.gmra.mrb[0].mxu0 %v600
    %v710 = vpop.f32.mrb[0].mxu0
    %v711 = vadd.f32 %v610, %v710
    %v712 = vpop.f32.mrb[0].mxu0
    %v713 = vpop.f32.mrb[0].mxu0
    %v714 = vadd.f32 %v610, %v713
    %v715 = vpop.f32.mrb[0].mxu0
    %716 = vmatprep.mubr.bf16.mxu0 0
    %717 = vmatmul.mubr.bf16.gmra.mrb[0].mxu0 %v601
    %v718 = vpop.f32.mrb[0].mxu0
    %v719 = vadd.f32 %v610, %v718
    %v720 = vpop.f32.mrb[0].mxu0
    %v721 = vpop.f32.mrb[0].mxu0
    %v722 = vadd.f32 %v610, %v721
    %v723 = vpop.f32.mrb[0].mxu0
    %724 = vmatprep.mubr.bf16.mxu0 0
    %725 = vmatmul.mubr.bf16.gmra.mrb[0].mxu0 %v602
    %v726 = vpop.f32.mrb[0].mxu0
    %v727 = vadd.f32 %v610, %v726
    %v728 = vpop.f32.mrb[0].mxu0
    %v729 = vpop.f32.mrb[0].mxu0
    %v730 = vadd.f32 %v610, %v729
    %v731 = vpop.f32.mrb[0].mxu0
    %732 = vmatprep.mubr.bf16.mxu0 0
    %733 = vmatmul.mubr.bf16.gmra.mrb[0].mxu0 %v603
    %v734 = vpop.f32.mrb[0].mxu0
    %v735 = vadd.f32 %v610, %v734
    %v736 = vpop.f32.mrb[0].mxu0
    %v737 = vpop.f32.mrb[0].mxu0
    %v738 = vadd.f32 %v610, %v737
    %v739 = vpop.f32.mrb[0].mxu0
    %740 = vmatprep.mubr.bf16.mxu0 0
    %741 = vmatmul.mubr.bf16.gmra.mrb[0].mxu0 %v604
    %v742 = vpop.f32.mrb[0].mxu0
    %v743 = vadd.f32 %v610, %v742
    %v744 = vpop.f32.mrb[0].mxu0
    %v745 = vpop.f32.mrb[0].mxu0
    %v746 = vadd.f32 %v610, %v745
    %v747 = vpop.f32.mrb[0].mxu0
    %748 = vmatprep.mubr.bf16.mxu0 0
    %749 = vmatmul.mubr.bf16.gmra.mrb[0].mxu0 %v605
    %v750 = vpop.f32.mrb[0].mxu0
    %v751 = vadd.f32 %v610, %v750
    %v752 = vpop.f32.mrb[0].mxu0
    %v753 = vpop.f32.mrb[0].mxu0
    %v754 = vadd.f32 %v610, %v753
    %v755 = vpop.f32.mrb[0].mxu0
    %756 = vdwg.mxu0
    %v757 = vmax.f32 %v695, 0.0
    %v758 = vmax.f32 %v698, 0.0
    %v759 = vmax.f32 %v703, 0.0
    %v760 = vmax.f32 %v706, 0.0
    %v761 = vmax.f32 %v711, 0.0
    %v762 = vmax.f32 %v714, 0.0
    %v763 = vmax.f32 %v719, 0.0
    %v764 = vmax.f32 %v722, 0.0
    %v765 = vmax.f32 %v727, 0.0
    %v766 = vmax.f32 %v730, 0.0
    %v767 = vmax.f32 %v735, 0.0
    %v768 = vmax.f32 %v738, 0.0
    %v769 = vmax.f32 %v743, 0.0
    %v770 = vmax.f32 %v746, 0.0
    %v771 = vmax.f32 %v751, 0.0
    %v772 = vmax.f32 %v754, 0.0
    %v773 = vld [vmem:[%s10] sm:$0xff]
    %v774 = vld [vmem:[%s10 + $0x8] sm:$0xff]
    %v775 = vld [vmem:[%s10 + $0x10] sm:$0xff]
    %v776 = vld [vmem:[%s10 + $0x18] sm:$0xff]
    %v777 = vld [vmem:[%s10 + $0x20] sm:$0xff]
    %v778 = vld [vmem:[%s10 + $0x28] sm:$0xff]
    %v779 = vld [vmem:[%s10 + $0x30] sm:$0xff]
    %v780 = vld [vmem:[%s10 + $0x38] sm:$0xff]
    %v781 = vld [vmem:[%s10 + $0x40] sm:$0xff]
    %v782 = vld [vmem:[%s10 + $0x48] sm:$0xff]
    %v783 = vld [vmem:[%s10 + $0x50] sm:$0xff]
    %v784 = vld [vmem:[%s10 + $0x58] sm:$0xff]
    %v785 = vld [vmem:[%s10 + $0x60] sm:$0xff]
    %v786 = vld [vmem:[%s10 + $0x68] sm:$0xff]
    %v787 = vld [vmem:[%s10 + $0x70] sm:$0xff]
    %v788 = vld [vmem:[%s10 + $0x78] sm:$0xff]
    %v789 = vld [vmem:[%s11] sm:$0x3]
    %v790 = vpack.c.bf16 %v758, %v757
    %v791 = vpack.c.bf16 %v760, %v759
    %v792 = vpack.c.bf16 %v762, %v761
    %v793 = vpack.c.bf16 %v764, %v763
    %v794 = vpack.c.bf16 %v766, %v765
    %v795 = vpack.c.bf16 %v768, %v767
    %v796 = vpack.c.bf16 %v770, %v769
    %v797 = vpack.c.bf16 %v772, %v771
    %v799 = vlaneseq
    %v800 = vshrl.u32 %v799, 7
    %v801 = vsub.s32 0, %v800
    %v802 = vrot.slane %v789, %v801
    %v803 = vlaneseq
    %v804 = vshrl.u32 %v803, 7
    %v805 = vsub.s32 1, %v804
    %v806 = vrot.slane %v789, %v805
    %v825 = vunpack.c.l.b16 %v773
    %v826 = vunpack.c.h.b16 %v773
    %v827 = vunpack.c.l.b16 %v774
    %v828 = vunpack.c.h.b16 %v774
    %v829 = vunpack.c.l.b16 %v775
    %v830 = vunpack.c.h.b16 %v775
    %v831 = vunpack.c.l.b16 %v776
    %v832 = vunpack.c.h.b16 %v776
    %v833 = vunpack.c.l.b16 %v777
    %v834 = vunpack.c.h.b16 %v777
    %v835 = vunpack.c.l.b16 %v778
    %v836 = vunpack.c.h.b16 %v778
    %v837 = vunpack.c.l.b16 %v779
    %v838 = vunpack.c.h.b16 %v779
    %v839 = vunpack.c.l.b16 %v780
    %v840 = vunpack.c.h.b16 %v780
    %v841 = vunpack.c.l.b16 %v781
    %v842 = vunpack.c.h.b16 %v781
    %v843 = vunpack.c.l.b16 %v782
    %v844 = vunpack.c.h.b16 %v782
    %v845 = vunpack.c.l.b16 %v783
    %v846 = vunpack.c.h.b16 %v783
    %v847 = vunpack.c.l.b16 %v784
    %v848 = vunpack.c.h.b16 %v784
    %v849 = vunpack.c.l.b16 %v785
    %v850 = vunpack.c.h.b16 %v785
    %v851 = vunpack.c.l.b16 %v786
    %v852 = vunpack.c.h.b16 %v786
    %v853 = vunpack.c.l.b16 %v787
    %v854 = vunpack.c.h.b16 %v787
    %v855 = vunpack.c.l.b16 %v788
    %v856 = vunpack.c.h.b16 %v788
    %v857 = vpack.c.b16 %v827, %v825
    %v858 = vpack.c.b16 %v828, %v826
    %v859 = vpack.c.b16 %v831, %v829
    %v860 = vpack.c.b16 %v832, %v830
    %v861 = vpack.c.b16 %v835, %v833
    %v862 = vpack.c.b16 %v836, %v834
    %v863 = vpack.c.b16 %v839, %v837
    %v864 = vpack.c.b16 %v840, %v838
    %v865 = vpack.c.b16 %v843, %v841
    %v866 = vpack.c.b16 %v844, %v842
    %v867 = vpack.c.b16 %v847, %v845
    %v868 = vpack.c.b16 %v848, %v846
    %v869 = vpack.c.b16 %v851, %v849
    %v870 = vpack.c.b16 %v852, %v850
    %v871 = vpack.c.b16 %v855, %v853
    %v872 = vpack.c.b16 %v856, %v854
    %889 = vmatprep.subr.bf16.mxu0 %v858
    %890 = vmatpush1.bf16.msra.mxu0 %v857
    %891 = vmatprep.subr.bf16.mxu0 %v860
    %892 = vmatpush1.bf16.msra.mxu0 %v859
    %893 = vmatprep.subr.bf16.mxu0 %v862
    %894 = vmatpush1.bf16.msra.mxu0 %v861
    %895 = vmatprep.subr.bf16.mxu0 %v864
    %896 = vmatpush1.bf16.msra.mxu0 %v863
    %897 = vmatprep.subr.bf16.mxu0 %v866
    %898 = vmatpush1.bf16.msra.mxu0 %v865
    %899 = vmatprep.subr.bf16.mxu0 %v868
    %900 = vmatpush1.bf16.msra.mxu0 %v867
    %901 = vmatprep.subr.bf16.mxu0 %v870
    %902 = vmatpush1.bf16.msra.mxu0 %v869
    %903 = vmatprep.subr.bf16.mxu0 %v872
    %904 = vmatpush1.bf16.msra.mxu0 %v871
    %905 = vmatprep.subr.bf16.mxu0 0
    %906 = vmatpush1.bf16.msra.mxu0 0
    %907 = vmatprep.subr.bf16.mxu0 0
    %908 = vmatpush1.bf16.msra.mxu0 0
    %909 = vmatprep.subr.bf16.mxu0 0
    %910 = vmatpush1.bf16.msra.mxu0 0
    %911 = vmatprep.subr.bf16.mxu0 0
    %912 = vmatpush1.bf16.msra.mxu0 0
    %913 = vmatprep.subr.bf16.mxu0 0
    %914 = vmatpush1.bf16.msra.mxu0 0
    %915 = vmatprep.subr.bf16.mxu0 0
    %916 = vmatpush1.bf16.msra.mxu0 0
    %917 = vmatprep.subr.bf16.mxu0 0
    %918 = vmatpush1.bf16.msra.mxu0 0
    %919 = vmatprep.subr.bf16.mxu0 0
    %920 = vmatpush1.bf16.msra.mxu0 0
    %921 = vmatprep.mubr.bf16.mxu0 0
    %922 = vmatmul.mubr.bf16.gmra.mrb[0].mxu0 %v790
    %v923 = vpop.f32.mrb[0].mxu0
    %v924 = vadd.f32 %v802, %v923
    %v925 = vpop.f32.mrb[0].mxu0
    %v926 = vadd.f32 %v806, %v925
    %v927 = vpop.f32.mrb[0].mxu0
    %v928 = vadd.f32 %v802, %v927
    %v929 = vpop.f32.mrb[0].mxu0
    %v930 = vadd.f32 %v806, %v929
    %931 = vmatprep.mubr.bf16.mxu0 0
    %932 = vmatmul.mubr.bf16.gmra.mrb[0].mxu0 %v791
    %v933 = vpop.f32.mrb[0].mxu0
    %v934 = vadd.f32 %v802, %v933
    %v935 = vpop.f32.mrb[0].mxu0
    %v936 = vadd.f32 %v806, %v935
    %v937 = vpop.f32.mrb[0].mxu0
    %v938 = vadd.f32 %v802, %v937
    %v939 = vpop.f32.mrb[0].mxu0
    %v940 = vadd.f32 %v806, %v939
    %941 = vmatprep.mubr.bf16.mxu0 0
    %942 = vmatmul.mubr.bf16.gmra.mrb[0].mxu0 %v792
    %v943 = vpop.f32.mrb[0].mxu0
    %v944 = vadd.f32 %v802, %v943
    %v945 = vpop.f32.mrb[0].mxu0
    %v946 = vadd.f32 %v806, %v945
    %v947 = vpop.f32.mrb[0].mxu0
    %v948 = vadd.f32 %v802, %v947
    %v949 = vpop.f32.mrb[0].mxu0
    %v950 = vadd.f32 %v806, %v949
    %951 = vmatprep.mubr.bf16.mxu0 0
    %952 = vmatmul.mubr.bf16.gmra.mrb[0].mxu0 %v793
    %v953 = vpop.f32.mrb[0].mxu0
    %v954 = vadd.f32 %v802, %v953
    %v955 = vpop.f32.mrb[0].mxu0
    %v956 = vadd.f32 %v806, %v955
    %v957 = vpop.f32.mrb[0].mxu0
    %v958 = vadd.f32 %v802, %v957
    %v959 = vpop.f32.mrb[0].mxu0
    %v960 = vadd.f32 %v806, %v959
    %961 = vmatprep.mubr.bf16.mxu0 0
    %962 = vmatmul.mubr.bf16.gmra.mrb[0].mxu0 %v794
    %v963 = vpop.f32.mrb[0].mxu0
    %v964 = vadd.f32 %v802, %v963
    %v965 = vpop.f32.mrb[0].mxu0
    %v966 = vadd.f32 %v806, %v965
    %v967 = vpop.f32.mrb[0].mxu0
    %v968 = vadd.f32 %v802, %v967
    %v969 = vpop.f32.mrb[0].mxu0
    %v970 = vadd.f32 %v806, %v969
    %971 = vmatprep.mubr.bf16.mxu0 0
    %972 = vmatmul.mubr.bf16.gmra.mrb[0].mxu0 %v795
    %v973 = vpop.f32.mrb[0].mxu0
    %v974 = vadd.f32 %v802, %v973
    %v975 = vpop.f32.mrb[0].mxu0
    %v976 = vadd.f32 %v806, %v975
    %v977 = vpop.f32.mrb[0].mxu0
    %v978 = vadd.f32 %v802, %v977
    %v979 = vpop.f32.mrb[0].mxu0
    %v980 = vadd.f32 %v806, %v979
    %981 = vmatprep.mubr.bf16.mxu0 0
    %982 = vmatmul.mubr.bf16.gmra.mrb[0].mxu0 %v796
    %v983 = vpop.f32.mrb[0].mxu0
    %v984 = vadd.f32 %v802, %v983
    %v985 = vpop.f32.mrb[0].mxu0
    %v986 = vadd.f32 %v806, %v985
    %v987 = vpop.f32.mrb[0].mxu0
    %v988 = vadd.f32 %v802, %v987
    %v989 = vpop.f32.mrb[0].mxu0
    %v990 = vadd.f32 %v806, %v989
    %991 = vmatprep.mubr.bf16.mxu0 0
    %992 = vmatmul.mubr.bf16.gmra.mrb[0].mxu0 %v797
    %v993 = vpop.f32.mrb[0].mxu0
    %v994 = vadd.f32 %v802, %v993
    %v995 = vpop.f32.mrb[0].mxu0
    %v996 = vadd.f32 %v806, %v995
    %v997 = vpop.f32.mrb[0].mxu0
    %v998 = vadd.f32 %v802, %v997
    %v999 = vpop.f32.mrb[0].mxu0
    %v1000 = vadd.f32 %v806, %v999
    %1001 = vdwg.mxu0
    %v1002 = vmax.f32 %v924, 0.0
    %v1003 = vmax.f32 %v926, 0.0
    %v1004 = vmax.f32 %v928, 0.0
    %v1005 = vmax.f32 %v930, 0.0
    %v1006 = vmax.f32 %v934, 0.0
    %v1007 = vmax.f32 %v936, 0.0
    %v1008 = vmax.f32 %v938, 0.0
    %v1009 = vmax.f32 %v940, 0.0
    %v1010 = vmax.f32 %v944, 0.0
    %v1011 = vmax.f32 %v946, 0.0
    %v1012 = vmax.f32 %v948, 0.0
    %v1013 = vmax.f32 %v950, 0.0
    %v1014 = vmax.f32 %v954, 0.0
    %v1015 = vmax.f32 %v956, 0.0
    %v1016 = vmax.f32 %v958, 0.0
    %v1017 = vmax.f32 %v960, 0.0
    %v1018 = vmax.f32 %v964, 0.0
    %v1019 = vmax.f32 %v966, 0.0
    %v1020 = vmax.f32 %v968, 0.0
    %v1021 = vmax.f32 %v970, 0.0
    %v1022 = vmax.f32 %v974, 0.0
    %v1023 = vmax.f32 %v976, 0.0
    %v1024 = vmax.f32 %v978, 0.0
    %v1025 = vmax.f32 %v980, 0.0
    %v1026 = vmax.f32 %v984, 0.0
    %v1027 = vmax.f32 %v986, 0.0
    %v1028 = vmax.f32 %v988, 0.0
    %v1029 = vmax.f32 %v990, 0.0
    %v1030 = vmax.f32 %v994, 0.0
    %v1031 = vmax.f32 %v996, 0.0
    %v1032 = vmax.f32 %v998, 0.0
    %v1033 = vmax.f32 %v1000, 0.0
    %v1034 = vld [vmem:[#allocation2] sm:$0xff]
    %v1035 = vld [vmem:[#allocation2 + $0x8] sm:$0xff]
    %v1036 = vld [vmem:[#allocation2 + $0x10] sm:$0xff]
    %v1037 = vld [vmem:[#allocation2 + $0x18] sm:$0xff]
    %v1038 = vld [vmem:[#allocation2 + $0x20] sm:$0xff]
    %v1039 = vld [vmem:[#allocation2 + $0x28] sm:$0xff]
    %v1040 = vld [vmem:[#allocation2 + $0x30] sm:$0xff]
    %v1041 = vld [vmem:[#allocation2 + $0x38] sm:$0xff]
    %v1042 = vld [vmem:[#allocation2 + $0x40] sm:$0xff]
    %v1043 = vld [vmem:[#allocation2 + $0x48] sm:$0xff]
    %v1044 = vld [vmem:[#allocation2 + $0x50] sm:$0xff]
    %v1045 = vld [vmem:[#allocation2 + $0x58] sm:$0xff]
    %v1046 = vld [vmem:[#allocation2 + $0x60] sm:$0xff]
    %v1047 = vld [vmem:[#allocation2 + $0x68] sm:$0xff]
    %v1048 = vld [vmem:[#allocation2 + $0x70] sm:$0xff]
    %v1049 = vld [vmem:[#allocation2 + $0x78] sm:$0xff]
    %v1050 = vld [vmem:[#allocation2 + $0x80] sm:$0xff]
    %v1051 = vld [vmem:[#allocation2 + $0x88] sm:$0xff]
    %v1052 = vld [vmem:[#allocation2 + $0x90] sm:$0xff]
    %v1053 = vld [vmem:[#allocation2 + $0x98] sm:$0xff]
    %v1054 = vld [vmem:[#allocation2 + $0xa0] sm:$0xff]
    %v1055 = vld [vmem:[#allocation2 + $0xa8] sm:$0xff]
    %v1056 = vld [vmem:[#allocation2 + $0xb0] sm:$0xff]
    %v1057 = vld [vmem:[#allocation2 + $0xb8] sm:$0xff]
    %v1058 = vld [vmem:[#allocation2 + $0xc0] sm:$0xff]
    %v1059 = vld [vmem:[#allocation2 + $0xc8] sm:$0xff]
    %v1060 = vld [vmem:[#allocation2 + $0xd0] sm:$0xff]
    %v1061 = vld [vmem:[#allocation2 + $0xd8] sm:$0xff]
    %v1062 = vld [vmem:[#allocation2 + $0xe0] sm:$0xff]
    %v1063 = vld [vmem:[#allocation2 + $0xe8] sm:$0xff]
    %v1064 = vld [vmem:[#allocation2 + $0xf0] sm:$0xff]
    %v1065 = vld [vmem:[#allocation2 + $0xf8] sm:$0xff]
    %v1066 = vld [vmem:[#allocation2 + $0x100] sm:$0xff]
    %v1067 = vld [vmem:[#allocation2 + $0x108] sm:$0xff]
    %v1068 = vld [vmem:[#allocation2 + $0x110] sm:$0xff]
    %v1069 = vld [vmem:[#allocation2 + $0x118] sm:$0xff]
    %v1070 = vld [vmem:[#allocation2 + $0x120] sm:$0xff]
    %v1071 = vld [vmem:[#allocation2 + $0x128] sm:$0xff]
    %v1072 = vld [vmem:[#allocation2 + $0x130] sm:$0xff]
    %v1073 = vld [vmem:[#allocation2 + $0x138] sm:$0xff]
    %v1074 = vld [vmem:[#allocation2 + $0x140] sm:$0xff]
    %v1075 = vld [vmem:[#allocation2 + $0x148] sm:$0xff]
    %v1076 = vld [vmem:[#allocation2 + $0x150] sm:$0xff]
    %v1077 = vld [vmem:[#allocation2 + $0x158] sm:$0xff]
    %v1078 = vld [vmem:[#allocation2 + $0x160] sm:$0xff]
    %v1079 = vld [vmem:[#allocation2 + $0x168] sm:$0xff]
    %v1080 = vld [vmem:[#allocation2 + $0x170] sm:$0xff]
    %v1081 = vld [vmem:[#allocation2 + $0x178] sm:$0xff]
    %v1082 = vld [vmem:[#allocation2 + $0x180] sm:$0xff]
    %v1083 = vld [vmem:[#allocation2 + $0x188] sm:$0xff]
    %v1084 = vld [vmem:[#allocation2 + $0x190] sm:$0xff]
    %v1085 = vld [vmem:[#allocation2 + $0x198] sm:$0xff]
    %v1086 = vld [vmem:[#allocation2 + $0x1a0] sm:$0xff]
    %v1087 = vld [vmem:[#allocation2 + $0x1a8] sm:$0xff]
    %v1088 = vld [vmem:[#allocation2 + $0x1b0] sm:$0xff]
    %v1089 = vld [vmem:[#allocation2 + $0x1b8] sm:$0xff]
    %v1090 = vld [vmem:[#allocation2 + $0x1c0] sm:$0xff]
    %v1091 = vld [vmem:[#allocation2 + $0x1c8] sm:$0xff]
    %v1092 = vld [vmem:[#allocation2 + $0x1d0] sm:$0xff]
    %v1093 = vld [vmem:[#allocation2 + $0x1d8] sm:$0xff]
    %v1094 = vld [vmem:[#allocation2 + $0x1e0] sm:$0xff]
    %v1095 = vld [vmem:[#allocation2 + $0x1e8] sm:$0xff]
    %v1096 = vld [vmem:[#allocation2 + $0x1f0] sm:$0xff]
    %v1097 = vld [vmem:[#allocation2 + $0x1f8] sm:$0xff]
    %v1098 = vld [vmem:[%s13] sm:$0xf]
    %v1099 = vpack.c.bf16 %v1004, %v1002
    %v1100 = vpack.c.bf16 %v1005, %v1003
    %v1101 = vpack.c.bf16 %v1008, %v1006
    %v1102 = vpack.c.bf16 %v1009, %v1007
    %v1103 = vpack.c.bf16 %v1012, %v1010
    %v1104 = vpack.c.bf16 %v1013, %v1011
    %v1105 = vpack.c.bf16 %v1016, %v1014
    %v1106 = vpack.c.bf16 %v1017, %v1015
    %v1107 = vpack.c.bf16 %v1020, %v1018
    %v1108 = vpack.c.bf16 %v1021, %v1019
    %v1109 = vpack.c.bf16 %v1024, %v1022
    %v1110 = vpack.c.bf16 %v1025, %v1023
    %v1111 = vpack.c.bf16 %v1028, %v1026
    %v1112 = vpack.c.bf16 %v1029, %v1027
    %v1113 = vpack.c.bf16 %v1032, %v1030
    %v1114 = vpack.c.bf16 %v1033, %v1031
    %v1116 = vlaneseq
    %v1117 = vshrl.u32 %v1116, 7
    %v1118 = vsub.s32 0, %v1117
    %v1119 = vrot.slane %v1098, %v1118
    %v1120 = vlaneseq
    %v1121 = vshrl.u32 %v1120, 7
    %v1122 = vsub.s32 1, %v1121
    %v1123 = vrot.slane %v1098, %v1122
    %v1124 = vlaneseq
    %v1125 = vshrl.u32 %v1124, 7
    %v1126 = vsub.s32 2, %v1125
    %v1127 = vrot.slane %v1098, %v1126
    %v1128 = vlaneseq
    %v1129 = vshrl.u32 %v1128, 7
    %v1130 = vsub.s32 3, %v1129
    %v1131 = vrot.slane %v1098, %v1130
    %v1200 = vunpack.c.l.b16 %v1034
    %v1201 = vunpack.c.h.b16 %v1034
    %v1202 = vunpack.c.l.b16 %v1035
    %v1203 = vunpack.c.h.b16 %v1035
    %v1204 = vunpack.c.l.b16 %v1036
    %v1205 = vunpack.c.h.b16 %v1036
    %v1206 = vunpack.c.l.b16 %v1037
    %v1207 = vunpack.c.h.b16 %v1037
    %v1208 = vunpack.c.l.b16 %v1038
    %v1209 = vunpack.c.h.b16 %v1038
    %v1210 = vunpack.c.l.b16 %v1039
    %v1211 = vunpack.c.h.b16 %v1039
    %v1212 = vunpack.c.l.b16 %v1040
    %v1213 = vunpack.c.h.b16 %v1040
    %v1214 = vunpack.c.l.b16 %v1041
    %v1215 = vunpack.c.h.b16 %v1041
    %v1216 = vunpack.c.l.b16 %v1042
    %v1217 = vunpack.c.h.b16 %v1042
    %v1218 = vunpack.c.l.b16 %v1043
    %v1219 = vunpack.c.h.b16 %v1043
    %v1220 = vunpack.c.l.b16 %v1044
    %v1221 = vunpack.c.h.b16 %v1044
    %v1222 = vunpack.c.l.b16 %v1045
    %v1223 = vunpack.c.h.b16 %v1045
    %v1224 = vunpack.c.l.b16 %v1046
    %v1225 = vunpack.c.h.b16 %v1046
    %v1226 = vunpack.c.l.b16 %v1047
    %v1227 = vunpack.c.h.b16 %v1047
    %v1228 = vunpack.c.l.b16 %v1048
    %v1229 = vunpack.c.h.b16 %v1048
    %v1230 = vunpack.c.l.b16 %v1049
    %v1231 = vunpack.c.h.b16 %v1049
    %v1232 = vunpack.c.l.b16 %v1050
    %v1233 = vunpack.c.h.b16 %v1050
    %v1234 = vunpack.c.l.b16 %v1051
    %v1235 = vunpack.c.h.b16 %v1051
    %v1236 = vunpack.c.l.b16 %v1052
    %v1237 = vunpack.c.h.b16 %v1052
    %v1238 = vunpack.c.l.b16 %v1053
    %v1239 = vunpack.c.h.b16 %v1053
    %v1240 = vunpack.c.l.b16 %v1054
    %v1241 = vunpack.c.h.b16 %v1054
    %v1242 = vunpack.c.l.b16 %v1055
    %v1243 = vunpack.c.h.b16 %v1055
    %v1244 = vunpack.c.l.b16 %v1056
    %v1245 = vunpack.c.h.b16 %v1056
    %v1246 = vunpack.c.l.b16 %v1057
    %v1247 = vunpack.c.h.b16 %v1057
    %v1248 = vunpack.c.l.b16 %v1058
    %v1249 = vunpack.c.h.b16 %v1058
    %v1250 = vunpack.c.l.b16 %v1059
    %v1251 = vunpack.c.h.b16 %v1059
    %v1252 = vunpack.c.l.b16 %v1060
    %v1253 = vunpack.c.h.b16 %v1060
    %v1254 = vunpack.c.l.b16 %v1061
    %v1255 = vunpack.c.h.b16 %v1061
    %v1256 = vunpack.c.l.b16 %v1062
    %v1257 = vunpack.c.h.b16 %v1062
    %v1258 = vunpack.c.l.b16 %v1063
    %v1259 = vunpack.c.h.b16 %v1063
    %v1260 = vunpack.c.l.b16 %v1064
    %v1261 = vunpack.c.h.b16 %v1064
    %v1262 = vunpack.c.l.b16 %v1065
    %v1263 = vunpack.c.h.b16 %v1065
    %v1264 = vunpack.c.l.b16 %v1066
    %v1265 = vunpack.c.h.b16 %v1066
    %v1266 = vunpack.c.l.b16 %v1067
    %v1267 = vunpack.c.h.b16 %v1067
    %v1268 = vunpack.c.l.b16 %v1068
    %v1269 = vunpack.c.h.b16 %v1068
    %v1270 = vunpack.c.l.b16 %v1069
    %v1271 = vunpack.c.h.b16 %v1069
    %v1272 = vunpack.c.l.b16 %v1070
    %v1273 = vunpack.c.h.b16 %v1070
    %v1274 = vunpack.c.l.b16 %v1071
    %v1275 = vunpack.c.h.b16 %v1071
    %v1276 = vunpack.c.l.b16 %v1072
    %v1277 = vunpack.c.h.b16 %v1072
    %v1278 = vunpack.c.l.b16 %v1073
    %v1279 = vunpack.c.h.b16 %v1073
    %v1280 = vunpack.c.l.b16 %v1074
    %v1281 = vunpack.c.h.b16 %v1074
    %v1282 = vunpack.c.l.b16 %v1075
    %v1283 = vunpack.c.h.b16 %v1075
    %v1284 = vunpack.c.l.b16 %v1076
    %v1285 = vunpack.c.h.b16 %v1076
    %v1286 = vunpack.c.l.b16 %v1077
    %v1287 = vunpack.c.h.b16 %v1077
    %v1288 = vunpack.c.l.b16 %v1078
    %v1289 = vunpack.c.h.b16 %v1078
    %v1290 = vunpack.c.l.b16 %v1079
    %v1291 = vunpack.c.h.b16 %v1079
    %v1292 = vunpack.c.l.b16 %v1080
    %v1293 = vunpack.c.h.b16 %v1080
    %v1294 = vunpack.c.l.b16 %v1081
    %v1295 = vunpack.c.h.b16 %v1081
    %v1296 = vunpack.c.l.b16 %v1082
    %v1297 = vunpack.c.h.b16 %v1082
    %v1298 = vunpack.c.l.b16 %v1083
    %v1299 = vunpack.c.h.b16 %v1083
    %v1300 = vunpack.c.l.b16 %v1084
    %v1301 = vunpack.c.h.b16 %v1084
    %v1302 = vunpack.c.l.b16 %v1085
    %v1303 = vunpack.c.h.b16 %v1085
    %v1304 = vunpack.c.l.b16 %v1086
    %v1305 = vunpack.c.h.b16 %v1086
    %v1306 = vunpack.c.l.b16 %v1087
    %v1307 = vunpack.c.h.b16 %v1087
    %v1308 = vunpack.c.l.b16 %v1088
    %v1309 = vunpack.c.h.b16 %v1088
    %v1310 = vunpack.c.l.b16 %v1089
    %v1311 = vunpack.c.h.b16 %v1089
    %v1312 = vunpack.c.l.b16 %v1090
    %v1313 = vunpack.c.h.b16 %v1090
    %v1314 = vunpack.c.l.b16 %v1091
    %v1315 = vunpack.c.h.b16 %v1091
    %v1316 = vunpack.c.l.b16 %v1092
    %v1317 = vunpack.c.h.b16 %v1092
    %v1318 = vunpack.c.l.b16 %v1093
    %v1319 = vunpack.c.h.b16 %v1093
    %v1320 = vunpack.c.l.b16 %v1094
    %v1321 = vunpack.c.h.b16 %v1094
    %v1322 = vunpack.c.l.b16 %v1095
    %v1323 = vunpack.c.h.b16 %v1095
    %v1324 = vunpack.c.l.b16 %v1096
    %v1325 = vunpack.c.h.b16 %v1096
    %v1326 = vunpack.c.l.b16 %v1097
    %v1327 = vunpack.c.h.b16 %v1097
    %v1328 = vpack.c.b16 %v1204, %v1200
    %v1329 = vpack.c.b16 %v1205, %v1201
    %v1330 = vpack.c.b16 %v1206, %v1202
    %v1331 = vpack.c.b16 %v1207, %v1203
    %v1332 = vpack.c.b16 %v1212, %v1208
    %v1333 = vpack.c.b16 %v1213, %v1209
    %v1334 = vpack.c.b16 %v1214, %v1210
    %v1335 = vpack.c.b16 %v1215, %v1211
    %v1336 = vpack.c.b16 %v1220, %v1216
    %v1337 = vpack.c.b16 %v1221, %v1217
    %v1338 = vpack.c.b16 %v1222, %v1218
    %v1339 = vpack.c.b16 %v1223, %v1219
    %v1340 = vpack.c.b16 %v1228, %v1224
    %v1341 = vpack.c.b16 %v1229, %v1225
    %v1342 = vpack.c.b16 %v1230, %v1226
    %v1343 = vpack.c.b16 %v1231, %v1227
    %v1344 = vpack.c.b16 %v1236, %v1232
    %v1345 = vpack.c.b16 %v1237, %v1233
    %v1346 = vpack.c.b16 %v1238, %v1234
    %v1347 = vpack.c.b16 %v1239, %v1235
    %v1348 = vpack.c.b16 %v1244, %v1240
    %v1349 = vpack.c.b16 %v1245, %v1241
    %v1350 = vpack.c.b16 %v1246, %v1242
    %v1351 = vpack.c.b16 %v1247, %v1243
    %v1352 = vpack.c.b16 %v1252, %v1248
    %v1353 = vpack.c.b16 %v1253, %v1249
    %v1354 = vpack.c.b16 %v1254, %v1250
    %v1355 = vpack.c.b16 %v1255, %v1251
    %v1356 = vpack.c.b16 %v1260, %v1256
    %v1357 = vpack.c.b16 %v1261, %v1257
    %v1358 = vpack.c.b16 %v1262, %v1258
    %v1359 = vpack.c.b16 %v1263, %v1259
    %v1360 = vpack.c.b16 %v1268, %v1264
    %v1361 = vpack.c.b16 %v1269, %v1265
    %v1362 = vpack.c.b16 %v1270, %v1266
    %v1363 = vpack.c.b16 %v1271, %v1267
    %v1364 = vpack.c.b16 %v1276, %v1272
    %v1365 = vpack.c.b16 %v1277, %v1273
    %v1366 = vpack.c.b16 %v1278, %v1274
    %v1367 = vpack.c.b16 %v1279, %v1275
    %v1368 = vpack.c.b16 %v1284, %v1280
    %v1369 = vpack.c.b16 %v1285, %v1281
    %v1370 = vpack.c.b16 %v1286, %v1282
    %v1371 = vpack.c.b16 %v1287, %v1283
    %v1372 = vpack.c.b16 %v1292, %v1288
    %v1373 = vpack.c.b16 %v1293, %v1289
    %v1374 = vpack.c.b16 %v1294, %v1290
    %v1375 = vpack.c.b16 %v1295, %v1291
    %v1376 = vpack.c.b16 %v1300, %v1296
    %v1377 = vpack.c.b16 %v1301, %v1297
    %v1378 = vpack.c.b16 %v1302, %v1298
    %v1379 = vpack.c.b16 %v1303, %v1299
    %v1380 = vpack.c.b16 %v1308, %v1304
    %v1381 = vpack.c.b16 %v1309, %v1305
    %v1382 = vpack.c.b16 %v1310, %v1306
    %v1383 = vpack.c.b16 %v1311, %v1307
    %v1384 = vpack.c.b16 %v1316, %v1312
    %v1385 = vpack.c.b16 %v1317, %v1313
    %v1386 = vpack.c.b16 %v1318, %v1314
    %v1387 = vpack.c.b16 %v1319, %v1315
    %v1388 = vpack.c.b16 %v1324, %v1320
    %v1389 = vpack.c.b16 %v1325, %v1321
    %v1390 = vpack.c.b16 %v1326, %v1322
    %v1391 = vpack.c.b16 %v1327, %v1323
    %1456 = vmatprep.subr.bf16.mxu0 %v1329
    %1457 = vmatpush1.bf16.msra.mxu0 %v1328
    %1458 = vmatprep.subr.bf16.mxu0 %v1333
    %1459 = vmatpush1.bf16.msra.mxu0 %v1332
    %1460 = vmatprep.subr.bf16.mxu0 %v1337
    %1461 = vmatpush1.bf16.msra.mxu0 %v1336
    %1462 = vmatprep.subr.bf16.mxu0 %v1341
    %1463 = vmatpush1.bf16.msra.mxu0 %v1340
    %1464 = vmatprep.subr.bf16.mxu0 %v1345
    %1465 = vmatpush1.bf16.msra.mxu0 %v1344
    %1466 = vmatprep.subr.bf16.mxu0 %v1349
    %1467 = vmatpush1.bf16.msra.mxu0 %v1348
    %1468 = vmatprep.subr.bf16.mxu0 %v1353
    %1469 = vmatpush1.bf16.msra.mxu0 %v1352
    %1470 = vmatprep.subr.bf16.mxu0 %v1357
    %1471 = vmatpush1.bf16.msra.mxu0 %v1356
    %1472 = vmatprep.subr.bf16.mxu0 %v1361
    %1473 = vmatpush1.bf16.msra.mxu0 %v1360
    %1474 = vmatprep.subr.bf16.mxu0 %v1365
    %1475 = vmatpush1.bf16.msra.mxu0 %v1364
    %1476 = vmatprep.subr.bf16.mxu0 %v1369
    %1477 = vmatpush1.bf16.msra.mxu0 %v1368
    %1478 = vmatprep.subr.bf16.mxu0 %v1373
    %1479 = vmatpush1.bf16.msra.mxu0 %v1372
    %1480 = vmatprep.subr.bf16.mxu0 %v1377
    %1481 = vmatpush1.bf16.msra.mxu0 %v1376
    %1482 = vmatprep.subr.bf16.mxu0 %v1381
    %1483 = vmatpush1.bf16.msra.mxu0 %v1380
    %1484 = vmatprep.subr.bf16.mxu0 %v1385
    %1485 = vmatpush1.bf16.msra.mxu0 %v1384
    %1486 = vmatprep.subr.bf16.mxu0 %v1389
    %1487 = vmatpush1.bf16.msra.mxu0 %v1388
    %1488 = vmatprep.mubr.bf16.mxu0 %v1100
    %1489 = vmatmul.mubr.bf16.gmra.mrb[0].mxu0 %v1099
    %v1490 = vpop.f32.mrb[0].mxu0
    %v1491 = vadd.f32 %v1119, %v1490
    %v1492 = vpop.f32.mrb[0].mxu0
    %v1493 = vadd.f32 %v1123, %v1492
    %v1494 = vpop.f32.mrb[0].mxu0
    %v1495 = vadd.f32 %v1119, %v1494
    %v1496 = vpop.f32.mrb[0].mxu0
    %v1497 = vadd.f32 %v1123, %v1496
    %1498 = vmatprep.mubr.bf16.mxu0 %v1102
    %1499 = vmatmul.mubr.bf16.gmra.mrb[0].mxu0 %v1101
    %v1500 = vpop.f32.mrb[0].mxu0
    %v1501 = vadd.f32 %v1119, %v1500
    %v1502 = vpop.f32.mrb[0].mxu0
    %v1503 = vadd.f32 %v1123, %v1502
    %v1504 = vpop.f32.mrb[0].mxu0
    %v1505 = vadd.f32 %v1119, %v1504
    %v1506 = vpop.f32.mrb[0].mxu0
    %v1507 = vadd.f32 %v1123, %v1506
    %1508 = vmatprep.mubr.bf16.mxu0 %v1104
    %1509 = vmatmul.mubr.bf16.gmra.mrb[0].mxu0 %v1103
    %v1510 = vpop.f32.mrb[0].mxu0
    %v1511 = vadd.f32 %v1119, %v1510
    %v1512 = vpop.f32.mrb[0].mxu0
    %v1513 = vadd.f32 %v1123, %v1512
    %v1514 = vpop.f32.mrb[0].mxu0
    %v1515 = vadd.f32 %v1119, %v1514
    %v1516 = vpop.f32.mrb[0].mxu0
    %v1517 = vadd.f32 %v1123, %v1516
    %1518 = vmatprep.mubr.bf16.mxu0 %v1106
    %1519 = vmatmul.mubr.bf16.gmra.mrb[0].mxu0 %v1105
    %v1520 = vpop.f32.mrb[0].mxu0
    %v1521 = vadd.f32 %v1119, %v1520
    %v1522 = vpop.f32.mrb[0].mxu0
    %v1523 = vadd.f32 %v1123, %v1522
    %v1524 = vpop.f32.mrb[0].mxu0
    %v1525 = vadd.f32 %v1119, %v1524
    %v1526 = vpop.f32.mrb[0].mxu0
    %v1527 = vadd.f32 %v1123, %v1526
    %1528 = vmatprep.mubr.bf16.mxu0 %v1108
    %1529 = vmatmul.mubr.bf16.gmra.mrb[0].mxu0 %v1107
    %v1530 = vpop.f32.mrb[0].mxu0
    %v1531 = vadd.f32 %v1119, %v1530
    %v1532 = vpop.f32.mrb[0].mxu0
    %v1533 = vadd.f32 %v1123, %v1532
    %v1534 = vpop.f32.mrb[0].mxu0
    %v1535 = vadd.f32 %v1119, %v1534
    %v1536 = vpop.f32.mrb[0].mxu0
    %v1537 = vadd.f32 %v1123, %v1536
    %1538 = vmatprep.mubr.bf16.mxu0 %v1110
    %1539 = vmatmul.mubr.bf16.gmra.mrb[0].mxu0 %v1109
    %v1540 = vpop.f32.mrb[0].mxu0
    %v1541 = vadd.f32 %v1119, %v1540
    %v1542 = vpop.f32.mrb[0].mxu0
    %v1543 = vadd.f32 %v1123, %v1542
    %v1544 = vpop.f32.mrb[0].mxu0
    %v1545 = vadd.f32 %v1119, %v1544
    %v1546 = vpop.f32.mrb[0].mxu0
    %v1547 = vadd.f32 %v1123, %v1546
    %1548 = vmatprep.mubr.bf16.mxu0 %v1112
    %1549 = vmatmul.mubr.bf16.gmra.mrb[0].mxu0 %v1111
    %v1550 = vpop.f32.mrb[0].mxu0
    %v1551 = vadd.f32 %v1119, %v1550
    %v1552 = vpop.f32.mrb[0].mxu0
    %v1553 = vadd.f32 %v1123, %v1552
    %v1554 = vpop.f32.mrb[0].mxu0
    %v1555 = vadd.f32 %v1119, %v1554
    %v1556 = vpop.f32.mrb[0].mxu0
    %v1557 = vadd.f32 %v1123, %v1556
    %1558 = vmatprep.mubr.bf16.mxu0 %v1114
    %1559 = vmatmul.mubr.bf16.gmra.mrb[0].mxu0 %v1113
    %v1560 = vpop.f32.mrb[0].mxu0
    %v1561 = vadd.f32 %v1119, %v1560
    %v1562 = vpop.f32.mrb[0].mxu0
    %v1563 = vadd.f32 %v1123, %v1562
    %v1564 = vpop.f32.mrb[0].mxu0
    %v1565 = vadd.f32 %v1119, %v1564
    %v1566 = vpop.f32.mrb[0].mxu0
    %v1567 = vadd.f32 %v1123, %v1566
    %1568 = vdwg.mxu0
    %1569 = vmatprep.subr.bf16.mxu0 %v1331
    %1570 = vmatpush1.bf16.msra.mxu0 %v1330
    %1571 = vmatprep.subr.bf16.mxu0 %v1335
    %1572 = vmatpush1.bf16.msra.mxu0 %v1334
    %1573 = vmatprep.subr.bf16.mxu0 %v1339
    %1574 = vmatpush1.bf16.msra.mxu0 %v1338
    %1575 = vmatprep.subr.bf16.mxu0 %v1343
    %1576 = vmatpush1.bf16.msra.mxu0 %v1342
    %1577 = vmatprep.subr.bf16.mxu0 %v1347
    %1578 = vmatpush1.bf16.msra.mxu0 %v1346
    %1579 = vmatprep.subr.bf16.mxu0 %v1351
    %1580 = vmatpush1.bf16.msra.mxu0 %v1350
    %1581 = vmatprep.subr.bf16.mxu0 %v1355
    %1582 = vmatpush1.bf16.msra.mxu0 %v1354
    %1583 = vmatprep.subr.bf16.mxu0 %v1359
    %1584 = vmatpush1.bf16.msra.mxu0 %v1358
    %1585 = vmatprep.subr.bf16.mxu0 %v1363
    %1586 = vmatpush1.bf16.msra.mxu0 %v1362
    %1587 = vmatprep.subr.bf16.mxu0 %v1367
    %1588 = vmatpush1.bf16.msra.mxu0 %v1366
    %1589 = vmatprep.subr.bf16.mxu0 %v1371
    %1590 = vmatpush1.bf16.msra.mxu0 %v1370
    %1591 = vmatprep.subr.bf16.mxu0 %v1375
    %1592 = vmatpush1.bf16.msra.mxu0 %v1374
    %1593 = vmatprep.subr.bf16.mxu0 %v1379
    %1594 = vmatpush1.bf16.msra.mxu0 %v1378
    %1595 = vmatprep.subr.bf16.mxu0 %v1383
    %1596 = vmatpush1.bf16.msra.mxu0 %v1382
    %1597 = vmatprep.subr.bf16.mxu0 %v1387
    %1598 = vmatpush1.bf16.msra.mxu0 %v1386
    %1599 = vmatprep.subr.bf16.mxu0 %v1391
    %1600 = vmatpush1.bf16.msra.mxu0 %v1390
    %1601 = vmatprep.mubr.bf16.mxu0 %v1100
    %1602 = vmatmul.mubr.bf16.gmra.mrb[0].mxu0 %v1099
    %v1603 = vpop.f32.mrb[0].mxu0
    %v1604 = vadd.f32 %v1127, %v1603
    %v1605 = vpop.f32.mrb[0].mxu0
    %v1606 = vadd.f32 %v1131, %v1605
    %v1607 = vpop.f32.mrb[0].mxu0
    %v1608 = vadd.f32 %v1127, %v1607
    %v1609 = vpop.f32.mrb[0].mxu0
    %v1610 = vadd.f32 %v1131, %v1609
    %1611 = vmatprep.mubr.bf16.mxu0 %v1102
    %1612 = vmatmul.mubr.bf16.gmra.mrb[0].mxu0 %v1101
    %v1613 = vpop.f32.mrb[0].mxu0
    %v1614 = vadd.f32 %v1127, %v1613
    %v1615 = vpop.f32.mrb[0].mxu0
    %v1616 = vadd.f32 %v1131, %v1615
    %v1617 = vpop.f32.mrb[0].mxu0
    %v1618 = vadd.f32 %v1127, %v1617
    %v1619 = vpop.f32.mrb[0].mxu0
    %v1620 = vadd.f32 %v1131, %v1619
    %1621 = vmatprep.mubr.bf16.mxu0 %v1104
    %1622 = vmatmul.mubr.bf16.gmra.mrb[0].mxu0 %v1103
    %v1623 = vpop.f32.mrb[0].mxu0
    %v1624 = vadd.f32 %v1127, %v1623
    %v1625 = vpop.f32.mrb[0].mxu0
    %v1626 = vadd.f32 %v1131, %v1625
    %v1627 = vpop.f32.mrb[0].mxu0
    %v1628 = vadd.f32 %v1127, %v1627
    %v1629 = vpop.f32.mrb[0].mxu0
    %v1630 = vadd.f32 %v1131, %v1629
    %1631 = vmatprep.mubr.bf16.mxu0 %v1106
    %1632 = vmatmul.mubr.bf16.gmra.mrb[0].mxu0 %v1105
    %v1633 = vpop.f32.mrb[0].mxu0
    %v1634 = vadd.f32 %v1127, %v1633
    %v1635 = vpop.f32.mrb[0].mxu0
    %v1636 = vadd.f32 %v1131, %v1635
    %v1637 = vpop.f32.mrb[0].mxu0
    %v1638 = vadd.f32 %v1127, %v1637
    %v1639 = vpop.f32.mrb[0].mxu0
    %v1640 = vadd.f32 %v1131, %v1639
    %1641 = vmatprep.mubr.bf16.mxu0 %v1108
    %1642 = vmatmul.mubr.bf16.gmra.mrb[0].mxu0 %v1107
    %v1643 = vpop.f32.mrb[0].mxu0
    %v1644 = vadd.f32 %v1127, %v1643
    %v1645 = vpop.f32.mrb[0].mxu0
    %v1646 = vadd.f32 %v1131, %v1645
    %v1647 = vpop.f32.mrb[0].mxu0
    %v1648 = vadd.f32 %v1127, %v1647
    %v1649 = vpop.f32.mrb[0].mxu0
    %v1650 = vadd.f32 %v1131, %v1649
    %1651 = vmatprep.mubr.bf16.mxu0 %v1110
    %1652 = vmatmul.mubr.bf16.gmra.mrb[0].mxu0 %v1109
    %v1653 = vpop.f32.mrb[0].mxu0
    %v1654 = vadd.f32 %v1127, %v1653
    %v1655 = vpop.f32.mrb[0].mxu0
    %v1656 = vadd.f32 %v1131, %v1655
    %v1657 = vpop.f32.mrb[0].mxu0
    %v1658 = vadd.f32 %v1127, %v1657
    %v1659 = vpop.f32.mrb[0].mxu0
    %v1660 = vadd.f32 %v1131, %v1659
    %1661 = vmatprep.mubr.bf16.mxu0 %v1112
    %1662 = vmatmul.mubr.bf16.gmra.mrb[0].mxu0 %v1111
    %v1663 = vpop.f32.mrb[0].mxu0
    %v1664 = vadd.f32 %v1127, %v1663
    %v1665 = vpop.f32.mrb[0].mxu0
    %v1666 = vadd.f32 %v1131, %v1665
    %v1667 = vpop.f32.mrb[0].mxu0
    %v1668 = vadd.f32 %v1127, %v1667
    %v1669 = vpop.f32.mrb[0].mxu0
    %v1670 = vadd.f32 %v1131, %v1669
    %1671 = vmatprep.mubr.bf16.mxu0 %v1114
    %1672 = vmatmul.mubr.bf16.gmra.mrb[0].mxu0 %v1113
    %v1673 = vpop.f32.mrb[0].mxu0
    %v1674 = vadd.f32 %v1127, %v1673
    %v1675 = vpop.f32.mrb[0].mxu0
    %v1676 = vadd.f32 %v1131, %v1675
    %v1677 = vpop.f32.mrb[0].mxu0
    %v1678 = vadd.f32 %v1127, %v1677
    %v1679 = vpop.f32.mrb[0].mxu0
    %v1680 = vadd.f32 %v1131, %v1679
    %1681 = vdwg.mxu0
    %v1682 = vmax.f32 %v1491, 0.0
    %v1683 = vmax.f32 %v1493, 0.0
    %v1684 = vmax.f32 %v1604, 0.0
    %v1685 = vmax.f32 %v1606, 0.0
    %v1686 = vmax.f32 %v1495, 0.0
    %v1687 = vmax.f32 %v1497, 0.0
    %v1688 = vmax.f32 %v1608, 0.0
    %v1689 = vmax.f32 %v1610, 0.0
    %v1690 = vmax.f32 %v1501, 0.0
    %v1691 = vmax.f32 %v1503, 0.0
    %v1692 = vmax.f32 %v1614, 0.0
    %v1693 = vmax.f32 %v1616, 0.0
    %v1694 = vmax.f32 %v1505, 0.0
    %v1695 = vmax.f32 %v1507, 0.0
    %v1696 = vmax.f32 %v1618, 0.0
    %v1697 = vmax.f32 %v1620, 0.0
    %v1698 = vmax.f32 %v1511, 0.0
    %v1699 = vmax.f32 %v1513, 0.0
    %v1700 = vmax.f32 %v1624, 0.0
    %v1701 = vmax.f32 %v1626, 0.0
    %v1702 = vmax.f32 %v1515, 0.0
    %v1703 = vmax.f32 %v1517, 0.0
    %v1704 = vmax.f32 %v1628, 0.0
    %v1705 = vmax.f32 %v1630, 0.0
    %v1706 = vmax.f32 %v1521, 0.0
    %v1707 = vmax.f32 %v1523, 0.0
    %v1708 = vmax.f32 %v1634, 0.0
    %v1709 = vmax.f32 %v1636, 0.0
    %v1710 = vmax.f32 %v1525, 0.0
    %v1711 = vmax.f32 %v1527, 0.0
    %v1712 = vmax.f32 %v1638, 0.0
    %v1713 = vmax.f32 %v1640, 0.0
    %v1714 = vmax.f32 %v1531, 0.0
    %v1715 = vmax.f32 %v1533, 0.0
    %v1716 = vmax.f32 %v1644, 0.0
    %v1717 = vmax.f32 %v1646, 0.0
    %v1718 = vmax.f32 %v1535, 0.0
    %v1719 = vmax.f32 %v1537, 0.0
    %v1720 = vmax.f32 %v1648, 0.0
    %v1721 = vmax.f32 %v1650, 0.0
    %v1722 = vmax.f32 %v1541, 0.0
    %v1723 = vmax.f32 %v1543, 0.0
    %v1724 = vmax.f32 %v1654, 0.0
    %v1725 = vmax.f32 %v1656, 0.0
    %v1726 = vmax.f32 %v1545, 0.0
    %v1727 = vmax.f32 %v1547, 0.0
    %v1728 = vmax.f32 %v1658, 0.0
    %v1729 = vmax.f32 %v1660, 0.0
    %v1730 = vmax.f32 %v1551, 0.0
    %v1731 = vmax.f32 %v1553, 0.0
    %v1732 = vmax.f32 %v1664, 0.0
    %v1733 = vmax.f32 %v1666, 0.0
    %v1734 = vmax.f32 %v1555, 0.0
    %v1735 = vmax.f32 %v1557, 0.0
    %v1736 = vmax.f32 %v1668, 0.0
    %v1737 = vmax.f32 %v1670, 0.0
    %v1738 = vmax.f32 %v1561, 0.0
    %v1739 = vmax.f32 %v1563, 0.0
    %v1740 = vmax.f32 %v1674, 0.0
    %v1741 = vmax.f32 %v1676, 0.0
    %v1742 = vmax.f32 %v1565, 0.0
    %v1743 = vmax.f32 %v1567, 0.0
    %v1744 = vmax.f32 %v1678, 0.0
    %v1745 = vmax.f32 %v1680, 0.0
    %1747 = vset.pattern.permute.xlu0 0
    %1748 = vperm.xlu0 %1747, %v388
    %v1749 = vpop.permute.xlu0 %1748
    %1752 = vset.pattern.permute.xlu0 0
    %1753 = vperm.xlu0 %1752, %v389
    %v1754 = vpop.permute.xlu0 %1753
    %1757 = vset.pattern.permute.xlu0 0
    %1758 = vperm.xlu0 %1757, %v390
    %v1759 = vpop.permute.xlu0 %1758
    %1762 = vset.pattern.permute.xlu0 0
    %1763 = vperm.xlu0 %1762, %v391
    %v1764 = vpop.permute.xlu0 %1763
    %1767 = vset.pattern.permute.xlu0 0
    %1768 = vperm.xlu0 %1767, %v392
    %v1769 = vpop.permute.xlu0 %1768
    %1772 = vset.pattern.permute.xlu0 0
    %1773 = vperm.xlu0 %1772, %v393
    %v1774 = vpop.permute.xlu0 %1773
    %1777 = vset.pattern.permute.xlu0 0
    %1778 = vperm.xlu0 %1777, %v394
    %v1779 = vpop.permute.xlu0 %1778
    %1782 = vset.pattern.permute.xlu0 0
    %1783 = vperm.xlu0 %1782, %v395
    %v1784 = vpop.permute.xlu0 %1783
    %1787 = vset.pattern.permute.xlu0 0
    %1788 = vperm.xlu0 %1787, %v396
    %v1789 = vpop.permute.xlu0 %1788
    %1792 = vset.pattern.permute.xlu0 0
    %1793 = vperm.xlu0 %1792, %v397
    %v1794 = vpop.permute.xlu0 %1793
    %1797 = vset.pattern.permute.xlu0 0
    %1798 = vperm.xlu0 %1797, %v398
    %v1799 = vpop.permute.xlu0 %1798
    %1802 = vset.pattern.permute.xlu0 0
    %1803 = vperm.xlu0 %1802, %v399
    %v1804 = vpop.permute.xlu0 %1803
    %1807 = vset.pattern.permute.xlu0 0
    %1808 = vperm.xlu0 %1807, %v400
    %v1809 = vpop.permute.xlu0 %1808
    %1812 = vset.pattern.permute.xlu0 0
    %1813 = vperm.xlu0 %1812, %v401
    %v1814 = vpop.permute.xlu0 %1813
    %1817 = vset.pattern.permute.xlu0 0
    %1818 = vperm.xlu0 %1817, %v402
    %v1819 = vpop.permute.xlu0 %1818
    %1822 = vset.pattern.permute.xlu0 0
    %1823 = vperm.xlu0 %1822, %v403
    %v1824 = vpop.permute.xlu0 %1823
    %v1826 = vmul.f32 %v1682, %v1749
    %v1827 = vmul.f32 %v1686, %v1754
    %v1828 = vmul.f32 %v1690, %v1759
    %v1829 = vmul.f32 %v1694, %v1764
    %v1830 = vmul.f32 %v1698, %v1769
    %v1831 = vmul.f32 %v1702, %v1774
    %v1832 = vmul.f32 %v1706, %v1779
    %v1833 = vmul.f32 %v1710, %v1784
    %v1834 = vmul.f32 %v1714, %v1789
    %v1835 = vmul.f32 %v1718, %v1794
    %v1836 = vmul.f32 %v1722, %v1799
    %v1837 = vmul.f32 %v1726, %v1804
    %v1838 = vmul.f32 %v1730, %v1809
    %v1839 = vmul.f32 %v1734, %v1814
    %v1840 = vmul.f32 %v1738, %v1819
    %v1841 = vmul.f32 %v1742, %v1824
    %v1842 = vadd.f32 %v1826, 0.0
    %v1843 = vadd.f32 %v1827, 0.0
    %v1844 = vadd.f32 %v1828, 0.0
    %v1845 = vadd.f32 %v1829, 0.0
    %v1846 = vadd.f32 %v1830, 0.0
    %v1847 = vadd.f32 %v1831, 0.0
    %v1848 = vadd.f32 %v1832, 0.0
    %v1849 = vadd.f32 %v1833, 0.0
    %v1850 = vadd.f32 %v1834, 0.0
    %v1851 = vadd.f32 %v1835, 0.0
    %v1852 = vadd.f32 %v1836, 0.0
    %v1853 = vadd.f32 %v1837, 0.0
    %v1854 = vadd.f32 %v1838, 0.0
    %v1855 = vadd.f32 %v1839, 0.0
    %v1856 = vadd.f32 %v1840, 0.0
    %v1857 = vadd.f32 %v1841, 0.0
    %1858 = vset.pattern.permute.xlu0 1
    %1859 = vperm.xlu0 %1858, %v388
    %v1860 = vpop.permute.xlu0 %1859
    %1862 = vset.pattern.permute.xlu0 1
    %1863 = vperm.xlu0 %1862, %v389
    %v1864 = vpop.permute.xlu0 %1863
    %1866 = vset.pattern.permute.xlu0 1
    %1867 = vperm.xlu0 %1866, %v390
    %v1868 = vpop.permute.xlu0 %1867
    %1870 = vset.pattern.permute.xlu0 1
    %1871 = vperm.xlu0 %1870, %v391
    %v1872 = vpop.permute.xlu0 %1871
    %1874 = vset.pattern.permute.xlu0 1
    %1875 = vperm.xlu0 %1874, %v392
    %v1876 = vpop.permute.xlu0 %1875
    %1878 = vset.pattern.permute.xlu0 1
    %1879 = vperm.xlu0 %1878, %v393
    %v1880 = vpop.permute.xlu0 %1879
    %1882 = vset.pattern.permute.xlu0 1
    %1883 = vperm.xlu0 %1882, %v394
    %v1884 = vpop.permute.xlu0 %1883
    %1886 = vset.pattern.permute.xlu0 1
    %1887 = vperm.xlu0 %1886, %v395
    %v1888 = vpop.permute.xlu0 %1887
    %1890 = vset.pattern.permute.xlu0 1
    %1891 = vperm.xlu0 %1890, %v396
    %v1892 = vpop.permute.xlu0 %1891
    %1894 = vset.pattern.permute.xlu0 1
    %1895 = vperm.xlu0 %1894, %v397
    %v1896 = vpop.permute.xlu0 %1895
    %1898 = vset.pattern.permute.xlu0 1
    %1899 = vperm.xlu0 %1898, %v398
    %v1900 = vpop.permute.xlu0 %1899
    %1902 = vset.pattern.permute.xlu0 1
    %1903 = vperm.xlu0 %1902, %v399
    %v1904 = vpop.permute.xlu0 %1903
    %1906 = vset.pattern.permute.xlu0 1
    %1907 = vperm.xlu0 %1906, %v400
    %v1908 = vpop.permute.xlu0 %1907
    %1910 = vset.pattern.permute.xlu0 1
    %1911 = vperm.xlu0 %1910, %v401
    %v1912 = vpop.permute.xlu0 %1911
    %1914 = vset.pattern.permute.xlu0 1
    %1915 = vperm.xlu0 %1914, %v402
    %v1916 = vpop.permute.xlu0 %1915
    %1918 = vset.pattern.permute.xlu0 1
    %1919 = vperm.xlu0 %1918, %v403
    %v1920 = vpop.permute.xlu0 %1919
    %v1922 = vmul.f32 %v1682, %v1860
    %v1923 = vmul.f32 %v1686, %v1864
    %v1924 = vmul.f32 %v1690, %v1868
    %v1925 = vmul.f32 %v1694, %v1872
    %v1926 = vmul.f32 %v1698, %v1876
    %v1927 = vmul.f32 %v1702, %v1880
    %v1928 = vmul.f32 %v1706, %v1884
    %v1929 = vmul.f32 %v1710, %v1888
    %v1930 = vmul.f32 %v1714, %v1892
    %v1931 = vmul.f32 %v1718, %v1896
    %v1932 = vmul.f32 %v1722, %v1900
    %v1933 = vmul.f32 %v1726, %v1904
    %v1934 = vmul.f32 %v1730, %v1908
    %v1935 = vmul.f32 %v1734, %v1912
    %v1936 = vmul.f32 %v1738, %v1916
    %v1937 = vmul.f32 %v1742, %v1920
    %1954 = vrot.lane.b32.xlu0 %v1922, 96
    %v1955 = vpop.permute.xlu0 %1954
    %1956 = vrot.lane.b32.xlu0 %v1923, 96
    %v1957 = vpop.permute.xlu0 %1956
    %1958 = vrot.lane.b32.xlu0 %v1924, 96
    %v1959 = vpop.permute.xlu0 %1958
    %1960 = vrot.lane.b32.xlu0 %v1925, 96
    %v1961 = vpop.permute.xlu0 %1960
    %1962 = vrot.lane.b32.xlu0 %v1926, 96
    %v1963 = vpop.permute.xlu0 %1962
    %1964 = vrot.lane.b32.xlu0 %v1927, 96
    %v1965 = vpop.permute.xlu0 %1964
    %1966 = vrot.lane.b32.xlu0 %v1928, 96
    %v1967 = vpop.permute.xlu0 %1966
    %1968 = vrot.lane.b32.xlu0 %v1929, 96
    %v1969 = vpop.permute.xlu0 %1968
    %1970 = vrot.lane.b32.xlu0 %v1930, 96
    %v1971 = vpop.permute.xlu0 %1970
    %1972 = vrot.lane.b32.xlu0 %v1931, 96
    %v1973 = vpop.permute.xlu0 %1972
    %1974 = vrot.lane.b32.xlu0 %v1932, 96
    %v1975 = vpop.permute.xlu0 %1974
    %1976 = vrot.lane.b32.xlu0 %v1933, 96
    %v1977 = vpop.permute.xlu0 %1976
    %1978 = vrot.lane.b32.xlu0 %v1934, 96
    %v1979 = vpop.permute.xlu0 %1978
    %1980 = vrot.lane.b32.xlu0 %v1935, 96
    %v1981 = vpop.permute.xlu0 %1980
    %1982 = vrot.lane.b32.xlu0 %v1936, 96
    %v1983 = vpop.permute.xlu0 %1982
    %1984 = vrot.lane.b32.xlu0 %v1937, 96
    %v1985 = vpop.permute.xlu0 %1984
    %v2002 = vadd.f32 %v1842, %v1955
    %v2003 = vadd.f32 %v1843, %v1957
    %v2004 = vadd.f32 %v1844, %v1959
    %v2005 = vadd.f32 %v1845, %v1961
    %v2006 = vadd.f32 %v1846, %v1963
    %v2007 = vadd.f32 %v1847, %v1965
    %v2008 = vadd.f32 %v1848, %v1967
    %v2009 = vadd.f32 %v1849, %v1969
    %v2010 = vadd.f32 %v1850, %v1971
    %v2011 = vadd.f32 %v1851, %v1973
    %v2012 = vadd.f32 %v1852, %v1975
    %v2013 = vadd.f32 %v1853, %v1977
    %v2014 = vadd.f32 %v1854, %v1979
    %v2015 = vadd.f32 %v1855, %v1981
    %v2016 = vadd.f32 %v1856, %v1983
    %v2017 = vadd.f32 %v1857, %v1985
    %2018 = vset.pattern.permute.xlu0 2
    %2019 = vperm.xlu0 %2018, %v388
    %v2020 = vpop.permute.xlu0 %2019
    %2022 = vset.pattern.permute.xlu0 2
    %2023 = vperm.xlu0 %2022, %v389
    %v2024 = vpop.permute.xlu0 %2023
    %2026 = vset.pattern.permute.xlu0 2
    %2027 = vperm.xlu0 %2026, %v390
    %v2028 = vpop.permute.xlu0 %2027
    %2030 = vset.pattern.permute.xlu0 2
    %2031 = vperm.xlu0 %2030, %v391
    %v2032 = vpop.permute.xlu0 %2031
    %2034 = vset.pattern.permute.xlu0 2
    %2035 = vperm.xlu0 %2034, %v392
    %v2036 = vpop.permute.xlu0 %2035
    %2038 = vset.pattern.permute.xlu0 2
    %2039 = vperm.xlu0 %2038, %v393
    %v2040 = vpop.permute.xlu0 %2039
    %2042 = vset.pattern.permute.xlu0 2
    %2043 = vperm.xlu0 %2042, %v394
    %v2044 = vpop.permute.xlu0 %2043
    %2046 = vset.pattern.permute.xlu0 2
    %2047 = vperm.xlu0 %2046, %v395
    %v2048 = vpop.permute.xlu0 %2047
    %2050 = vset.pattern.permute.xlu0 2
    %2051 = vperm.xlu0 %2050, %v396
    %v2052 = vpop.permute.xlu0 %2051
    %2054 = vset.pattern.permute.xlu0 2
    %2055 = vperm.xlu0 %2054, %v397
    %v2056 = vpop.permute.xlu0 %2055
    %2058 = vset.pattern.permute.xlu0 2
    %2059 = vperm.xlu0 %2058, %v398
    %v2060 = vpop.permute.xlu0 %2059
    %2062 = vset.pattern.permute.xlu0 2
    %2063 = vperm.xlu0 %2062, %v399
    %v2064 = vpop.permute.xlu0 %2063
    %2066 = vset.pattern.permute.xlu0 2
    %2067 = vperm.xlu0 %2066, %v400
    %v2068 = vpop.permute.xlu0 %2067
    %2070 = vset.pattern.permute.xlu0 2
    %2071 = vperm.xlu0 %2070, %v401
    %v2072 = vpop.permute.xlu0 %2071
    %2074 = vset.pattern.permute.xlu0 2
    %2075 = vperm.xlu0 %2074, %v402
    %v2076 = vpop.permute.xlu0 %2075
    %2078 = vset.pattern.permute.xlu0 2
    %2079 = vperm.xlu0 %2078, %v403
    %v2080 = vpop.permute.xlu0 %2079
    %v2082 = vmul.f32 %v1682, %v2020
    %v2083 = vmul.f32 %v1686, %v2024
    %v2084 = vmul.f32 %v1690, %v2028
    %v2085 = vmul.f32 %v1694, %v2032
    %v2086 = vmul.f32 %v1698, %v2036
    %v2087 = vmul.f32 %v1702, %v2040
    %v2088 = vmul.f32 %v1706, %v2044
    %v2089 = vmul.f32 %v1710, %v2048
    %v2090 = vmul.f32 %v1714, %v2052
    %v2091 = vmul.f32 %v1718, %v2056
    %v2092 = vmul.f32 %v1722, %v2060
    %v2093 = vmul.f32 %v1726, %v2064
    %v2094 = vmul.f32 %v1730, %v2068
    %v2095 = vmul.f32 %v1734, %v2072
    %v2096 = vmul.f32 %v1738, %v2076
    %v2097 = vmul.f32 %v1742, %v2080
    %2114 = vrot.lane.b32.xlu0 %v2082, 64
    %v2115 = vpop.permute.xlu0 %2114
    %2116 = vrot.lane.b32.xlu0 %v2083, 64
    %v2117 = vpop.permute.xlu0 %2116
    %2118 = vrot.lane.b32.xlu0 %v2084, 64
    %v2119 = vpop.permute.xlu0 %2118
    %2120 = vrot.lane.b32.xlu0 %v2085, 64
    %v2121 = vpop.permute.xlu0 %2120
    %2122 = vrot.lane.b32.xlu0 %v2086, 64
    %v2123 = vpop.permute.xlu0 %2122
    %2124 = vrot.lane.b32.xlu0 %v2087, 64
    %v2125 = vpop.permute.xlu0 %2124
    %2126 = vrot.lane.b32.xlu0 %v2088, 64
    %v2127 = vpop.permute.xlu0 %2126
    %2128 = vrot.lane.b32.xlu0 %v2089, 64
    %v2129 = vpop.permute.xlu0 %2128
    %2130 = vrot.lane.b32.xlu0 %v2090, 64
    %v2131 = vpop.permute.xlu0 %2130
    %2132 = vrot.lane.b32.xlu0 %v2091, 64
    %v2133 = vpop.permute.xlu0 %2132
    %2134 = vrot.lane.b32.xlu0 %v2092, 64
    %v2135 = vpop.permute.xlu0 %2134
    %2136 = vrot.lane.b32.xlu0 %v2093, 64
    %v2137 = vpop.permute.xlu0 %2136
    %2138 = vrot.lane.b32.xlu0 %v2094, 64
    %v2139 = vpop.permute.xlu0 %2138
    %2140 = vrot.lane.b32.xlu0 %v2095, 64
    %v2141 = vpop.permute.xlu0 %2140
    %2142 = vrot.lane.b32.xlu0 %v2096, 64
    %v2143 = vpop.permute.xlu0 %2142
    %2144 = vrot.lane.b32.xlu0 %v2097, 64
    %v2145 = vpop.permute.xlu0 %2144
    %v2162 = vadd.f32 %v2002, %v2115
    %v2163 = vadd.f32 %v2003, %v2117
    %v2164 = vadd.f32 %v2004, %v2119
    %v2165 = vadd.f32 %v2005, %v2121
    %v2166 = vadd.f32 %v2006, %v2123
    %v2167 = vadd.f32 %v2007, %v2125
    %v2168 = vadd.f32 %v2008, %v2127
    %v2169 = vadd.f32 %v2009, %v2129
    %v2170 = vadd.f32 %v2010, %v2131
    %v2171 = vadd.f32 %v2011, %v2133
    %v2172 = vadd.f32 %v2012, %v2135
    %v2173 = vadd.f32 %v2013, %v2137
    %v2174 = vadd.f32 %v2014, %v2139
    %v2175 = vadd.f32 %v2015, %v2141
    %v2176 = vadd.f32 %v2016, %v2143
    %v2177 = vadd.f32 %v2017, %v2145
    %2178 = vset.pattern.permute.xlu0 3
    %2179 = vperm.xlu0 %2178, %v388
    %v2180 = vpop.permute.xlu0 %2179
    %2182 = vset.pattern.permute.xlu0 3
    %2183 = vperm.xlu0 %2182, %v389
    %v2184 = vpop.permute.xlu0 %2183
    %2186 = vset.pattern.permute.xlu0 3
    %2187 = vperm.xlu0 %2186, %v390
    %v2188 = vpop.permute.xlu0 %2187
    %2190 = vset.pattern.permute.xlu0 3
    %2191 = vperm.xlu0 %2190, %v391
    %v2192 = vpop.permute.xlu0 %2191
    %2194 = vset.pattern.permute.xlu0 3
    %2195 = vperm.xlu0 %2194, %v392
    %v2196 = vpop.permute.xlu0 %2195
    %2198 = vset.pattern.permute.xlu0 3
    %2199 = vperm.xlu0 %2198, %v393
    %v2200 = vpop.permute.xlu0 %2199
    %2202 = vset.pattern.permute.xlu0 3
    %2203 = vperm.xlu0 %2202, %v394
    %v2204 = vpop.permute.xlu0 %2203
    %2206 = vset.pattern.permute.xlu0 3
    %2207 = vperm.xlu0 %2206, %v395
    %v2208 = vpop.permute.xlu0 %2207
    %2210 = vset.pattern.permute.xlu0 3
    %2211 = vperm.xlu0 %2210, %v396
    %v2212 = vpop.permute.xlu0 %2211
    %2214 = vset.pattern.permute.xlu0 3
    %2215 = vperm.xlu0 %2214, %v397
    %v2216 = vpop.permute.xlu0 %2215
    %2218 = vset.pattern.permute.xlu0 3
    %2219 = vperm.xlu0 %2218, %v398
    %v2220 = vpop.permute.xlu0 %2219
    %2222 = vset.pattern.permute.xlu0 3
    %2223 = vperm.xlu0 %2222, %v399
    %v2224 = vpop.permute.xlu0 %2223
    %2226 = vset.pattern.permute.xlu0 3
    %2227 = vperm.xlu0 %2226, %v400
    %v2228 = vpop.permute.xlu0 %2227
    %2230 = vset.pattern.permute.xlu0 3
    %2231 = vperm.xlu0 %2230, %v401
    %v2232 = vpop.permute.xlu0 %2231
    %2234 = vset.pattern.permute.xlu0 3
    %2235 = vperm.xlu0 %2234, %v402
    %v2236 = vpop.permute.xlu0 %2235
    %2238 = vset.pattern.permute.xlu0 3
    %2239 = vperm.xlu0 %2238, %v403
    %v2240 = vpop.permute.xlu0 %2239
    %v2242 = vmul.f32 %v1682, %v2180
    %v2243 = vmul.f32 %v1686, %v2184
    %v2244 = vmul.f32 %v1690, %v2188
    %v2245 = vmul.f32 %v1694, %v2192
    %v2246 = vmul.f32 %v1698, %v2196
    %v2247 = vmul.f32 %v1702, %v2200
    %v2248 = vmul.f32 %v1706, %v2204
    %v2249 = vmul.f32 %v1710, %v2208
    %v2250 = vmul.f32 %v1714, %v2212
    %v2251 = vmul.f32 %v1718, %v2216
    %v2252 = vmul.f32 %v1722, %v2220
    %v2253 = vmul.f32 %v1726, %v2224
    %v2254 = vmul.f32 %v1730, %v2228
    %v2255 = vmul.f32 %v1734, %v2232
    %v2256 = vmul.f32 %v1738, %v2236
    %v2257 = vmul.f32 %v1742, %v2240
    %2274 = vrot.lane.b32.xlu0 %v2242, 32
    %v2275 = vpop.permute.xlu0 %2274
    %2276 = vrot.lane.b32.xlu0 %v2243, 32
    %v2277 = vpop.permute.xlu0 %2276
    %2278 = vrot.lane.b32.xlu0 %v2244, 32
    %v2279 = vpop.permute.xlu0 %2278
    %2280 = vrot.lane.b32.xlu0 %v2245, 32
    %v2281 = vpop.permute.xlu0 %2280
    %2282 = vrot.lane.b32.xlu0 %v2246, 32
    %v2283 = vpop.permute.xlu0 %2282
    %2284 = vrot.lane.b32.xlu0 %v2247, 32
    %v2285 = vpop.permute.xlu0 %2284
    %2286 = vrot.lane.b32.xlu0 %v2248, 32
    %v2287 = vpop.permute.xlu0 %2286
    %2288 = vrot.lane.b32.xlu0 %v2249, 32
    %v2289 = vpop.permute.xlu0 %2288
    %2290 = vrot.lane.b32.xlu0 %v2250, 32
    %v2291 = vpop.permute.xlu0 %2290
    %2292 = vrot.lane.b32.xlu0 %v2251, 32
    %v2293 = vpop.permute.xlu0 %2292
    %2294 = vrot.lane.b32.xlu0 %v2252, 32
    %v2295 = vpop.permute.xlu0 %2294
    %2296 = vrot.lane.b32.xlu0 %v2253, 32
    %v2297 = vpop.permute.xlu0 %2296
    %2298 = vrot.lane.b32.xlu0 %v2254, 32
    %v2299 = vpop.permute.xlu0 %2298
    %2300 = vrot.lane.b32.xlu0 %v2255, 32
    %v2301 = vpop.permute.xlu0 %2300
    %2302 = vrot.lane.b32.xlu0 %v2256, 32
    %v2303 = vpop.permute.xlu0 %2302
    %2304 = vrot.lane.b32.xlu0 %v2257, 32
    %v2305 = vpop.permute.xlu0 %2304
    %v2322 = vadd.f32 %v2162, %v2275
    %v2323 = vadd.f32 %v2163, %v2277
    %v2324 = vadd.f32 %v2164, %v2279
    %v2325 = vadd.f32 %v2165, %v2281
    %v2326 = vadd.f32 %v2166, %v2283
    %v2327 = vadd.f32 %v2167, %v2285
    %v2328 = vadd.f32 %v2168, %v2287
    %v2329 = vadd.f32 %v2169, %v2289
    %v2330 = vadd.f32 %v2170, %v2291
    %v2331 = vadd.f32 %v2171, %v2293
    %v2332 = vadd.f32 %v2172, %v2295
    %v2333 = vadd.f32 %v2173, %v2297
    %v2334 = vadd.f32 %v2174, %v2299
    %v2335 = vadd.f32 %v2175, %v2301
    %v2336 = vadd.f32 %v2176, %v2303
    %v2337 = vadd.f32 %v2177, %v2305
    %2338 = vset.pattern.permute.xlu0 4
    %2339 = vperm.xlu0 %2338, %v388
    %v2340 = vpop.permute.xlu0 %2339
    %2342 = vset.pattern.permute.xlu0 4
    %2343 = vperm.xlu0 %2342, %v389
    %v2344 = vpop.permute.xlu0 %2343
    %2346 = vset.pattern.permute.xlu0 4
    %2347 = vperm.xlu0 %2346, %v390
    %v2348 = vpop.permute.xlu0 %2347
    %2350 = vset.pattern.permute.xlu0 4
    %2351 = vperm.xlu0 %2350, %v391
    %v2352 = vpop.permute.xlu0 %2351
    %2354 = vset.pattern.permute.xlu0 4
    %2355 = vperm.xlu0 %2354, %v392
    %v2356 = vpop.permute.xlu0 %2355
    %2358 = vset.pattern.permute.xlu0 4
    %2359 = vperm.xlu0 %2358, %v393
    %v2360 = vpop.permute.xlu0 %2359
    %2362 = vset.pattern.permute.xlu0 4
    %2363 = vperm.xlu0 %2362, %v394
    %v2364 = vpop.permute.xlu0 %2363
    %2366 = vset.pattern.permute.xlu0 4
    %2367 = vperm.xlu0 %2366, %v395
    %v2368 = vpop.permute.xlu0 %2367
    %2370 = vset.pattern.permute.xlu0 4
    %2371 = vperm.xlu0 %2370, %v396
    %v2372 = vpop.permute.xlu0 %2371
    %2374 = vset.pattern.permute.xlu0 4
    %2375 = vperm.xlu0 %2374, %v397
    %v2376 = vpop.permute.xlu0 %2375
    %2378 = vset.pattern.permute.xlu0 4
    %2379 = vperm.xlu0 %2378, %v398
    %v2380 = vpop.permute.xlu0 %2379
    %2382 = vset.pattern.permute.xlu0 4
    %2383 = vperm.xlu0 %2382, %v399
    %v2384 = vpop.permute.xlu0 %2383
    %2386 = vset.pattern.permute.xlu0 4
    %2387 = vperm.xlu0 %2386, %v400
    %v2388 = vpop.permute.xlu0 %2387
    %2390 = vset.pattern.permute.xlu0 4
    %2391 = vperm.xlu0 %2390, %v401
    %v2392 = vpop.permute.xlu0 %2391
    %2394 = vset.pattern.permute.xlu0 4
    %2395 = vperm.xlu0 %2394, %v402
    %v2396 = vpop.permute.xlu0 %2395
    %2398 = vset.pattern.permute.xlu0 4
    %2399 = vperm.xlu0 %2398, %v403
    %v2400 = vpop.permute.xlu0 %2399
    %v2402 = vmul.f32 %v1683, %v2340
    %v2403 = vmul.f32 %v1687, %v2344
    %v2404 = vmul.f32 %v1691, %v2348
    %v2405 = vmul.f32 %v1695, %v2352
    %v2406 = vmul.f32 %v1699, %v2356
    %v2407 = vmul.f32 %v1703, %v2360
    %v2408 = vmul.f32 %v1707, %v2364
    %v2409 = vmul.f32 %v1711, %v2368
    %v2410 = vmul.f32 %v1715, %v2372
    %v2411 = vmul.f32 %v1719, %v2376
    %v2412 = vmul.f32 %v1723, %v2380
    %v2413 = vmul.f32 %v1727, %v2384
    %v2414 = vmul.f32 %v1731, %v2388
    %v2415 = vmul.f32 %v1735, %v2392
    %v2416 = vmul.f32 %v1739, %v2396
    %v2417 = vmul.f32 %v1743, %v2400
    %v2418 = vadd.f32 %v2322, %v2402
    %v2419 = vadd.f32 %v2323, %v2403
    %v2420 = vadd.f32 %v2324, %v2404
    %v2421 = vadd.f32 %v2325, %v2405
    %v2422 = vadd.f32 %v2326, %v2406
    %v2423 = vadd.f32 %v2327, %v2407
    %v2424 = vadd.f32 %v2328, %v2408
    %v2425 = vadd.f32 %v2329, %v2409
    %v2426 = vadd.f32 %v2330, %v2410
    %v2427 = vadd.f32 %v2331, %v2411
    %v2428 = vadd.f32 %v2332, %v2412
    %v2429 = vadd.f32 %v2333, %v2413
    %v2430 = vadd.f32 %v2334, %v2414
    %v2431 = vadd.f32 %v2335, %v2415
    %v2432 = vadd.f32 %v2336, %v2416
    %v2433 = vadd.f32 %v2337, %v2417
    %2434 = vset.pattern.permute.xlu0 5
    %2435 = vperm.xlu0 %2434, %v388
    %v2436 = vpop.permute.xlu0 %2435
    %2438 = vset.pattern.permute.xlu0 5
    %2439 = vperm.xlu0 %2438, %v389
    %v2440 = vpop.permute.xlu0 %2439
    %2442 = vset.pattern.permute.xlu0 5
    %2443 = vperm.xlu0 %2442, %v390
    %v2444 = vpop.permute.xlu0 %2443
    %2446 = vset.pattern.permute.xlu0 5
    %2447 = vperm.xlu0 %2446, %v391
    %v2448 = vpop.permute.xlu0 %2447
    %2450 = vset.pattern.permute.xlu0 5
    %2451 = vperm.xlu0 %2450, %v392
    %v2452 = vpop.permute.xlu0 %2451
    %2454 = vset.pattern.permute.xlu0 5
    %2455 = vperm.xlu0 %2454, %v393
    %v2456 = vpop.permute.xlu0 %2455
    %2458 = vset.pattern.permute.xlu0 5
    %2459 = vperm.xlu0 %2458, %v394
    %v2460 = vpop.permute.xlu0 %2459
    %2462 = vset.pattern.permute.xlu0 5
    %2463 = vperm.xlu0 %2462, %v395
    %v2464 = vpop.permute.xlu0 %2463
    %2466 = vset.pattern.permute.xlu0 5
    %2467 = vperm.xlu0 %2466, %v396
    %v2468 = vpop.permute.xlu0 %2467
    %2470 = vset.pattern.permute.xlu0 5
    %2471 = vperm.xlu0 %2470, %v397
    %v2472 = vpop.permute.xlu0 %2471
    %2474 = vset.pattern.permute.xlu0 5
    %2475 = vperm.xlu0 %2474, %v398
    %v2476 = vpop.permute.xlu0 %2475
    %2478 = vset.pattern.permute.xlu0 5
    %2479 = vperm.xlu0 %2478, %v399
    %v2480 = vpop.permute.xlu0 %2479
    %2482 = vset.pattern.permute.xlu0 5
    %2483 = vperm.xlu0 %2482, %v400
    %v2484 = vpop.permute.xlu0 %2483
    %2486 = vset.pattern.permute.xlu0 5
    %2487 = vperm.xlu0 %2486, %v401
    %v2488 = vpop.permute.xlu0 %2487
    %2490 = vset.pattern.permute.xlu0 5
    %2491 = vperm.xlu0 %2490, %v402
    %v2492 = vpop.permute.xlu0 %2491
    %2494 = vset.pattern.permute.xlu0 5
    %2495 = vperm.xlu0 %2494, %v403
    %v2496 = vpop.permute.xlu0 %2495
    %v2498 = vmul.f32 %v1683, %v2436
    %v2499 = vmul.f32 %v1687, %v2440
    %v2500 = vmul.f32 %v1691, %v2444
    %v2501 = vmul.f32 %v1695, %v2448
    %v2502 = vmul.f32 %v1699, %v2452
    %v2503 = vmul.f32 %v1703, %v2456
    %v2504 = vmul.f32 %v1707, %v2460
    %v2505 = vmul.f32 %v1711, %v2464
    %v2506 = vmul.f32 %v1715, %v2468
    %v2507 = vmul.f32 %v1719, %v2472
    %v2508 = vmul.f32 %v1723, %v2476
    %v2509 = vmul.f32 %v1727, %v2480
    %v2510 = vmul.f32 %v1731, %v2484
    %v2511 = vmul.f32 %v1735, %v2488
    %v2512 = vmul.f32 %v1739, %v2492
    %v2513 = vmul.f32 %v1743, %v2496
    %2530 = vrot.lane.b32.xlu0 %v2498, 96
    %v2531 = vpop.permute.xlu0 %2530
    %2532 = vrot.lane.b32.xlu0 %v2499, 96
    %v2533 = vpop.permute.xlu0 %2532
    %2534 = vrot.lane.b32.xlu0 %v2500, 96
    %v2535 = vpop.permute.xlu0 %2534
    %2536 = vrot.lane.b32.xlu0 %v2501, 96
    %v2537 = vpop.permute.xlu0 %2536
    %2538 = vrot.lane.b32.xlu0 %v2502, 96
    %v2539 = vpop.permute.xlu0 %2538
    %2540 = vrot.lane.b32.xlu0 %v2503, 96
    %v2541 = vpop.permute.xlu0 %2540
    %2542 = vrot.lane.b32.xlu0 %v2504, 96
    %v2543 = vpop.permute.xlu0 %2542
    %2544 = vrot.lane.b32.xlu0 %v2505, 96
    %v2545 = vpop.permute.xlu0 %2544
    %2546 = vrot.lane.b32.xlu0 %v2506, 96
    %v2547 = vpop.permute.xlu0 %2546
    %2548 = vrot.lane.b32.xlu0 %v2507, 96
    %v2549 = vpop.permute.xlu0 %2548
    %2550 = vrot.lane.b32.xlu0 %v2508, 96
    %v2551 = vpop.permute.xlu0 %2550
    %2552 = vrot.lane.b32.xlu0 %v2509, 96
    %v2553 = vpop.permute.xlu0 %2552
    %2554 = vrot.lane.b32.xlu0 %v2510, 96
    %v2555 = vpop.permute.xlu0 %2554
    %2556 = vrot.lane.b32.xlu0 %v2511, 96
    %v2557 = vpop.permute.xlu0 %2556
    %2558 = vrot.lane.b32.xlu0 %v2512, 96
    %v2559 = vpop.permute.xlu0 %2558
    %2560 = vrot.lane.b32.xlu0 %v2513, 96
    %v2561 = vpop.permute.xlu0 %2560
    %v2578 = vadd.f32 %v2418, %v2531
    %v2579 = vadd.f32 %v2419, %v2533
    %v2580 = vadd.f32 %v2420, %v2535
    %v2581 = vadd.f32 %v2421, %v2537
    %v2582 = vadd.f32 %v2422, %v2539
    %v2583 = vadd.f32 %v2423, %v2541
    %v2584 = vadd.f32 %v2424, %v2543
    %v2585 = vadd.f32 %v2425, %v2545
    %v2586 = vadd.f32 %v2426, %v2547
    %v2587 = vadd.f32 %v2427, %v2549
    %v2588 = vadd.f32 %v2428, %v2551
    %v2589 = vadd.f32 %v2429, %v2553
    %v2590 = vadd.f32 %v2430, %v2555
    %v2591 = vadd.f32 %v2431, %v2557
    %v2592 = vadd.f32 %v2432, %v2559
    %v2593 = vadd.f32 %v2433, %v2561
    %2594 = vset.pattern.permute.xlu0 6
    %2595 = vperm.xlu0 %2594, %v388
    %v2596 = vpop.permute.xlu0 %2595
    %2598 = vset.pattern.permute.xlu0 6
    %2599 = vperm.xlu0 %2598, %v389
    %v2600 = vpop.permute.xlu0 %2599
    %2602 = vset.pattern.permute.xlu0 6
    %2603 = vperm.xlu0 %2602, %v390
    %v2604 = vpop.permute.xlu0 %2603
    %2606 = vset.pattern.permute.xlu0 6
    %2607 = vperm.xlu0 %2606, %v391
    %v2608 = vpop.permute.xlu0 %2607
    %2610 = vset.pattern.permute.xlu0 6
    %2611 = vperm.xlu0 %2610, %v392
    %v2612 = vpop.permute.xlu0 %2611
    %2614 = vset.pattern.permute.xlu0 6
    %2615 = vperm.xlu0 %2614, %v393
    %v2616 = vpop.permute.xlu0 %2615
    %2618 = vset.pattern.permute.xlu0 6
    %2619 = vperm.xlu0 %2618, %v394
    %v2620 = vpop.permute.xlu0 %2619
    %2622 = vset.pattern.permute.xlu0 6
    %2623 = vperm.xlu0 %2622, %v395
    %v2624 = vpop.permute.xlu0 %2623
    %2626 = vset.pattern.permute.xlu0 6
    %2627 = vperm.xlu0 %2626, %v396
    %v2628 = vpop.permute.xlu0 %2627
    %2630 = vset.pattern.permute.xlu0 6
    %2631 = vperm.xlu0 %2630, %v397
    %v2632 = vpop.permute.xlu0 %2631
    %2634 = vset.pattern.permute.xlu0 6
    %2635 = vperm.xlu0 %2634, %v398
    %v2636 = vpop.permute.xlu0 %2635
    %2638 = vset.pattern.permute.xlu0 6
    %2639 = vperm.xlu0 %2638, %v399
    %v2640 = vpop.permute.xlu0 %2639
    %2642 = vset.pattern.permute.xlu0 6
    %2643 = vperm.xlu0 %2642, %v400
    %v2644 = vpop.permute.xlu0 %2643
    %2646 = vset.pattern.permute.xlu0 6
    %2647 = vperm.xlu0 %2646, %v401
    %v2648 = vpop.permute.xlu0 %2647
    %2650 = vset.pattern.permute.xlu0 6
    %2651 = vperm.xlu0 %2650, %v402
    %v2652 = vpop.permute.xlu0 %2651
    %2654 = vset.pattern.permute.xlu0 6
    %2655 = vperm.xlu0 %2654, %v403
    %v2656 = vpop.permute.xlu0 %2655
    %v2658 = vmul.f32 %v1683, %v2596
    %v2659 = vmul.f32 %v1687, %v2600
    %v2660 = vmul.f32 %v1691, %v2604
    %v2661 = vmul.f32 %v1695, %v2608
    %v2662 = vmul.f32 %v1699, %v2612
    %v2663 = vmul.f32 %v1703, %v2616
    %v2664 = vmul.f32 %v1707, %v2620
    %v2665 = vmul.f32 %v1711, %v2624
    %v2666 = vmul.f32 %v1715, %v2628
    %v2667 = vmul.f32 %v1719, %v2632
    %v2668 = vmul.f32 %v1723, %v2636
    %v2669 = vmul.f32 %v1727, %v2640
    %v2670 = vmul.f32 %v1731, %v2644
    %v2671 = vmul.f32 %v1735, %v2648
    %v2672 = vmul.f32 %v1739, %v2652
    %v2673 = vmul.f32 %v1743, %v2656
    %2690 = vrot.lane.b32.xlu0 %v2658, 64
    %v2691 = vpop.permute.xlu0 %2690
    %2692 = vrot.lane.b32.xlu0 %v2659, 64
    %v2693 = vpop.permute.xlu0 %2692
    %2694 = vrot.lane.b32.xlu0 %v2660, 64
    %v2695 = vpop.permute.xlu0 %2694
    %2696 = vrot.lane.b32.xlu0 %v2661, 64
    %v2697 = vpop.permute.xlu0 %2696
    %2698 = vrot.lane.b32.xlu0 %v2662, 64
    %v2699 = vpop.permute.xlu0 %2698
    %2700 = vrot.lane.b32.xlu0 %v2663, 64
    %v2701 = vpop.permute.xlu0 %2700
    %2702 = vrot.lane.b32.xlu0 %v2664, 64
    %v2703 = vpop.permute.xlu0 %2702
    %2704 = vrot.lane.b32.xlu0 %v2665, 64
    %v2705 = vpop.permute.xlu0 %2704
    %2706 = vrot.lane.b32.xlu0 %v2666, 64
    %v2707 = vpop.permute.xlu0 %2706
    %2708 = vrot.lane.b32.xlu0 %v2667, 64
    %v2709 = vpop.permute.xlu0 %2708
    %2710 = vrot.lane.b32.xlu0 %v2668, 64
    %v2711 = vpop.permute.xlu0 %2710
    %2712 = vrot.lane.b32.xlu0 %v2669, 64
    %v2713 = vpop.permute.xlu0 %2712
    %2714 = vrot.lane.b32.xlu0 %v2670, 64
    %v2715 = vpop.permute.xlu0 %2714
    %2716 = vrot.lane.b32.xlu0 %v2671, 64
    %v2717 = vpop.permute.xlu0 %2716
    %2718 = vrot.lane.b32.xlu0 %v2672, 64
    %v2719 = vpop.permute.xlu0 %2718
    %2720 = vrot.lane.b32.xlu0 %v2673, 64
    %v2721 = vpop.permute.xlu0 %2720
    %v2738 = vadd.f32 %v2578, %v2691
    %v2739 = vadd.f32 %v2579, %v2693
    %v2740 = vadd.f32 %v2580, %v2695
    %v2741 = vadd.f32 %v2581, %v2697
    %v2742 = vadd.f32 %v2582, %v2699
    %v2743 = vadd.f32 %v2583, %v2701
    %v2744 = vadd.f32 %v2584, %v2703
    %v2745 = vadd.f32 %v2585, %v2705
    %v2746 = vadd.f32 %v2586, %v2707
    %v2747 = vadd.f32 %v2587, %v2709
    %v2748 = vadd.f32 %v2588, %v2711
    %v2749 = vadd.f32 %v2589, %v2713
    %v2750 = vadd.f32 %v2590, %v2715
    %v2751 = vadd.f32 %v2591, %v2717
    %v2752 = vadd.f32 %v2592, %v2719
    %v2753 = vadd.f32 %v2593, %v2721
    %2754 = vset.pattern.permute.xlu0 7
    %2755 = vperm.xlu0 %2754, %v388
    %v2756 = vpop.permute.xlu0 %2755
    %2758 = vset.pattern.permute.xlu0 7
    %2759 = vperm.xlu0 %2758, %v389
    %v2760 = vpop.permute.xlu0 %2759
    %2762 = vset.pattern.permute.xlu0 7
    %2763 = vperm.xlu0 %2762, %v390
    %v2764 = vpop.permute.xlu0 %2763
    %2766 = vset.pattern.permute.xlu0 7
    %2767 = vperm.xlu0 %2766, %v391
    %v2768 = vpop.permute.xlu0 %2767
    %2770 = vset.pattern.permute.xlu0 7
    %2771 = vperm.xlu0 %2770, %v392
    %v2772 = vpop.permute.xlu0 %2771
    %2774 = vset.pattern.permute.xlu0 7
    %2775 = vperm.xlu0 %2774, %v393
    %v2776 = vpop.permute.xlu0 %2775
    %2778 = vset.pattern.permute.xlu0 7
    %2779 = vperm.xlu0 %2778, %v394
    %v2780 = vpop.permute.xlu0 %2779
    %2782 = vset.pattern.permute.xlu0 7
    %2783 = vperm.xlu0 %2782, %v395
    %v2784 = vpop.permute.xlu0 %2783
    %2786 = vset.pattern.permute.xlu0 7
    %2787 = vperm.xlu0 %2786, %v396
    %v2788 = vpop.permute.xlu0 %2787
    %2790 = vset.pattern.permute.xlu0 7
    %2791 = vperm.xlu0 %2790, %v397
    %v2792 = vpop.permute.xlu0 %2791
    %2794 = vset.pattern.permute.xlu0 7
    %2795 = vperm.xlu0 %2794, %v398
    %v2796 = vpop.permute.xlu0 %2795
    %2798 = vset.pattern.permute.xlu0 7
    %2799 = vperm.xlu0 %2798, %v399
    %v2800 = vpop.permute.xlu0 %2799
    %2802 = vset.pattern.permute.xlu0 7
    %2803 = vperm.xlu0 %2802, %v400
    %v2804 = vpop.permute.xlu0 %2803
    %2806 = vset.pattern.permute.xlu0 7
    %2807 = vperm.xlu0 %2806, %v401
    %v2808 = vpop.permute.xlu0 %2807
    %2810 = vset.pattern.permute.xlu0 7
    %2811 = vperm.xlu0 %2810, %v402
    %v2812 = vpop.permute.xlu0 %2811
    %2814 = vset.pattern.permute.xlu0 7
    %2815 = vperm.xlu0 %2814, %v403
    %v2816 = vpop.permute.xlu0 %2815
    %v2818 = vmul.f32 %v1683, %v2756
    %v2819 = vmul.f32 %v1687, %v2760
    %v2820 = vmul.f32 %v1691, %v2764
    %v2821 = vmul.f32 %v1695, %v2768
    %v2822 = vmul.f32 %v1699, %v2772
    %v2823 = vmul.f32 %v1703, %v2776
    %v2824 = vmul.f32 %v1707, %v2780
    %v2825 = vmul.f32 %v1711, %v2784
    %v2826 = vmul.f32 %v1715, %v2788
    %v2827 = vmul.f32 %v1719, %v2792
    %v2828 = vmul.f32 %v1723, %v2796
    %v2829 = vmul.f32 %v1727, %v2800
    %v2830 = vmul.f32 %v1731, %v2804
    %v2831 = vmul.f32 %v1735, %v2808
    %v2832 = vmul.f32 %v1739, %v2812
    %v2833 = vmul.f32 %v1743, %v2816
    %2850 = vrot.lane.b32.xlu0 %v2818, 32
    %v2851 = vpop.permute.xlu0 %2850
    %2852 = vrot.lane.b32.xlu0 %v2819, 32
    %v2853 = vpop.permute.xlu0 %2852
    %2854 = vrot.lane.b32.xlu0 %v2820, 32
    %v2855 = vpop.permute.xlu0 %2854
    %2856 = vrot.lane.b32.xlu0 %v2821, 32
    %v2857 = vpop.permute.xlu0 %2856
    %2858 = vrot.lane.b32.xlu0 %v2822, 32
    %v2859 = vpop.permute.xlu0 %2858
    %2860 = vrot.lane.b32.xlu0 %v2823, 32
    %v2861 = vpop.permute.xlu0 %2860
    %2862 = vrot.lane.b32.xlu0 %v2824, 32
    %v2863 = vpop.permute.xlu0 %2862
    %2864 = vrot.lane.b32.xlu0 %v2825, 32
    %v2865 = vpop.permute.xlu0 %2864
    %2866 = vrot.lane.b32.xlu0 %v2826, 32
    %v2867 = vpop.permute.xlu0 %2866
    %2868 = vrot.lane.b32.xlu0 %v2827, 32
    %v2869 = vpop.permute.xlu0 %2868
    %2870 = vrot.lane.b32.xlu0 %v2828, 32
    %v2871 = vpop.permute.xlu0 %2870
    %2872 = vrot.lane.b32.xlu0 %v2829, 32
    %v2873 = vpop.permute.xlu0 %2872
    %2874 = vrot.lane.b32.xlu0 %v2830, 32
    %v2875 = vpop.permute.xlu0 %2874
    %2876 = vrot.lane.b32.xlu0 %v2831, 32
    %v2877 = vpop.permute.xlu0 %2876
    %2878 = vrot.lane.b32.xlu0 %v2832, 32
    %v2879 = vpop.permute.xlu0 %2878
    %2880 = vrot.lane.b32.xlu0 %v2833, 32
    %v2881 = vpop.permute.xlu0 %2880
    %v2898 = vadd.f32 %v2738, %v2851
    %v2899 = vadd.f32 %v2739, %v2853
    %v2900 = vadd.f32 %v2740, %v2855
    %v2901 = vadd.f32 %v2741, %v2857
    %v2902 = vadd.f32 %v2742, %v2859
    %v2903 = vadd.f32 %v2743, %v2861
    %v2904 = vadd.f32 %v2744, %v2863
    %v2905 = vadd.f32 %v2745, %v2865
    %v2906 = vadd.f32 %v2746, %v2867
    %v2907 = vadd.f32 %v2747, %v2869
    %v2908 = vadd.f32 %v2748, %v2871
    %v2909 = vadd.f32 %v2749, %v2873
    %v2910 = vadd.f32 %v2750, %v2875
    %v2911 = vadd.f32 %v2751, %v2877
    %v2912 = vadd.f32 %v2752, %v2879
    %v2913 = vadd.f32 %v2753, %v2881
    %2914 = vset.pattern.permute.xlu0 8
    %2915 = vperm.xlu0 %2914, %v388
    %v2916 = vpop.permute.xlu0 %2915
    %2918 = vset.pattern.permute.xlu0 8
    %2919 = vperm.xlu0 %2918, %v389
    %v2920 = vpop.permute.xlu0 %2919
    %2922 = vset.pattern.permute.xlu0 8
    %2923 = vperm.xlu0 %2922, %v390
    %v2924 = vpop.permute.xlu0 %2923
    %2926 = vset.pattern.permute.xlu0 8
    %2927 = vperm.xlu0 %2926, %v391
    %v2928 = vpop.permute.xlu0 %2927
    %2930 = vset.pattern.permute.xlu0 8
    %2931 = vperm.xlu0 %2930, %v392
    %v2932 = vpop.permute.xlu0 %2931
    %2934 = vset.pattern.permute.xlu0 8
    %2935 = vperm.xlu0 %2934, %v393
    %v2936 = vpop.permute.xlu0 %2935
    %2938 = vset.pattern.permute.xlu0 8
    %2939 = vperm.xlu0 %2938, %v394
    %v2940 = vpop.permute.xlu0 %2939
    %2942 = vset.pattern.permute.xlu0 8
    %2943 = vperm.xlu0 %2942, %v395
    %v2944 = vpop.permute.xlu0 %2943
    %2946 = vset.pattern.permute.xlu0 8
    %2947 = vperm.xlu0 %2946, %v396
    %v2948 = vpop.permute.xlu0 %2947
    %2950 = vset.pattern.permute.xlu0 8
    %2951 = vperm.xlu0 %2950, %v397
    %v2952 = vpop.permute.xlu0 %2951
    %2954 = vset.pattern.permute.xlu0 8
    %2955 = vperm.xlu0 %2954, %v398
    %v2956 = vpop.permute.xlu0 %2955
    %2958 = vset.pattern.permute.xlu0 8
    %2959 = vperm.xlu0 %2958, %v399
    %v2960 = vpop.permute.xlu0 %2959
    %2962 = vset.pattern.permute.xlu0 8
    %2963 = vperm.xlu0 %2962, %v400
    %v2964 = vpop.permute.xlu0 %2963
    %2966 = vset.pattern.permute.xlu0 8
    %2967 = vperm.xlu0 %2966, %v401
    %v2968 = vpop.permute.xlu0 %2967
    %2970 = vset.pattern.permute.xlu0 8
    %2971 = vperm.xlu0 %2970, %v402
    %v2972 = vpop.permute.xlu0 %2971
    %2974 = vset.pattern.permute.xlu0 8
    %2975 = vperm.xlu0 %2974, %v403
    %v2976 = vpop.permute.xlu0 %2975
    %v2978 = vmul.f32 %v1684, %v2916
    %v2979 = vmul.f32 %v1688, %v2920
    %v2980 = vmul.f32 %v1692, %v2924
    %v2981 = vmul.f32 %v1696, %v2928
    %v2982 = vmul.f32 %v1700, %v2932
    %v2983 = vmul.f32 %v1704, %v2936
    %v2984 = vmul.f32 %v1708, %v2940
    %v2985 = vmul.f32 %v1712, %v2944
    %v2986 = vmul.f32 %v1716, %v2948
    %v2987 = vmul.f32 %v1720, %v2952
    %v2988 = vmul.f32 %v1724, %v2956
    %v2989 = vmul.f32 %v1728, %v2960
    %v2990 = vmul.f32 %v1732, %v2964
    %v2991 = vmul.f32 %v1736, %v2968
    %v2992 = vmul.f32 %v1740, %v2972
    %v2993 = vmul.f32 %v1744, %v2976
    %v2994 = vadd.f32 %v2898, %v2978
    %v2995 = vadd.f32 %v2899, %v2979
    %v2996 = vadd.f32 %v2900, %v2980
    %v2997 = vadd.f32 %v2901, %v2981
    %v2998 = vadd.f32 %v2902, %v2982
    %v2999 = vadd.f32 %v2903, %v2983
    %v3000 = vadd.f32 %v2904, %v2984
    %v3001 = vadd.f32 %v2905, %v2985
    %v3002 = vadd.f32 %v2906, %v2986
    %v3003 = vadd.f32 %v2907, %v2987
    %v3004 = vadd.f32 %v2908, %v2988
    %v3005 = vadd.f32 %v2909, %v2989
    %v3006 = vadd.f32 %v2910, %v2990
    %v3007 = vadd.f32 %v2911, %v2991
    %v3008 = vadd.f32 %v2912, %v2992
    %v3009 = vadd.f32 %v2913, %v2993
    %3010 = vset.pattern.permute.xlu0 9
    %3011 = vperm.xlu0 %3010, %v388
    %v3012 = vpop.permute.xlu0 %3011
    %3014 = vset.pattern.permute.xlu0 9
    %3015 = vperm.xlu0 %3014, %v389
    %v3016 = vpop.permute.xlu0 %3015
    %3018 = vset.pattern.permute.xlu0 9
    %3019 = vperm.xlu0 %3018, %v390
    %v3020 = vpop.permute.xlu0 %3019
    %3022 = vset.pattern.permute.xlu0 9
    %3023 = vperm.xlu0 %3022, %v391
    %v3024 = vpop.permute.xlu0 %3023
    %3026 = vset.pattern.permute.xlu0 9
    %3027 = vperm.xlu0 %3026, %v392
    %v3028 = vpop.permute.xlu0 %3027
    %3030 = vset.pattern.permute.xlu0 9
    %3031 = vperm.xlu0 %3030, %v393
    %v3032 = vpop.permute.xlu0 %3031
    %3034 = vset.pattern.permute.xlu0 9
    %3035 = vperm.xlu0 %3034, %v394
    %v3036 = vpop.permute.xlu0 %3035
    %3038 = vset.pattern.permute.xlu0 9
    %3039 = vperm.xlu0 %3038, %v395
    %v3040 = vpop.permute.xlu0 %3039
    %3042 = vset.pattern.permute.xlu0 9
    %3043 = vperm.xlu0 %3042, %v396
    %v3044 = vpop.permute.xlu0 %3043
    %3046 = vset.pattern.permute.xlu0 9
    %3047 = vperm.xlu0 %3046, %v397
    %v3048 = vpop.permute.xlu0 %3047
    %3050 = vset.pattern.permute.xlu0 9
    %3051 = vperm.xlu0 %3050, %v398
    %v3052 = vpop.permute.xlu0 %3051
    %3054 = vset.pattern.permute.xlu0 9
    %3055 = vperm.xlu0 %3054, %v399
    %v3056 = vpop.permute.xlu0 %3055
    %3058 = vset.pattern.permute.xlu0 9
    %3059 = vperm.xlu0 %3058, %v400
    %v3060 = vpop.permute.xlu0 %3059
    %3062 = vset.pattern.permute.xlu0 9
    %3063 = vperm.xlu0 %3062, %v401
    %v3064 = vpop.permute.xlu0 %3063
    %3066 = vset.pattern.permute.xlu0 9
    %3067 = vperm.xlu0 %3066, %v402
    %v3068 = vpop.permute.xlu0 %3067
    %3070 = vset.pattern.permute.xlu0 9
    %3071 = vperm.xlu0 %3070, %v403
    %v3072 = vpop.permute.xlu0 %3071
    %v3074 = vmul.f32 %v1684, %v3012
    %v3075 = vmul.f32 %v1688, %v3016
    %v3076 = vmul.f32 %v1692, %v3020
    %v3077 = vmul.f32 %v1696, %v3024
    %v3078 = vmul.f32 %v1700, %v3028
    %v3079 = vmul.f32 %v1704, %v3032
    %v3080 = vmul.f32 %v1708, %v3036
    %v3081 = vmul.f32 %v1712, %v3040
    %v3082 = vmul.f32 %v1716, %v3044
    %v3083 = vmul.f32 %v1720, %v3048
    %v3084 = vmul.f32 %v1724, %v3052
    %v3085 = vmul.f32 %v1728, %v3056
    %v3086 = vmul.f32 %v1732, %v3060
    %v3087 = vmul.f32 %v1736, %v3064
    %v3088 = vmul.f32 %v1740, %v3068
    %v3089 = vmul.f32 %v1744, %v3072
    %3106 = vrot.lane.b32.xlu0 %v3074, 96
    %v3107 = vpop.permute.xlu0 %3106
    %3108 = vrot.lane.b32.xlu0 %v3075, 96
    %v3109 = vpop.permute.xlu0 %3108
    %3110 = vrot.lane.b32.xlu0 %v3076, 96
    %v3111 = vpop.permute.xlu0 %3110
    %3112 = vrot.lane.b32.xlu0 %v3077, 96
    %v3113 = vpop.permute.xlu0 %3112
    %3114 = vrot.lane.b32.xlu0 %v3078, 96
    %v3115 = vpop.permute.xlu0 %3114
    %3116 = vrot.lane.b32.xlu0 %v3079, 96
    %v3117 = vpop.permute.xlu0 %3116
    %3118 = vrot.lane.b32.xlu0 %v3080, 96
    %v3119 = vpop.permute.xlu0 %3118
    %3120 = vrot.lane.b32.xlu0 %v3081, 96
    %v3121 = vpop.permute.xlu0 %3120
    %3122 = vrot.lane.b32.xlu0 %v3082, 96
    %v3123 = vpop.permute.xlu0 %3122
    %3124 = vrot.lane.b32.xlu0 %v3083, 96
    %v3125 = vpop.permute.xlu0 %3124
    %3126 = vrot.lane.b32.xlu0 %v3084, 96
    %v3127 = vpop.permute.xlu0 %3126
    %3128 = vrot.lane.b32.xlu0 %v3085, 96
    %v3129 = vpop.permute.xlu0 %3128
    %3130 = vrot.lane.b32.xlu0 %v3086, 96
    %v3131 = vpop.permute.xlu0 %3130
    %3132 = vrot.lane.b32.xlu0 %v3087, 96
    %v3133 = vpop.permute.xlu0 %3132
    %3134 = vrot.lane.b32.xlu0 %v3088, 96
    %v3135 = vpop.permute.xlu0 %3134
    %3136 = vrot.lane.b32.xlu0 %v3089, 96
    %v3137 = vpop.permute.xlu0 %3136
    %v3154 = vadd.f32 %v2994, %v3107
    %v3155 = vadd.f32 %v2995, %v3109
    %v3156 = vadd.f32 %v2996, %v3111
    %v3157 = vadd.f32 %v2997, %v3113
    %v3158 = vadd.f32 %v2998, %v3115
    %v3159 = vadd.f32 %v2999, %v3117
    %v3160 = vadd.f32 %v3000, %v3119
    %v3161 = vadd.f32 %v3001, %v3121
    %v3162 = vadd.f32 %v3002, %v3123
    %v3163 = vadd.f32 %v3003, %v3125
    %v3164 = vadd.f32 %v3004, %v3127
    %v3165 = vadd.f32 %v3005, %v3129
    %v3166 = vadd.f32 %v3006, %v3131
    %v3167 = vadd.f32 %v3007, %v3133
    %v3168 = vadd.f32 %v3008, %v3135
    %v3169 = vadd.f32 %v3009, %v3137
    %3170 = vset.pattern.permute.xlu0 10
    %3171 = vperm.xlu0 %3170, %v388
    %v3172 = vpop.permute.xlu0 %3171
    %3174 = vset.pattern.permute.xlu0 10
    %3175 = vperm.xlu0 %3174, %v389
    %v3176 = vpop.permute.xlu0 %3175
    %3178 = vset.pattern.permute.xlu0 10
    %3179 = vperm.xlu0 %3178, %v390
    %v3180 = vpop.permute.xlu0 %3179
    %3182 = vset.pattern.permute.xlu0 10
    %3183 = vperm.xlu0 %3182, %v391
    %v3184 = vpop.permute.xlu0 %3183
    %3186 = vset.pattern.permute.xlu0 10
    %3187 = vperm.xlu0 %3186, %v392
    %v3188 = vpop.permute.xlu0 %3187
    %3190 = vset.pattern.permute.xlu0 10
    %3191 = vperm.xlu0 %3190, %v393
    %v3192 = vpop.permute.xlu0 %3191
    %3194 = vset.pattern.permute.xlu0 10
    %3195 = vperm.xlu0 %3194, %v394
    %v3196 = vpop.permute.xlu0 %3195
    %3198 = vset.pattern.permute.xlu0 10
    %3199 = vperm.xlu0 %3198, %v395
    %v3200 = vpop.permute.xlu0 %3199
    %3202 = vset.pattern.permute.xlu0 10
    %3203 = vperm.xlu0 %3202, %v396
    %v3204 = vpop.permute.xlu0 %3203
    %3206 = vset.pattern.permute.xlu0 10
    %3207 = vperm.xlu0 %3206, %v397
    %v3208 = vpop.permute.xlu0 %3207
    %3210 = vset.pattern.permute.xlu0 10
    %3211 = vperm.xlu0 %3210, %v398
    %v3212 = vpop.permute.xlu0 %3211
    %3214 = vset.pattern.permute.xlu0 10
    %3215 = vperm.xlu0 %3214, %v399
    %v3216 = vpop.permute.xlu0 %3215
    %3218 = vset.pattern.permute.xlu0 10
    %3219 = vperm.xlu0 %3218, %v400
    %v3220 = vpop.permute.xlu0 %3219
    %3222 = vset.pattern.permute.xlu0 10
    %3223 = vperm.xlu0 %3222, %v401
    %v3224 = vpop.permute.xlu0 %3223
    %3226 = vset.pattern.permute.xlu0 10
    %3227 = vperm.xlu0 %3226, %v402
    %v3228 = vpop.permute.xlu0 %3227
    %3230 = vset.pattern.permute.xlu0 10
    %3231 = vperm.xlu0 %3230, %v403
    %v3232 = vpop.permute.xlu0 %3231
    %v3234 = vmul.f32 %v1684, %v3172
    %v3235 = vmul.f32 %v1688, %v3176
    %v3236 = vmul.f32 %v1692, %v3180
    %v3237 = vmul.f32 %v1696, %v3184
    %v3238 = vmul.f32 %v1700, %v3188
    %v3239 = vmul.f32 %v1704, %v3192
    %v3240 = vmul.f32 %v1708, %v3196
    %v3241 = vmul.f32 %v1712, %v3200
    %v3242 = vmul.f32 %v1716, %v3204
    %v3243 = vmul.f32 %v1720, %v3208
    %v3244 = vmul.f32 %v1724, %v3212
    %v3245 = vmul.f32 %v1728, %v3216
    %v3246 = vmul.f32 %v1732, %v3220
    %v3247 = vmul.f32 %v1736, %v3224
    %v3248 = vmul.f32 %v1740, %v3228
    %v3249 = vmul.f32 %v1744, %v3232
    %3266 = vrot.lane.b32.xlu0 %v3234, 64
    %v3267 = vpop.permute.xlu0 %3266
    %3268 = vrot.lane.b32.xlu0 %v3235, 64
    %v3269 = vpop.permute.xlu0 %3268
    %3270 = vrot.lane.b32.xlu0 %v3236, 64
    %v3271 = vpop.permute.xlu0 %3270
    %3272 = vrot.lane.b32.xlu0 %v3237, 64
    %v3273 = vpop.permute.xlu0 %3272
    %3274 = vrot.lane.b32.xlu0 %v3238, 64
    %v3275 = vpop.permute.xlu0 %3274
    %3276 = vrot.lane.b32.xlu0 %v3239, 64
    %v3277 = vpop.permute.xlu0 %3276
    %3278 = vrot.lane.b32.xlu0 %v3240, 64
    %v3279 = vpop.permute.xlu0 %3278
    %3280 = vrot.lane.b32.xlu0 %v3241, 64
    %v3281 = vpop.permute.xlu0 %3280
    %3282 = vrot.lane.b32.xlu0 %v3242, 64
    %v3283 = vpop.permute.xlu0 %3282
    %3284 = vrot.lane.b32.xlu0 %v3243, 64
    %v3285 = vpop.permute.xlu0 %3284
    %3286 = vrot.lane.b32.xlu0 %v3244, 64
    %v3287 = vpop.permute.xlu0 %3286
    %3288 = vrot.lane.b32.xlu0 %v3245, 64
    %v3289 = vpop.permute.xlu0 %3288
    %3290 = vrot.lane.b32.xlu0 %v3246, 64
    %v3291 = vpop.permute.xlu0 %3290
    %3292 = vrot.lane.b32.xlu0 %v3247, 64
    %v3293 = vpop.permute.xlu0 %3292
    %3294 = vrot.lane.b32.xlu0 %v3248, 64
    %v3295 = vpop.permute.xlu0 %3294
    %3296 = vrot.lane.b32.xlu0 %v3249, 64
    %v3297 = vpop.permute.xlu0 %3296
    %v3314 = vadd.f32 %v3154, %v3267
    %v3315 = vadd.f32 %v3155, %v3269
    %v3316 = vadd.f32 %v3156, %v3271
    %v3317 = vadd.f32 %v3157, %v3273
    %v3318 = vadd.f32 %v3158, %v3275
    %v3319 = vadd.f32 %v3159, %v3277
    %v3320 = vadd.f32 %v3160, %v3279
    %v3321 = vadd.f32 %v3161, %v3281
    %v3322 = vadd.f32 %v3162, %v3283
    %v3323 = vadd.f32 %v3163, %v3285
    %v3324 = vadd.f32 %v3164, %v3287
    %v3325 = vadd.f32 %v3165, %v3289
    %v3326 = vadd.f32 %v3166, %v3291
    %v3327 = vadd.f32 %v3167, %v3293
    %v3328 = vadd.f32 %v3168, %v3295
    %v3329 = vadd.f32 %v3169, %v3297
    %3330 = vset.pattern.permute.xlu0 11
    %3331 = vperm.xlu0 %3330, %v388
    %v3332 = vpop.permute.xlu0 %3331
    %3334 = vset.pattern.permute.xlu0 11
    %3335 = vperm.xlu0 %3334, %v389
    %v3336 = vpop.permute.xlu0 %3335
    %3338 = vset.pattern.permute.xlu0 11
    %3339 = vperm.xlu0 %3338, %v390
    %v3340 = vpop.permute.xlu0 %3339
    %3342 = vset.pattern.permute.xlu0 11
    %3343 = vperm.xlu0 %3342, %v391
    %v3344 = vpop.permute.xlu0 %3343
    %3346 = vset.pattern.permute.xlu0 11
    %3347 = vperm.xlu0 %3346, %v392
    %v3348 = vpop.permute.xlu0 %3347
    %3350 = vset.pattern.permute.xlu0 11
    %3351 = vperm.xlu0 %3350, %v393
    %v3352 = vpop.permute.xlu0 %3351
    %3354 = vset.pattern.permute.xlu0 11
    %3355 = vperm.xlu0 %3354, %v394
    %v3356 = vpop.permute.xlu0 %3355
    %3358 = vset.pattern.permute.xlu0 11
    %3359 = vperm.xlu0 %3358, %v395
    %v3360 = vpop.permute.xlu0 %3359
    %3362 = vset.pattern.permute.xlu0 11
    %3363 = vperm.xlu0 %3362, %v396
    %v3364 = vpop.permute.xlu0 %3363
    %3366 = vset.pattern.permute.xlu0 11
    %3367 = vperm.xlu0 %3366, %v397
    %v3368 = vpop.permute.xlu0 %3367
    %3370 = vset.pattern.permute.xlu0 11
    %3371 = vperm.xlu0 %3370, %v398
    %v3372 = vpop.permute.xlu0 %3371
    %3374 = vset.pattern.permute.xlu0 11
    %3375 = vperm.xlu0 %3374, %v399
    %v3376 = vpop.permute.xlu0 %3375
    %3378 = vset.pattern.permute.xlu0 11
    %3379 = vperm.xlu0 %3378, %v400
    %v3380 = vpop.permute.xlu0 %3379
    %3382 = vset.pattern.permute.xlu0 11
    %3383 = vperm.xlu0 %3382, %v401
    %v3384 = vpop.permute.xlu0 %3383
    %3386 = vset.pattern.permute.xlu0 11
    %3387 = vperm.xlu0 %3386, %v402
    %v3388 = vpop.permute.xlu0 %3387
    %3390 = vset.pattern.permute.xlu0 11
    %3391 = vperm.xlu0 %3390, %v403
    %v3392 = vpop.permute.xlu0 %3391
    %v3394 = vmul.f32 %v1684, %v3332
    %v3395 = vmul.f32 %v1688, %v3336
    %v3396 = vmul.f32 %v1692, %v3340
    %v3397 = vmul.f32 %v1696, %v3344
    %v3398 = vmul.f32 %v1700, %v3348
    %v3399 = vmul.f32 %v1704, %v3352
    %v3400 = vmul.f32 %v1708, %v3356
    %v3401 = vmul.f32 %v1712, %v3360
    %v3402 = vmul.f32 %v1716, %v3364
    %v3403 = vmul.f32 %v1720, %v3368
    %v3404 = vmul.f32 %v1724, %v3372
    %v3405 = vmul.f32 %v1728, %v3376
    %v3406 = vmul.f32 %v1732, %v3380
    %v3407 = vmul.f32 %v1736, %v3384
    %v3408 = vmul.f32 %v1740, %v3388
    %v3409 = vmul.f32 %v1744, %v3392
    %3426 = vrot.lane.b32.xlu0 %v3394, 32
    %v3427 = vpop.permute.xlu0 %3426
    %3428 = vrot.lane.b32.xlu0 %v3395, 32
    %v3429 = vpop.permute.xlu0 %3428
    %3430 = vrot.lane.b32.xlu0 %v3396, 32
    %v3431 = vpop.permute.xlu0 %3430
    %3432 = vrot.lane.b32.xlu0 %v3397, 32
    %v3433 = vpop.permute.xlu0 %3432
    %3434 = vrot.lane.b32.xlu0 %v3398, 32
    %v3435 = vpop.permute.xlu0 %3434
    %3436 = vrot.lane.b32.xlu0 %v3399, 32
    %v3437 = vpop.permute.xlu0 %3436
    %3438 = vrot.lane.b32.xlu0 %v3400, 32
    %v3439 = vpop.permute.xlu0 %3438
    %3440 = vrot.lane.b32.xlu0 %v3401, 32
    %v3441 = vpop.permute.xlu0 %3440
    %3442 = vrot.lane.b32.xlu0 %v3402, 32
    %v3443 = vpop.permute.xlu0 %3442
    %3444 = vrot.lane.b32.xlu0 %v3403, 32
    %v3445 = vpop.permute.xlu0 %3444
    %3446 = vrot.lane.b32.xlu0 %v3404, 32
    %v3447 = vpop.permute.xlu0 %3446
    %3448 = vrot.lane.b32.xlu0 %v3405, 32
    %v3449 = vpop.permute.xlu0 %3448
    %3450 = vrot.lane.b32.xlu0 %v3406, 32
    %v3451 = vpop.permute.xlu0 %3450
    %3452 = vrot.lane.b32.xlu0 %v3407, 32
    %v3453 = vpop.permute.xlu0 %3452
    %3454 = vrot.lane.b32.xlu0 %v3408, 32
    %v3455 = vpop.permute.xlu0 %3454
    %3456 = vrot.lane.b32.xlu0 %v3409, 32
    %v3457 = vpop.permute.xlu0 %3456
    %v3474 = vadd.f32 %v3314, %v3427
    %v3475 = vadd.f32 %v3315, %v3429
    %v3476 = vadd.f32 %v3316, %v3431
    %v3477 = vadd.f32 %v3317, %v3433
    %v3478 = vadd.f32 %v3318, %v3435
    %v3479 = vadd.f32 %v3319, %v3437
    %v3480 = vadd.f32 %v3320, %v3439
    %v3481 = vadd.f32 %v3321, %v3441
    %v3482 = vadd.f32 %v3322, %v3443
    %v3483 = vadd.f32 %v3323, %v3445
    %v3484 = vadd.f32 %v3324, %v3447
    %v3485 = vadd.f32 %v3325, %v3449
    %v3486 = vadd.f32 %v3326, %v3451
    %v3487 = vadd.f32 %v3327, %v3453
    %v3488 = vadd.f32 %v3328, %v3455
    %v3489 = vadd.f32 %v3329, %v3457
    %3490 = vset.pattern.permute.xlu0 12
    %3491 = vperm.xlu0 %3490, %v388
    %v3492 = vpop.permute.xlu0 %3491
    %3494 = vset.pattern.permute.xlu0 12
    %3495 = vperm.xlu0 %3494, %v389
    %v3496 = vpop.permute.xlu0 %3495
    %3498 = vset.pattern.permute.xlu0 12
    %3499 = vperm.xlu0 %3498, %v390
    %v3500 = vpop.permute.xlu0 %3499
    %3502 = vset.pattern.permute.xlu0 12
    %3503 = vperm.xlu0 %3502, %v391
    %v3504 = vpop.permute.xlu0 %3503
    %3506 = vset.pattern.permute.xlu0 12
    %3507 = vperm.xlu0 %3506, %v392
    %v3508 = vpop.permute.xlu0 %3507
    %3510 = vset.pattern.permute.xlu0 12
    %3511 = vperm.xlu0 %3510, %v393
    %v3512 = vpop.permute.xlu0 %3511
    %3514 = vset.pattern.permute.xlu0 12
    %3515 = vperm.xlu0 %3514, %v394
    %v3516 = vpop.permute.xlu0 %3515
    %3518 = vset.pattern.permute.xlu0 12
    %3519 = vperm.xlu0 %3518, %v395
    %v3520 = vpop.permute.xlu0 %3519
    %3522 = vset.pattern.permute.xlu0 12
    %3523 = vperm.xlu0 %3522, %v396
    %v3524 = vpop.permute.xlu0 %3523
    %3526 = vset.pattern.permute.xlu0 12
    %3527 = vperm.xlu0 %3526, %v397
    %v3528 = vpop.permute.xlu0 %3527
    %3530 = vset.pattern.permute.xlu0 12
    %3531 = vperm.xlu0 %3530, %v398
    %v3532 = vpop.permute.xlu0 %3531
    %3534 = vset.pattern.permute.xlu0 12
    %3535 = vperm.xlu0 %3534, %v399
    %v3536 = vpop.permute.xlu0 %3535
    %3538 = vset.pattern.permute.xlu0 12
    %3539 = vperm.xlu0 %3538, %v400
    %v3540 = vpop.permute.xlu0 %3539
    %3542 = vset.pattern.permute.xlu0 12
    %3543 = vperm.xlu0 %3542, %v401
    %v3544 = vpop.permute.xlu0 %3543
    %3546 = vset.pattern.permute.xlu0 12
    %3547 = vperm.xlu0 %3546, %v402
    %v3548 = vpop.permute.xlu0 %3547
    %3550 = vset.pattern.permute.xlu0 12
    %3551 = vperm.xlu0 %3550, %v403
    %v3552 = vpop.permute.xlu0 %3551
    %v3554 = vmul.f32 %v1685, %v3492
    %v3555 = vmul.f32 %v1689, %v3496
    %v3556 = vmul.f32 %v1693, %v3500
    %v3557 = vmul.f32 %v1697, %v3504
    %v3558 = vmul.f32 %v1701, %v3508
    %v3559 = vmul.f32 %v1705, %v3512
    %v3560 = vmul.f32 %v1709, %v3516
    %v3561 = vmul.f32 %v1713, %v3520
    %v3562 = vmul.f32 %v1717, %v3524
    %v3563 = vmul.f32 %v1721, %v3528
    %v3564 = vmul.f32 %v1725, %v3532
    %v3565 = vmul.f32 %v1729, %v3536
    %v3566 = vmul.f32 %v1733, %v3540
    %v3567 = vmul.f32 %v1737, %v3544
    %v3568 = vmul.f32 %v1741, %v3548
    %v3569 = vmul.f32 %v1745, %v3552
    %v3570 = vadd.f32 %v3474, %v3554
    %v3571 = vadd.f32 %v3475, %v3555
    %v3572 = vadd.f32 %v3476, %v3556
    %v3573 = vadd.f32 %v3477, %v3557
    %v3574 = vadd.f32 %v3478, %v3558
    %v3575 = vadd.f32 %v3479, %v3559
    %v3576 = vadd.f32 %v3480, %v3560
    %v3577 = vadd.f32 %v3481, %v3561
    %v3578 = vadd.f32 %v3482, %v3562
    %v3579 = vadd.f32 %v3483, %v3563
    %v3580 = vadd.f32 %v3484, %v3564
    %v3581 = vadd.f32 %v3485, %v3565
    %v3582 = vadd.f32 %v3486, %v3566
    %v3583 = vadd.f32 %v3487, %v3567
    %v3584 = vadd.f32 %v3488, %v3568
    %v3585 = vadd.f32 %v3489, %v3569
    %3586 = vset.pattern.permute.xlu0 13
    %3587 = vperm.xlu0 %3586, %v388
    %v3588 = vpop.permute.xlu0 %3587
    %3590 = vset.pattern.permute.xlu0 13
    %3591 = vperm.xlu0 %3590, %v389
    %v3592 = vpop.permute.xlu0 %3591
    %3594 = vset.pattern.permute.xlu0 13
    %3595 = vperm.xlu0 %3594, %v390
    %v3596 = vpop.permute.xlu0 %3595
    %3598 = vset.pattern.permute.xlu0 13
    %3599 = vperm.xlu0 %3598, %v391
    %v3600 = vpop.permute.xlu0 %3599
    %3602 = vset.pattern.permute.xlu0 13
    %3603 = vperm.xlu0 %3602, %v392
    %v3604 = vpop.permute.xlu0 %3603
    %3606 = vset.pattern.permute.xlu0 13
    %3607 = vperm.xlu0 %3606, %v393
    %v3608 = vpop.permute.xlu0 %3607
    %3610 = vset.pattern.permute.xlu0 13
    %3611 = vperm.xlu0 %3610, %v394
    %v3612 = vpop.permute.xlu0 %3611
    %3614 = vset.pattern.permute.xlu0 13
    %3615 = vperm.xlu0 %3614, %v395
    %v3616 = vpop.permute.xlu0 %3615
    %3618 = vset.pattern.permute.xlu0 13
    %3619 = vperm.xlu0 %3618, %v396
    %v3620 = vpop.permute.xlu0 %3619
    %3622 = vset.pattern.permute.xlu0 13
    %3623 = vperm.xlu0 %3622, %v397
    %v3624 = vpop.permute.xlu0 %3623
    %3626 = vset.pattern.permute.xlu0 13
    %3627 = vperm.xlu0 %3626, %v398
    %v3628 = vpop.permute.xlu0 %3627
    %3630 = vset.pattern.permute.xlu0 13
    %3631 = vperm.xlu0 %3630, %v399
    %v3632 = vpop.permute.xlu0 %3631
    %3634 = vset.pattern.permute.xlu0 13
    %3635 = vperm.xlu0 %3634, %v400
    %v3636 = vpop.permute.xlu0 %3635
    %3638 = vset.pattern.permute.xlu0 13
    %3639 = vperm.xlu0 %3638, %v401
    %v3640 = vpop.permute.xlu0 %3639
    %3642 = vset.pattern.permute.xlu0 13
    %3643 = vperm.xlu0 %3642, %v402
    %v3644 = vpop.permute.xlu0 %3643
    %3646 = vset.pattern.permute.xlu0 13
    %3647 = vperm.xlu0 %3646, %v403
    %v3648 = vpop.permute.xlu0 %3647
    %v3650 = vmul.f32 %v1685, %v3588
    %v3651 = vmul.f32 %v1689, %v3592
    %v3652 = vmul.f32 %v1693, %v3596
    %v3653 = vmul.f32 %v1697, %v3600
    %v3654 = vmul.f32 %v1701, %v3604
    %v3655 = vmul.f32 %v1705, %v3608
    %v3656 = vmul.f32 %v1709, %v3612
    %v3657 = vmul.f32 %v1713, %v3616
    %v3658 = vmul.f32 %v1717, %v3620
    %v3659 = vmul.f32 %v1721, %v3624
    %v3660 = vmul.f32 %v1725, %v3628
    %v3661 = vmul.f32 %v1729, %v3632
    %v3662 = vmul.f32 %v1733, %v3636
    %v3663 = vmul.f32 %v1737, %v3640
    %v3664 = vmul.f32 %v1741, %v3644
    %v3665 = vmul.f32 %v1745, %v3648
    %3682 = vrot.lane.b32.xlu0 %v3650, 96
    %v3683 = vpop.permute.xlu0 %3682
    %3684 = vrot.lane.b32.xlu0 %v3651, 96
    %v3685 = vpop.permute.xlu0 %3684
    %3686 = vrot.lane.b32.xlu0 %v3652, 96
    %v3687 = vpop.permute.xlu0 %3686
    %3688 = vrot.lane.b32.xlu0 %v3653, 96
    %v3689 = vpop.permute.xlu0 %3688
    %3690 = vrot.lane.b32.xlu0 %v3654, 96
    %v3691 = vpop.permute.xlu0 %3690
    %3692 = vrot.lane.b32.xlu0 %v3655, 96
    %v3693 = vpop.permute.xlu0 %3692
    %3694 = vrot.lane.b32.xlu0 %v3656, 96
    %v3695 = vpop.permute.xlu0 %3694
    %3696 = vrot.lane.b32.xlu0 %v3657, 96
    %v3697 = vpop.permute.xlu0 %3696
    %3698 = vrot.lane.b32.xlu0 %v3658, 96
    %v3699 = vpop.permute.xlu0 %3698
    %3700 = vrot.lane.b32.xlu0 %v3659, 96
    %v3701 = vpop.permute.xlu0 %3700
    %3702 = vrot.lane.b32.xlu0 %v3660, 96
    %v3703 = vpop.permute.xlu0 %3702
    %3704 = vrot.lane.b32.xlu0 %v3661, 96
    %v3705 = vpop.permute.xlu0 %3704
    %3706 = vrot.lane.b32.xlu0 %v3662, 96
    %v3707 = vpop.permute.xlu0 %3706
    %3708 = vrot.lane.b32.xlu0 %v3663, 96
    %v3709 = vpop.permute.xlu0 %3708
    %3710 = vrot.lane.b32.xlu0 %v3664, 96
    %v3711 = vpop.permute.xlu0 %3710
    %3712 = vrot.lane.b32.xlu0 %v3665, 96
    %v3713 = vpop.permute.xlu0 %3712
    %v3730 = vadd.f32 %v3570, %v3683
    %v3731 = vadd.f32 %v3571, %v3685
    %v3732 = vadd.f32 %v3572, %v3687
    %v3733 = vadd.f32 %v3573, %v3689
    %v3734 = vadd.f32 %v3574, %v3691
    %v3735 = vadd.f32 %v3575, %v3693
    %v3736 = vadd.f32 %v3576, %v3695
    %v3737 = vadd.f32 %v3577, %v3697
    %v3738 = vadd.f32 %v3578, %v3699
    %v3739 = vadd.f32 %v3579, %v3701
    %v3740 = vadd.f32 %v3580, %v3703
    %v3741 = vadd.f32 %v3581, %v3705
    %v3742 = vadd.f32 %v3582, %v3707
    %v3743 = vadd.f32 %v3583, %v3709
    %v3744 = vadd.f32 %v3584, %v3711
    %v3745 = vadd.f32 %v3585, %v3713
    %3746 = vset.pattern.permute.xlu0 14
    %3747 = vperm.xlu0 %3746, %v388
    %v3748 = vpop.permute.xlu0 %3747
    %3750 = vset.pattern.permute.xlu0 14
    %3751 = vperm.xlu0 %3750, %v389
    %v3752 = vpop.permute.xlu0 %3751
    %3754 = vset.pattern.permute.xlu0 14
    %3755 = vperm.xlu0 %3754, %v390
    %v3756 = vpop.permute.xlu0 %3755
    %3758 = vset.pattern.permute.xlu0 14
    %3759 = vperm.xlu0 %3758, %v391
    %v3760 = vpop.permute.xlu0 %3759
    %3762 = vset.pattern.permute.xlu0 14
    %3763 = vperm.xlu0 %3762, %v392
    %v3764 = vpop.permute.xlu0 %3763
    %3766 = vset.pattern.permute.xlu0 14
    %3767 = vperm.xlu0 %3766, %v393
    %v3768 = vpop.permute.xlu0 %3767
    %3770 = vset.pattern.permute.xlu0 14
    %3771 = vperm.xlu0 %3770, %v394
    %v3772 = vpop.permute.xlu0 %3771
    %3774 = vset.pattern.permute.xlu0 14
    %3775 = vperm.xlu0 %3774, %v395
    %v3776 = vpop.permute.xlu0 %3775
    %3778 = vset.pattern.permute.xlu0 14
    %3779 = vperm.xlu0 %3778, %v396
    %v3780 = vpop.permute.xlu0 %3779
    %3782 = vset.pattern.permute.xlu0 14
    %3783 = vperm.xlu0 %3782, %v397
    %v3784 = vpop.permute.xlu0 %3783
    %3786 = vset.pattern.permute.xlu0 14
    %3787 = vperm.xlu0 %3786, %v398
    %v3788 = vpop.permute.xlu0 %3787
    %3790 = vset.pattern.permute.xlu0 14
    %3791 = vperm.xlu0 %3790, %v399
    %v3792 = vpop.permute.xlu0 %3791
    %3794 = vset.pattern.permute.xlu0 14
    %3795 = vperm.xlu0 %3794, %v400
    %v3796 = vpop.permute.xlu0 %3795
    %3798 = vset.pattern.permute.xlu0 14
    %3799 = vperm.xlu0 %3798, %v401
    %v3800 = vpop.permute.xlu0 %3799
    %3802 = vset.pattern.permute.xlu0 14
    %3803 = vperm.xlu0 %3802, %v402
    %v3804 = vpop.permute.xlu0 %3803
    %3806 = vset.pattern.permute.xlu0 14
    %3807 = vperm.xlu0 %3806, %v403
    %v3808 = vpop.permute.xlu0 %3807
    %v3810 = vmul.f32 %v1685, %v3748
    %v3811 = vmul.f32 %v1689, %v3752
    %v3812 = vmul.f32 %v1693, %v3756
    %v3813 = vmul.f32 %v1697, %v3760
    %v3814 = vmul.f32 %v1701, %v3764
    %v3815 = vmul.f32 %v1705, %v3768
    %v3816 = vmul.f32 %v1709, %v3772
    %v3817 = vmul.f32 %v1713, %v3776
    %v3818 = vmul.f32 %v1717, %v3780
    %v3819 = vmul.f32 %v1721, %v3784
    %v3820 = vmul.f32 %v1725, %v3788
    %v3821 = vmul.f32 %v1729, %v3792
    %v3822 = vmul.f32 %v1733, %v3796
    %v3823 = vmul.f32 %v1737, %v3800
    %v3824 = vmul.f32 %v1741, %v3804
    %v3825 = vmul.f32 %v1745, %v3808
    %3842 = vrot.lane.b32.xlu0 %v3810, 64
    %v3843 = vpop.permute.xlu0 %3842
    %3844 = vrot.lane.b32.xlu0 %v3811, 64
    %v3845 = vpop.permute.xlu0 %3844
    %3846 = vrot.lane.b32.xlu0 %v3812, 64
    %v3847 = vpop.permute.xlu0 %3846
    %3848 = vrot.lane.b32.xlu0 %v3813, 64
    %v3849 = vpop.permute.xlu0 %3848
    %3850 = vrot.lane.b32.xlu0 %v3814, 64
    %v3851 = vpop.permute.xlu0 %3850
    %3852 = vrot.lane.b32.xlu0 %v3815, 64
    %v3853 = vpop.permute.xlu0 %3852
    %3854 = vrot.lane.b32.xlu0 %v3816, 64
    %v3855 = vpop.permute.xlu0 %3854
    %3856 = vrot.lane.b32.xlu0 %v3817, 64
    %v3857 = vpop.permute.xlu0 %3856
    %3858 = vrot.lane.b32.xlu0 %v3818, 64
    %v3859 = vpop.permute.xlu0 %3858
    %3860 = vrot.lane.b32.xlu0 %v3819, 64
    %v3861 = vpop.permute.xlu0 %3860
    %3862 = vrot.lane.b32.xlu0 %v3820, 64
    %v3863 = vpop.permute.xlu0 %3862
    %3864 = vrot.lane.b32.xlu0 %v3821, 64
    %v3865 = vpop.permute.xlu0 %3864
    %3866 = vrot.lane.b32.xlu0 %v3822, 64
    %v3867 = vpop.permute.xlu0 %3866
    %3868 = vrot.lane.b32.xlu0 %v3823, 64
    %v3869 = vpop.permute.xlu0 %3868
    %3870 = vrot.lane.b32.xlu0 %v3824, 64
    %v3871 = vpop.permute.xlu0 %3870
    %3872 = vrot.lane.b32.xlu0 %v3825, 64
    %v3873 = vpop.permute.xlu0 %3872
    %v3890 = vadd.f32 %v3730, %v3843
    %v3891 = vadd.f32 %v3731, %v3845
    %v3892 = vadd.f32 %v3732, %v3847
    %v3893 = vadd.f32 %v3733, %v3849
    %v3894 = vadd.f32 %v3734, %v3851
    %v3895 = vadd.f32 %v3735, %v3853
    %v3896 = vadd.f32 %v3736, %v3855
    %v3897 = vadd.f32 %v3737, %v3857
    %v3898 = vadd.f32 %v3738, %v3859
    %v3899 = vadd.f32 %v3739, %v3861
    %v3900 = vadd.f32 %v3740, %v3863
    %v3901 = vadd.f32 %v3741, %v3865
    %v3902 = vadd.f32 %v3742, %v3867
    %v3903 = vadd.f32 %v3743, %v3869
    %v3904 = vadd.f32 %v3744, %v3871
    %v3905 = vadd.f32 %v3745, %v3873
    %3906 = vset.pattern.permute.xlu0 15
    %3907 = vperm.xlu0 %3906, %v388
    %v3908 = vpop.permute.xlu0 %3907
    %3910 = vset.pattern.permute.xlu0 15
    %3911 = vperm.xlu0 %3910, %v389
    %v3912 = vpop.permute.xlu0 %3911
    %3914 = vset.pattern.permute.xlu0 15
    %3915 = vperm.xlu0 %3914, %v390
    %v3916 = vpop.permute.xlu0 %3915
    %3918 = vset.pattern.permute.xlu0 15
    %3919 = vperm.xlu0 %3918, %v391
    %v3920 = vpop.permute.xlu0 %3919
    %3922 = vset.pattern.permute.xlu0 15
    %3923 = vperm.xlu0 %3922, %v392
    %v3924 = vpop.permute.xlu0 %3923
    %3926 = vset.pattern.permute.xlu0 15
    %3927 = vperm.xlu0 %3926, %v393
    %v3928 = vpop.permute.xlu0 %3927
    %3930 = vset.pattern.permute.xlu0 15
    %3931 = vperm.xlu0 %3930, %v394
    %v3932 = vpop.permute.xlu0 %3931
    %3934 = vset.pattern.permute.xlu0 15
    %3935 = vperm.xlu0 %3934, %v395
    %v3936 = vpop.permute.xlu0 %3935
    %3938 = vset.pattern.permute.xlu0 15
    %3939 = vperm.xlu0 %3938, %v396
    %v3940 = vpop.permute.xlu0 %3939
    %3942 = vset.pattern.permute.xlu0 15
    %3943 = vperm.xlu0 %3942, %v397
    %v3944 = vpop.permute.xlu0 %3943
    %3946 = vset.pattern.permute.xlu0 15
    %3947 = vperm.xlu0 %3946, %v398
    %v3948 = vpop.permute.xlu0 %3947
    %3950 = vset.pattern.permute.xlu0 15
    %3951 = vperm.xlu0 %3950, %v399
    %v3952 = vpop.permute.xlu0 %3951
    %3954 = vset.pattern.permute.xlu0 15
    %3955 = vperm.xlu0 %3954, %v400
    %v3956 = vpop.permute.xlu0 %3955
    %3958 = vset.pattern.permute.xlu0 15
    %3959 = vperm.xlu0 %3958, %v401
    %v3960 = vpop.permute.xlu0 %3959
    %3962 = vset.pattern.permute.xlu0 15
    %3963 = vperm.xlu0 %3962, %v402
    %v3964 = vpop.permute.xlu0 %3963
    %3966 = vset.pattern.permute.xlu0 15
    %3967 = vperm.xlu0 %3966, %v403
    %v3968 = vpop.permute.xlu0 %3967
    %v3970 = vmul.f32 %v1685, %v3908
    %v3971 = vmul.f32 %v1689, %v3912
    %v3972 = vmul.f32 %v1693, %v3916
    %v3973 = vmul.f32 %v1697, %v3920
    %v3974 = vmul.f32 %v1701, %v3924
    %v3975 = vmul.f32 %v1705, %v3928
    %v3976 = vmul.f32 %v1709, %v3932
    %v3977 = vmul.f32 %v1713, %v3936
    %v3978 = vmul.f32 %v1717, %v3940
    %v3979 = vmul.f32 %v1721, %v3944
    %v3980 = vmul.f32 %v1725, %v3948
    %v3981 = vmul.f32 %v1729, %v3952
    %v3982 = vmul.f32 %v1733, %v3956
    %v3983 = vmul.f32 %v1737, %v3960
    %v3984 = vmul.f32 %v1741, %v3964
    %v3985 = vmul.f32 %v1745, %v3968
    %4002 = vrot.lane.b32.xlu0 %v3970, 32
    %v4003 = vpop.permute.xlu0 %4002
    %4004 = vrot.lane.b32.xlu0 %v3971, 32
    %v4005 = vpop.permute.xlu0 %4004
    %4006 = vrot.lane.b32.xlu0 %v3972, 32
    %v4007 = vpop.permute.xlu0 %4006
    %4008 = vrot.lane.b32.xlu0 %v3973, 32
    %v4009 = vpop.permute.xlu0 %4008
    %4010 = vrot.lane.b32.xlu0 %v3974, 32
    %v4011 = vpop.permute.xlu0 %4010
    %4012 = vrot.lane.b32.xlu0 %v3975, 32
    %v4013 = vpop.permute.xlu0 %4012
    %4014 = vrot.lane.b32.xlu0 %v3976, 32
    %v4015 = vpop.permute.xlu0 %4014
    %4016 = vrot.lane.b32.xlu0 %v3977, 32
    %v4017 = vpop.permute.xlu0 %4016
    %4018 = vrot.lane.b32.xlu0 %v3978, 32
    %v4019 = vpop.permute.xlu0 %4018
    %4020 = vrot.lane.b32.xlu0 %v3979, 32
    %v4021 = vpop.permute.xlu0 %4020
    %4022 = vrot.lane.b32.xlu0 %v3980, 32
    %v4023 = vpop.permute.xlu0 %4022
    %4024 = vrot.lane.b32.xlu0 %v3981, 32
    %v4025 = vpop.permute.xlu0 %4024
    %4026 = vrot.lane.b32.xlu0 %v3982, 32
    %v4027 = vpop.permute.xlu0 %4026
    %4028 = vrot.lane.b32.xlu0 %v3983, 32
    %v4029 = vpop.permute.xlu0 %4028
    %4030 = vrot.lane.b32.xlu0 %v3984, 32
    %v4031 = vpop.permute.xlu0 %4030
    %4032 = vrot.lane.b32.xlu0 %v3985, 32
    %v4033 = vpop.permute.xlu0 %4032
    %v4050 = vadd.f32 %v3890, %v4003
    %v4051 = vadd.f32 %v3891, %v4005
    %v4052 = vadd.f32 %v3892, %v4007
    %v4053 = vadd.f32 %v3893, %v4009
    %v4054 = vadd.f32 %v3894, %v4011
    %v4055 = vadd.f32 %v3895, %v4013
    %v4056 = vadd.f32 %v3896, %v4015
    %v4057 = vadd.f32 %v3897, %v4017
    %v4058 = vadd.f32 %v3898, %v4019
    %v4059 = vadd.f32 %v3899, %v4021
    %v4060 = vadd.f32 %v3900, %v4023
    %v4061 = vadd.f32 %v3901, %v4025
    %v4062 = vadd.f32 %v3902, %v4027
    %v4063 = vadd.f32 %v3903, %v4029
    %v4064 = vadd.f32 %v3904, %v4031
    %v4065 = vadd.f32 %v3905, %v4033
    %vm4066 = vcmask 261120
    %v4067 = vsel %vm4066, %v4050, 0.0
    %v4068 = vrot.slane %v4067, 4
    %v4069 = vadd.f32 %v4067, %v4068
    %v4070 = vrot.slane %v4069, 2
    %v4071 = vadd.f32 %v4069, %v4070
    %v4072 = vrot.slane %v4071, 1
    %v4073 = vadd.f32 %v4071, %v4072
    %v4074 = vsel %vm4066, %v4051, 0.0
    %v4075 = vrot.slane %v4074, 4
    %v4076 = vadd.f32 %v4074, %v4075
    %v4077 = vrot.slane %v4076, 2
    %v4078 = vadd.f32 %v4076, %v4077
    %v4079 = vrot.slane %v4078, 1
    %v4080 = vadd.f32 %v4078, %v4079
    %v4081 = vsel %vm4066, %v4052, 0.0
    %v4082 = vrot.slane %v4081, 4
    %v4083 = vadd.f32 %v4081, %v4082
    %v4084 = vrot.slane %v4083, 2
    %v4085 = vadd.f32 %v4083, %v4084
    %v4086 = vrot.slane %v4085, 1
    %v4087 = vadd.f32 %v4085, %v4086
    %v4088 = vsel %vm4066, %v4053, 0.0
    %v4089 = vrot.slane %v4088, 4
    %v4090 = vadd.f32 %v4088, %v4089
    %v4091 = vrot.slane %v4090, 2
    %v4092 = vadd.f32 %v4090, %v4091
    %v4093 = vrot.slane %v4092, 1
    %v4094 = vadd.f32 %v4092, %v4093
    %v4095 = vsel %vm4066, %v4054, 0.0
    %v4096 = vrot.slane %v4095, 4
    %v4097 = vadd.f32 %v4095, %v4096
    %v4098 = vrot.slane %v4097, 2
    %v4099 = vadd.f32 %v4097, %v4098
    %v4100 = vrot.slane %v4099, 1
    %v4101 = vadd.f32 %v4099, %v4100
    %v4102 = vsel %vm4066, %v4055, 0.0
    %v4103 = vrot.slane %v4102, 4
    %v4104 = vadd.f32 %v4102, %v4103
    %v4105 = vrot.slane %v4104, 2
    %v4106 = vadd.f32 %v4104, %v4105
    %v4107 = vrot.slane %v4106, 1
    %v4108 = vadd.f32 %v4106, %v4107
    %v4109 = vsel %vm4066, %v4056, 0.0
    %v4110 = vrot.slane %v4109, 4
    %v4111 = vadd.f32 %v4109, %v4110
    %v4112 = vrot.slane %v4111, 2
    %v4113 = vadd.f32 %v4111, %v4112
    %v4114 = vrot.slane %v4113, 1
    %v4115 = vadd.f32 %v4113, %v4114
    %v4116 = vsel %vm4066, %v4057, 0.0
    %v4117 = vrot.slane %v4116, 4
    %v4118 = vadd.f32 %v4116, %v4117
    %v4119 = vrot.slane %v4118, 2
    %v4120 = vadd.f32 %v4118, %v4119
    %v4121 = vrot.slane %v4120, 1
    %v4122 = vadd.f32 %v4120, %v4121
    %v4123 = vsel %vm4066, %v4058, 0.0
    %v4124 = vrot.slane %v4123, 4
    %v4125 = vadd.f32 %v4123, %v4124
    %v4126 = vrot.slane %v4125, 2
    %v4127 = vadd.f32 %v4125, %v4126
    %v4128 = vrot.slane %v4127, 1
    %v4129 = vadd.f32 %v4127, %v4128
    %v4130 = vsel %vm4066, %v4059, 0.0
    %v4131 = vrot.slane %v4130, 4
    %v4132 = vadd.f32 %v4130, %v4131
    %v4133 = vrot.slane %v4132, 2
    %v4134 = vadd.f32 %v4132, %v4133
    %v4135 = vrot.slane %v4134, 1
    %v4136 = vadd.f32 %v4134, %v4135
    %v4137 = vsel %vm4066, %v4060, 0.0
    %v4138 = vrot.slane %v4137, 4
    %v4139 = vadd.f32 %v4137, %v4138
    %v4140 = vrot.slane %v4139, 2
    %v4141 = vadd.f32 %v4139, %v4140
    %v4142 = vrot.slane %v4141, 1
    %v4143 = vadd.f32 %v4141, %v4142
    %v4144 = vsel %vm4066, %v4061, 0.0
    %v4145 = vrot.slane %v4144, 4
    %v4146 = vadd.f32 %v4144, %v4145
    %v4147 = vrot.slane %v4146, 2
    %v4148 = vadd.f32 %v4146, %v4147
    %v4149 = vrot.slane %v4148, 1
    %v4150 = vadd.f32 %v4148, %v4149
    %v4151 = vsel %vm4066, %v4062, 0.0
    %v4152 = vrot.slane %v4151, 4
    %v4153 = vadd.f32 %v4151, %v4152
    %v4154 = vrot.slane %v4153, 2
    %v4155 = vadd.f32 %v4153, %v4154
    %v4156 = vrot.slane %v4155, 1
    %v4157 = vadd.f32 %v4155, %v4156
    %v4158 = vsel %vm4066, %v4063, 0.0
    %v4159 = vrot.slane %v4158, 4
    %v4160 = vadd.f32 %v4158, %v4159
    %v4161 = vrot.slane %v4160, 2
    %v4162 = vadd.f32 %v4160, %v4161
    %v4163 = vrot.slane %v4162, 1
    %v4164 = vadd.f32 %v4162, %v4163
    %v4165 = vsel %vm4066, %v4064, 0.0
    %v4166 = vrot.slane %v4165, 4
    %v4167 = vadd.f32 %v4165, %v4166
    %v4168 = vrot.slane %v4167, 2
    %v4169 = vadd.f32 %v4167, %v4168
    %v4170 = vrot.slane %v4169, 1
    %v4171 = vadd.f32 %v4169, %v4170
    %v4172 = vsel %vm4066, %v4065, 0.0
    %v4173 = vrot.slane %v4172, 4
    %v4174 = vadd.f32 %v4172, %v4173
    %v4175 = vrot.slane %v4174, 2
    %v4176 = vadd.f32 %v4174, %v4175
    %v4177 = vrot.slane %v4176, 1
    %v4178 = vadd.f32 %v4176, %v4177
    %v4179 = vpack.c.bf16 %v4073, %v4073
    %v4180 = vpack.c.bf16 %v4080, %v4080
    %v4181 = vpack.c.bf16 %v4087, %v4087
    %v4182 = vpack.c.bf16 %v4094, %v4094
    %v4183 = vpack.c.bf16 %v4101, %v4101
    %v4184 = vpack.c.bf16 %v4108, %v4108
    %v4185 = vpack.c.bf16 %v4115, %v4115
    %v4186 = vpack.c.bf16 %v4122, %v4122
    %v4187 = vpack.c.bf16 %v4129, %v4129
    %v4188 = vpack.c.bf16 %v4136, %v4136
    %v4189 = vpack.c.bf16 %v4143, %v4143
    %v4190 = vpack.c.bf16 %v4150, %v4150
    %v4191 = vpack.c.bf16 %v4157, %v4157
    %v4192 = vpack.c.bf16 %v4164, %v4164
    %v4193 = vpack.c.bf16 %v4171, %v4171
    %v4194 = vpack.c.bf16 %v4178, %v4178
    %v4195 = vld [vmem:[%s14] sm:$0xf]
    %v4196 = vld [vmem:[%s14 + $0x4] sm:$0xf]
    %v4197 = vld [vmem:[%s14 + $0x8] sm:$0xf]
    %v4198 = vld [vmem:[%s14 + $0xc] sm:$0xf]
    %v4199 = vld [vmem:[%s15] sm:$0x1]
    %v4201 = vlaneseq
    %v4202 = vshrl.u32 %v4201, 7
    %v4203 = vsub.s32 0, %v4202
    %v4204 = vrot.slane %v4199, %v4203
    %v4222 = vunpack.c.l.b16 %v4179
    %v4223 = vunpack.c.l.b16 %v4180
    %v4224 = vunpack.c.l.b16 %v4181
    %v4225 = vunpack.c.l.b16 %v4182
    %v4226 = vunpack.c.l.b16 %v4183
    %v4227 = vunpack.c.l.b16 %v4184
    %v4228 = vunpack.c.l.b16 %v4185
    %v4229 = vunpack.c.l.b16 %v4186
    %v4230 = vunpack.c.l.b16 %v4187
    %v4231 = vunpack.c.l.b16 %v4188
    %v4232 = vunpack.c.l.b16 %v4189
    %v4233 = vunpack.c.l.b16 %v4190
    %v4234 = vunpack.c.l.b16 %v4191
    %v4235 = vunpack.c.l.b16 %v4192
    %v4236 = vunpack.c.l.b16 %v4193
    %v4237 = vunpack.c.l.b16 %v4194
    %vm4238 = vcmask 1041409
    %v4239 = vsel %vm4238, %v4223, %v4222
    %vm4240 = vcmask 1042434
    %v4241 = vsel %vm4240, %v4224, %v4239
    %vm4242 = vcmask 1043459
    %v4243 = vsel %vm4242, %v4225, %v4241
    %vm4244 = vcmask 1044484
    %v4245 = vsel %vm4244, %v4226, %v4243
    %vm4246 = vcmask 1045509
    %v4247 = vsel %vm4246, %v4227, %v4245
    %vm4248 = vcmask 1046534
    %v4249 = vsel %vm4248, %v4228, %v4247
    %vm4250 = vcmask 1047559
    %v4251 = vsel %vm4250, %v4229, %v4249
    %v4252 = vsel %vm4238, %v4231, %v4230
    %v4253 = vsel %vm4240, %v4232, %v4252
    %v4254 = vsel %vm4242, %v4233, %v4253
    %v4255 = vsel %vm4244, %v4234, %v4254
    %v4256 = vsel %vm4246, %v4235, %v4255
    %v4257 = vsel %vm4248, %v4236, %v4256
    %v4258 = vsel %vm4250, %v4237, %v4257
    %v4259 = vpack.c.b16 %v4258, %v4251
    %v4264 = vunpack.c.l.b16 %v4195
    %v4265 = vunpack.c.l.b16 %v4196
    %v4266 = vunpack.c.l.b16 %v4197
    %v4267 = vunpack.c.l.b16 %v4198
    %v4268 = vpack.c.b16 %v4265, %v4264
    %v4269 = vpack.c.b16 %v4267, %v4266
    %v4273 = vsel %vm4066, %v4259, 0
    %4275 = vmatprep.subr.bf16.mxu0 0
    %4276 = vmatpush1.bf16.msra.mxu0 %v4268
    %4277 = vmatprep.subr.bf16.mxu0 0
    %4278 = vmatpush1.bf16.msra.mxu0 %v4269
    %4279 = vmatprep.subr.bf16.mxu0 0
    %4280 = vmatpush1.bf16.msra.mxu0 0
    %4281 = vmatprep.subr.bf16.mxu0 0
    %4282 = vmatpush1.bf16.msra.mxu0 0
    %4283 = vmatprep.subr.bf16.mxu0 0
    %4284 = vmatpush1.bf16.msra.mxu0 0
    %4285 = vmatprep.subr.bf16.mxu0 0
    %4286 = vmatpush1.bf16.msra.mxu0 0
    %4287 = vmatprep.subr.bf16.mxu0 0
    %4288 = vmatpush1.bf16.msra.mxu0 0
    %4289 = vmatprep.subr.bf16.mxu0 0
    %4290 = vmatpush1.bf16.msra.mxu0 0
    %4291 = vmatprep.subr.bf16.mxu0 0
    %4292 = vmatpush1.bf16.msra.mxu0 0
    %4293 = vmatprep.subr.bf16.mxu0 0
    %4294 = vmatpush1.bf16.msra.mxu0 0
    %4295 = vmatprep.subr.bf16.mxu0 0
    %4296 = vmatpush1.bf16.msra.mxu0 0
    %4297 = vmatprep.subr.bf16.mxu0 0
    %4298 = vmatpush1.bf16.msra.mxu0 0
    %4299 = vmatprep.subr.bf16.mxu0 0
    %4300 = vmatpush1.bf16.msra.mxu0 0
    %4301 = vmatprep.subr.bf16.mxu0 0
    %4302 = vmatpush1.bf16.msra.mxu0 0
    %4303 = vmatprep.subr.bf16.mxu0 0
    %4304 = vmatpush1.bf16.msra.mxu0 0
    %4305 = vmatprep.subr.bf16.mxu0 0
    %4306 = vmatpush1.bf16.msra.mxu0 0
    %4307 = vmatprep.mubr.bf16.mxu0 0
    %4308 = vmatmul.mubr.bf16.gmra.mrb[0].mxu0 %v4273
    %v4309 = vpop.f32.mrb[0].mxu0
    %v4310 = vadd.f32 %v4204, %v4309
    %v4311 = vpop.f32.mrb[0].mxu0
    %v4312 = vpop.f32.mrb[0].mxu0
    %v4313 = vadd.f32 %v4204, %v4312
    %v4314 = vpop.f32.mrb[0].mxu0
    %4315 = vdwg.mxu0
    %v4316 = vmax.f32 %v4310, 0.0
    %v4317 = vmax.f32 %v4313, 0.0
    %4318 = vst.msk [vmem:[#allocation5] sm:$0xff] %vm4066, %v4316
    %4319 = vst.msk [vmem:[#allocation5 + $0x8] sm:$0xff] %vm4066, %v4317
    // Predicated region
    $region70: #{tpu_custom_call.1} parent=1 // pred_check
      _
    $region71: #{tpu_custom_call.1} parent=1 // pred_check_branch
      %4321 = sbr.rel (0) target = $region73
    $region72: #{tpu_custom_call.1} parent=1 // pred_region
      %s4323 = ssub.s32 256, 256
      %4324 = vsyncadd [#allocation4], %s4323
      %s4325 = sshll.u32 [#allocation5], 4
      %s4326 = int_to_ptr.vmem [resolvable:$true] %s4325
      %4331 = dma.vmem_to_hbm [thread:$0]  %s4326, 256, %s16, [#allocation4], 128, 128, 8
    $region73: #{tpu_custom_call.1} parent=1 // pred_fallthru
      _
    // Predicated region
    $region74: #{tpu_custom_call.1} parent=1 // pred_check
      _
    $region75: #{tpu_custom_call.1} parent=1 // pred_check_branch
      %4333 = sbr.rel (0) target = $region77
    $region76: #{tpu_custom_call.1} parent=1 // pred_region
      %4334 = dma.done [#allocation4], 256
    $region77: #{tpu_custom_call.1} parent=1 // pred_fallthru
      _
    %4335 = vsyncpa [#allocation3], 1
    %4336 = vsyncpa [#allocation4], 1

</llo_original>
